<compile_context>
chip_gen: v7x
topology: tpu7x:2x2x1
jax: 0.10.0
libtpu: 0.0.40
codegen_flags: <defaults>
</compile_context>

<pallas_src>
import jax
import jax.numpy as jnp
from jax.experimental import pallas as pl
from jax.experimental.pallas import tpu as pltpu

# -------- configuration (small, consistent with the module) --------
B, T = 2, 8                  # batch, seq_length
C_IN, C_OUT = 4, 8           # input_channels, output_channels
IMG = 16                     # image_size
K, STRIDE, PAD = 3, 1, 1     # conv_kernel_size, conv_stride, conv_padding
POOL = 2                     # pool_size
HID = 32                     # hidden_size
NUM_LAYERS = 2               # num_layers
OUT_SIZE = 10                # output_size

H_OUT = IMG // POOL
W_OUT = IMG // POOL
CKK = C_IN * K * K                 # 36
LSTM_IN = C_OUT * H_OUT * W_OUT    # 512
N_FRAMES = B * T                   # 16
R = H_OUT * W_OUT                  # pooled pixels per frame = 64
N_BLK = 2                          # CNN grid (frames split in two halves)
FRAMES_PER_BLK = N_FRAMES // N_BLK # 8
HALF_ROWS = FRAMES_PER_BLK * R     # 512 conv rows per pool position per block


# ---------------- Kernel 1: conv (single im2col matmul) + bias + relu + maxpool ----------------
def conv_pool_relu_kernel(p_ref, w_ref, b_ref, o_ref):
    # p_ref: (1, 4*HALF_ROWS, CKK)  rows ordered (pool_pos, frame_local, pooled_pixel)
    # w_ref: (CKK, C_OUT)   b_ref: (1, C_OUT)   o_ref: (HALF_ROWS, C_OUT)
    conv = jnp.dot(p_ref[0], w_ref[...], preferred_element_type=jnp.float32)  # (2048, 8)
    m01 = jnp.maximum(conv[0 * HALF_ROWS:1 * HALF_ROWS],
                      conv[1 * HALF_ROWS:2 * HALF_ROWS])
    m23 = jnp.maximum(conv[2 * HALF_ROWS:3 * HALF_ROWS],
                      conv[3 * HALF_ROWS:4 * HALF_ROWS])
    # bias shared across the pool window and relu monotone -> apply after the max.
    o_ref[...] = jnp.maximum(jnp.maximum(m01, m23) + b_ref[...], 0.0)


def conv_pool_relu(patches, conv_w_t, conv_b):
    rows = patches.shape[1]                       # 4 * HALF_ROWS
    return pl.pallas_call(
        conv_pool_relu_kernel,
        out_shape=jax.ShapeDtypeStruct((N_BLK * HALF_ROWS, C_OUT), jnp.float32),
        grid=(N_BLK,),
        in_specs=[
            pl.BlockSpec((1, rows, CKK), lambda i: (i, 0, 0)),
            pl.BlockSpec((CKK, C_OUT), lambda i: (0, 0)),
            pl.BlockSpec((1, C_OUT), lambda i: (0, 0)),
        ],
        out_specs=pl.BlockSpec((HALF_ROWS, C_OUT), lambda i: (i, 0)),
        compiler_params=pltpu.CompilerParams(dimension_semantics=("parallel",)),
    )(patches, conv_w_t, conv_b)


# ---------------- Kernel 2: fused 2-layer LSTM + FC + softmax ----------------
def lstm_fc_softmax_kernel(feats_ref, h0_ref, c0_ref,
                           wih0_ref, whh0_ref, b0_ref,
                           wih1_ref, whh1_ref, b1_ref,
                           fcw_ref, fcb_ref, out_ref):
    def cell(gates, c_prev):
        # gate columns reordered at prep time to (i, f, o | g)
        s = jax.nn.sigmoid(gates[:, :3 * HID])
        i = s[:, 0 * HID:1 * HID]
        f = s[:, 1 * HID:2 * HID]
        o = s[:, 2 * HID:3 * HID]
        g = jnp.tanh(gates[:, 3 * HID:])
        c = f * c_prev + i * g
        return o * jnp.tanh(c), c

    # Hoisted layer-0 input projection over all T*B rows (time-major rows t*B+b).
    gx0 = jnp.dot(feats_ref[...], wih0_ref[...],
                  preferred_element_type=jnp.float32) + b0_ref[...]   # (T*B, 4H)

    whh0 = whh0_ref[...]
    wih1 = wih1_ref[...]
    whh1 = whh1_ref[...]
    b1 = b1_ref[...]

    h0, c0 = h0_ref[0], c0_ref[0]     # layer 0 state (B, HID)
    h1, c1 = h0_ref[1], c0_ref[1]     # layer 1 state (B, HID)

    # T is tiny and static: unroll the recurrence (no grid-step overhead,
    # static tile-aligned slices of gx0).
    for t in range(T):
        g0 = gx0[t * B:(t + 1) * B, :] + jnp.dot(
            h0, whh0, preferred_element_type=jnp.float32)
        h0, c0 = cell(g0, c0)
        g1 = (jnp.dot(h0, wih1, preferred_element_type=jnp.float32)
              + jnp.dot(h1, whh1, preferred_element_type=jnp.float32) + b1)
        h1, c1 = cell(g1, c1)

    # FC + softmax epilogue on the last timestep of the last layer.
    logits = jnp.dot(h1, fcw_ref[...], preferred_element_type=jnp.float32) + fcb_ref[...]
    mx = jnp.max(logits, axis=-1, keepdims=True)
    e = jnp.exp(logits - mx)
    out_ref[...] = e / jnp.sum(e, axis=-1, keepdims=True)


def lstm_fc_softmax(feats, h0, c0, p):
    return pl.pallas_call(
        lstm_fc_softmax_kernel,
        out_shape=jax.ShapeDtypeStruct((B, OUT_SIZE), jnp.float32),
    )(feats, h0, c0,
      p["w_ih0_t"], p["w_hh0_t"], p["b0"],
      p["w_ih1_t"], p["w_hh1_t"], p["b1"],
      p["fc_w_t"], p["fc_b"])


# ---------------- glue: im2col with pool-position-major row layout ----------------
def build_patches(frames):
    # frames: (N_FRAMES, C_IN, IMG, IMG) in time-major frame order (t*B + b)
    n = frames.shape[0]
    xp = jnp.pad(frames, ((0, 0), (0, 0), (PAD, PAD), (PAD, PAD)))
    slices = [xp[:, :, kh:kh + IMG, kw:kw + IMG] for kh in range(K) for kw in range(K)]
    pats = jnp.stack(slices, axis=2)                                   # (N, C, K*K, H, W)
    pats = pats.transpose(0, 3, 4, 1, 2).reshape(n, IMG, IMG, CKK)     # lanes=(cin,kh,kw)
    # split spatial into (pooled pixel, pool position)
    pats = pats.reshape(n, H_OUT, POOL, W_OUT, POOL, CKK)              # (N, yo, py, xo, px, q)
    pats = pats.transpose(2, 4, 0, 1, 3, 5)                            # (py, px, N, yo, xo, q)
    pats = pats.reshape(POOL * POOL, n, R, CKK)                        # (p, N, r, q)
    # split frames into N_BLK halves for the parallel CNN grid; rows = (p, n_local, r)
    pats = pats.reshape(POOL * POOL, N_BLK, n // N_BLK, R, CKK)
    pats = pats.transpose(1, 0, 2, 3, 4).reshape(N_BLK, POOL * POOL * (n // N_BLK) * R, CKK)
    return pats                                                        # (2, 2048, 36)


# ---------------- full forward pass ----------------
@jax.jit
def cnn_lstm_forward(x, params, h0, c0):
    # x: (B, T, C_IN, IMG, IMG) -> time-major frames so LSTM rows are (t, b)
    frames = x.transpose(1, 0, 2, 3, 4).reshape(T * B, C_IN, IMG, IMG)
    patches = build_patches(frames)                                    # (2, 2048, 36)
    m = conv_pool_relu(patches, params["conv_w_t"], params["conv_b"])  # (T*B*64, 8)
    # free row-major reshape: feats[n, (y*W_OUT+x)*C_OUT + c]; the (c,y,x)->(y,x,c)
    # permutation is folded into w_ih0_t's rows at prep time.
    feats = m.reshape(T * B, LSTM_IN)                                  # (16, 512), lane-dense
    return lstm_fc_softmax(feats, h0, c0, params)                      # (B, OUT_SIZE)


# ---------------- parameter prep (PyTorch layout -> kernel layout) ----------------
def _reorder_gates(w):
    # PyTorch LSTM gate order (i, f, g, o) along axis 0 -> kernel order (i, f, o, g)
    i, f, g, o = jnp.split(w, 4, axis=0)
    return jnp.concatenate([i, f, o, g], axis=0)


def prep_params(conv_w, conv_b, w_ih0, w_hh0, b_ih0, b_hh0,
                w_ih1, w_hh1, b_ih1, b_hh1, fc_w, fc_b):
    p = {}
    p["conv_w_t"] = conv_w.reshape(C_OUT, CKK).T                    # (36, 8)
    p["conv_b"] = conv_b.reshape(1, C_OUT)
    # layer 0: reorder gates, permute input dim from torch (c,y,x) to kernel (y,x,c)
    w0 = _reorder_gates(w_ih0).reshape(4 * HID, C_OUT, H_OUT, W_OUT)
    w0 = w0.transpose(0, 2, 3, 1).reshape(4 * HID, LSTM_IN)
    p["w_ih0_t"] = w0.T                                             # (512, 128)
    p["w_hh0_t"] = _reorder_gates(w_hh0).T                          # (32, 128)
    p["b0"] = _reorder_gates(b_ih0 + b_hh0).reshape(1, 4 * HID)
    # layer 1
    p["w_ih1_t"] = _reorder_gates(w_ih1).T                          # (32, 128)
    p["w_hh1_t"] = _reorder_gates(w_hh1).T                          # (32, 128)
    p["b1"] = _reorder_gates(b_ih1 + b_hh1).reshape(1, 4 * HID)
    # fc
    p["fc_w_t"] = fc_w.T                                            # (32, 10)
    p["fc_b"] = fc_b.reshape(1, OUT_SIZE)
    return p


def init_params(key):
    ks = jax.random.split(key, 12)
    conv_w = jax.random.normal(ks[0], (C_OUT, C_IN, K, K), jnp.float32) * 0.1
    conv_b = jax.random.normal(ks[1], (C_OUT,), jnp.float32) * 0.1
    w_ih0 = jax.random.normal(ks[2], (4 * HID, LSTM_IN), jnp.float32) * 0.05
    w_hh0 = jax.random.normal(ks[3], (4 * HID, HID), jnp.float32) * 0.05
    b_ih0 = jax.random.normal(ks[4], (4 * HID,), jnp.float32) * 0.05
    b_hh0 = jax.random.normal(ks[5], (4 * HID,), jnp.float32) * 0.05
    w_ih1 = jax.random.normal(ks[6], (4 * HID, HID), jnp.float32) * 0.05
    w_hh1 = jax.random.normal(ks[7], (4 * HID, HID), jnp.float32) * 0.05
    b_ih1 = jax.random.normal(ks[8], (4 * HID,), jnp.float32) * 0.05
    b_hh1 = jax.random.normal(ks[9], (4 * HID,), jnp.float32) * 0.05
    fc_w = jax.random.normal(ks[10], (OUT_SIZE, HID), jnp.float32) * 0.1
    fc_b = jax.random.normal(ks[11], (OUT_SIZE,), jnp.float32) * 0.1
    return prep_params(conv_w, conv_b, w_ih0, w_hh0, b_ih0, b_hh0,
                       w_ih1, w_hh1, b_ih1, b_hh1, fc_w, fc_b)


if __name__ == "__main__":
    key = jax.random.PRNGKey(0)
    k_x, k_p, k_h, k_c = jax.random.split(key, 4)
    x = jax.random.normal(k_x, (B, T, C_IN, IMG, IMG), jnp.float32)
    params = init_params(k_p)
    # PyTorch draws random (h0, c0) every forward; use deterministic PRNG here.
    h0 = jax.random.normal(k_h, (NUM_LAYERS, B, HID), jnp.float32)
    c0 = jax.random.normal(k_c, (NUM_LAYERS, B, HID), jnp.float32)

    out = cnn_lstm_forward(x, params, h0, c0)
    out = jax.block_until_ready(out)

    assert out.shape == (B, OUT_SIZE)
    assert bool(jnp.all(jnp.isfinite(out)))
    assert bool(jnp.allclose(jnp.sum(out, axis=-1), 1.0, atol=1e-5))
    print("KERNEL_OK")
</pallas_src>

<mosaic_0001>
module attributes {stable_mosaic.version = 11 : i64} {
  func.func @conv_pool_relu_kernel(%arg0: i32, %arg1: memref<1x2048x36xf32, #tpu.memory_space<vmem>>, %arg2: memref<36x8xf32, #tpu.memory_space<vmem>>, %arg3: memref<1x8xf32, #tpu.memory_space<vmem>>, %arg4: memref<512x8xf32, #tpu.memory_space<vmem>>) attributes {dimension_semantics = [#tpu.dimension_semantics<parallel>], iteration_bounds = array<i64: 2>, scalar_prefetch = 0 : i64, scratch_operands = 0 : i64, tpu.core_type = #tpu.core_type<tc>, window_params = [{transform_indices = @transform_0, window_bounds = array<i64: 1, 2048, 36>}, {pipeline_mode = #tpu.pipeline_mode<synchronous>, transform_indices = @transform_1, window_bounds = array<i64: 36, 8>}, {pipeline_mode = #tpu.pipeline_mode<synchronous>, transform_indices = @transform_2, window_bounds = array<i64: 1, 8>}, {transform_indices = @transform_3, window_bounds = array<i64: 512, 8>}]} {
    %c0 = arith.constant 0 : index
    %c0_0 = arith.constant 0 : index
    %c0_1 = arith.constant 0 : index
    %0 = vector.load %arg1[%c0, %c0_0, %c0_1] : memref<1x2048x36xf32, #tpu.memory_space<vmem>>, vector<1x2048x36xf32>
    %1 = vector.shape_cast %0 : vector<1x2048x36xf32> to vector<2048x36xf32>
    %c0_2 = arith.constant 0 : index
    %c0_3 = arith.constant 0 : index
    %2 = vector.load %arg2[%c0_2, %c0_3] : memref<36x8xf32, #tpu.memory_space<vmem>>, vector<36x8xf32>
    %cst = arith.constant dense<0.000000e+00> : vector<2048x8xf32>
    %3 = tpu.matmul %1, %2, %cst {dimension_numbers = #tpu.dot_dimension_numbers<[1], [0], [0], [1], [0, 0, 1, 1], [], []>} : vector<2048x36xf32>, vector<36x8xf32>, vector<2048x8xf32> -> vector<2048x8xf32>
    %4 = vector.extract_strided_slice %3 {offsets = [0, 0], sizes = [512, 8], strides = [1, 1]} : vector<2048x8xf32> to vector<512x8xf32>
    %5 = vector.extract_strided_slice %3 {offsets = [512, 0], sizes = [512, 8], strides = [1, 1]} : vector<2048x8xf32> to vector<512x8xf32>
    %6 = arith.maximumf %4, %5 : vector<512x8xf32>
    %7 = vector.extract_strided_slice %3 {offsets = [1024, 0], sizes = [512, 8], strides = [1, 1]} : vector<2048x8xf32> to vector<512x8xf32>
    %8 = vector.extract_strided_slice %3 {offsets = [1536, 0], sizes = [512, 8], strides = [1, 1]} : vector<2048x8xf32> to vector<512x8xf32>
    %9 = arith.maximumf %7, %8 : vector<512x8xf32>
    %10 = arith.maximumf %6, %9 : vector<512x8xf32>
    %c0_4 = arith.constant 0 : index
    %c0_5 = arith.constant 0 : index
    %11 = vector.load %arg3[%c0_4, %c0_5] : memref<1x8xf32, #tpu.memory_space<vmem>>, vector<1x8xf32>
    %12 = vector.broadcast %11 : vector<1x8xf32> to vector<512x8xf32>
    %13 = arith.addf %10, %12 : vector<512x8xf32>
    %cst_6 = arith.constant 0.000000e+00 : f32
    %14 = vector.broadcast %cst_6 : f32 to vector<512x8xf32>
    %15 = arith.maximumf %13, %14 : vector<512x8xf32>
    %c0_7 = arith.constant 0 : index
    %c0_8 = arith.constant 0 : index
    %16 = vector.load %arg4[%c0_7, %c0_8] : memref<512x8xf32, #tpu.memory_space<vmem>>, vector<512x8xf32>
    tpu.vector_store %arg4[%c0_7, %c0_8], %15 {strides = array<i32>} : memref<512x8xf32, #tpu.memory_space<vmem>>, vector<512x8xf32>,
    return
  }
  func.func @transform_0(%arg0: i32) -> (i32, i32, i32) {
    %c0_i32 = arith.constant 0 : i32
    %c0_i32_0 = arith.constant 0 : i32
    %c0_i32_1 = arith.constant 0 : i32
    return %arg0, %c0_i32, %c0_i32_0 : i32, i32, i32
  }
  func.func @transform_1(%arg0: i32) -> (i32, i32) {
    %c0_i32 = arith.constant 0 : i32
    %c0_i32_0 = arith.constant 0 : i32
    %c0_i32_1 = arith.constant 0 : i32
    return %c0_i32, %c0_i32_0 : i32, i32
  }
  func.func @transform_2(%arg0: i32) -> (i32, i32) {
    %c0_i32 = arith.constant 0 : i32
    %c0_i32_0 = arith.constant 0 : i32
    %c0_i32_1 = arith.constant 0 : i32
    return %c0_i32, %c0_i32_0 : i32, i32
  }
  func.func @transform_3(%arg0: i32) -> (i32, i32) {
    %c0_i32 = arith.constant 0 : i32
    %c0_i32_0 = arith.constant 0 : i32
    return %arg0, %c0_i32 : i32, i32
  }
}

module attributes {stable_mosaic.version = 11 : i64} {
  func.func @lstm_fc_softmax_kernel(%arg0: memref<16x512xf32, #tpu.memory_space<vmem>>, %arg1: memref<2x2x32xf32, #tpu.memory_space<vmem>>, %arg2: memref<2x2x32xf32, #tpu.memory_space<vmem>>, %arg3: memref<512x128xf32, #tpu.memory_space<vmem>>, %arg4: memref<32x128xf32, #tpu.memory_space<vmem>>, %arg5: memref<1x128xf32, #tpu.memory_space<vmem>>, %arg6: memref<32x128xf32, #tpu.memory_space<vmem>>, %arg7: memref<32x128xf32, #tpu.memory_space<vmem>>, %arg8: memref<1x128xf32, #tpu.memory_space<vmem>>, %arg9: memref<32x10xf32, #tpu.memory_space<vmem>>, %arg10: memref<1x10xf32, #tpu.memory_space<vmem>>, %arg11: memref<2x10xf32, #tpu.memory_space<vmem>>) attributes {dimension_semantics = [], scalar_prefetch = 0 : i64, scratch_operands = 0 : i64, tpu.core_type = #tpu.core_type<tc>} {
    %c0 = arith.constant 0 : index
    %c0_0 = arith.constant 0 : index
    %0 = vector.load %arg0[%c0, %c0_0] : memref<16x512xf32, #tpu.memory_space<vmem>>, vector<16x512xf32>
    %c0_1 = arith.constant 0 : index
    %c0_2 = arith.constant 0 : index
    %1 = vector.load %arg3[%c0_1, %c0_2] : memref<512x128xf32, #tpu.memory_space<vmem>>, vector<512x128xf32>
    %cst = arith.constant dense<0.000000e+00> : vector<16x128xf32>
    %2 = tpu.matmul %0, %1, %cst {dimension_numbers = #tpu.dot_dimension_numbers<[1], [0], [0], [1], [0, 0, 1, 1], [], []>} : vector<16x512xf32>, vector<512x128xf32>, vector<16x128xf32> -> vector<16x128xf32>
    %c0_3 = arith.constant 0 : index
    %c0_4 = arith.constant 0 : index
    %3 = vector.load %arg5[%c0_3, %c0_4] : memref<1x128xf32, #tpu.memory_space<vmem>>, vector<1x128xf32>
    %4 = vector.broadcast %3 : vector<1x128xf32> to vector<16x128xf32>
    %5 = arith.addf %2, %4 : vector<16x128xf32>
    %c0_5 = arith.constant 0 : index
    %c0_6 = arith.constant 0 : index
    %6 = vector.load %arg4[%c0_5, %c0_6] : memref<32x128xf32, #tpu.memory_space<vmem>>, vector<32x128xf32>
    %c0_7 = arith.constant 0 : index
    %c0_8 = arith.constant 0 : index
    %7 = vector.load %arg6[%c0_7, %c0_8] : memref<32x128xf32, #tpu.memory_space<vmem>>, vector<32x128xf32>
    %c0_9 = arith.constant 0 : index
    %c0_10 = arith.constant 0 : index
    %8 = vector.load %arg7[%c0_9, %c0_10] : memref<32x128xf32, #tpu.memory_space<vmem>>, vector<32x128xf32>
    %c0_11 = arith.constant 0 : index
    %c0_12 = arith.constant 0 : index
    %9 = vector.load %arg8[%c0_11, %c0_12] : memref<1x128xf32, #tpu.memory_space<vmem>>, vector<1x128xf32>
    %c0_13 = arith.constant 0 : index
    %c0_14 = arith.constant 0 : index
    %c0_15 = arith.constant 0 : index
    %10 = vector.load %arg1[%c0_13, %c0_14, %c0_15] : memref<2x2x32xf32, #tpu.memory_space<vmem>>, vector<1x2x32xf32>
    %11 = vector.shape_cast %10 : vector<1x2x32xf32> to vector<2x32xf32>
    %c0_16 = arith.constant 0 : index
    %c0_17 = arith.constant 0 : index
    %c0_18 = arith.constant 0 : index
    %12 = vector.load %arg2[%c0_16, %c0_17, %c0_18] : memref<2x2x32xf32, #tpu.memory_space<vmem>>, vector<1x2x32xf32>
    %13 = vector.shape_cast %12 : vector<1x2x32xf32> to vector<2x32xf32>
    %c1 = arith.constant 1 : index
    %c0_19 = arith.constant 0 : index
    %c0_20 = arith.constant 0 : index
    %14 = vector.load %arg1[%c1, %c0_19, %c0_20] : memref<2x2x32xf32, #tpu.memory_space<vmem>>, vector<1x2x32xf32>
    %15 = vector.shape_cast %14 : vector<1x2x32xf32> to vector<2x32xf32>
    %c1_21 = arith.constant 1 : index
    %c0_22 = arith.constant 0 : index
    %c0_23 = arith.constant 0 : index
    %16 = vector.load %arg2[%c1_21, %c0_22, %c0_23] : memref<2x2x32xf32, #tpu.memory_space<vmem>>, vector<1x2x32xf32>
    %17 = vector.shape_cast %16 : vector<1x2x32xf32> to vector<2x32xf32>
    %18 = vector.extract_strided_slice %5 {offsets = [0, 0], sizes = [2, 128], strides = [1, 1]} : vector<16x128xf32> to vector<2x128xf32>
    %cst_24 = arith.constant dense<0.000000e+00> : vector<2x128xf32>
    %19 = tpu.matmul %11, %6, %cst_24 {dimension_numbers = #tpu.dot_dimension_numbers<[1], [0], [0], [1], [0, 0, 1, 1], [], []>} : vector<2x32xf32>, vector<32x128xf32>, vector<2x128xf32> -> vector<2x128xf32>
    %20 = arith.addf %18, %19 : vector<2x128xf32>
    %21 = vector.extract_strided_slice %20 {offsets = [0, 0], sizes = [2, 96], strides = [1, 1]} : vector<2x128xf32> to vector<2x96xf32>
    %22 = arith.negf %21 : vector<2x96xf32>
    %23 = math.exp %22 : vector<2x96xf32>
    %cst_25 = arith.constant 1.000000e+00 : f32
    %24 = vector.broadcast %cst_25 : f32 to vector<2x96xf32>
    %25 = arith.addf %24, %23 : vector<2x96xf32>
    %26 = arith.divf %24, %25 : vector<2x96xf32>
    %27 = vector.extract_strided_slice %26 {offsets = [0, 0], sizes = [2, 32], strides = [1, 1]} : vector<2x96xf32> to vector<2x32xf32>
    %28 = vector.extract_strided_slice %26 {offsets = [0, 32], sizes = [2, 32], strides = [1, 1]} : vector<2x96xf32> to vector<2x32xf32>
    %29 = vector.extract_strided_slice %26 {offsets = [0, 64], sizes = [2, 32], strides = [1, 1]} : vector<2x96xf32> to vector<2x32xf32>
    %30 = vector.extract_strided_slice %20 {offsets = [0, 96], sizes = [2, 32], strides = [1, 1]} : vector<2x128xf32> to vector<2x32xf32>
    %31 = math.tanh %30 : vector<2x32xf32>
    %32 = arith.mulf %28, %13 : vector<2x32xf32>
    %33 = arith.mulf %27, %31 : vector<2x32xf32>
    %34 = arith.addf %32, %33 : vector<2x32xf32>
    %35 = math.tanh %34 : vector<2x32xf32>
    %36 = arith.mulf %29, %35 : vector<2x32xf32>
    %cst_26 = arith.constant dense<0.000000e+00> : vector<2x128xf32>
    %37 = tpu.matmul %36, %7, %cst_26 {dimension_numbers = #tpu.dot_dimension_numbers<[1], [0], [0], [1], [0, 0, 1, 1], [], []>} : vector<2x32xf32>, vector<32x128xf32>, vector<2x128xf32> -> vector<2x128xf32>
    %cst_27 = arith.constant dense<0.000000e+00> : vector<2x128xf32>
    %38 = tpu.matmul %15, %8, %cst_27 {dimension_numbers = #tpu.dot_dimension_numbers<[1], [0], [0], [1], [0, 0, 1, 1], [], []>} : vector<2x32xf32>, vector<32x128xf32>, vector<2x128xf32> -> vector<2x128xf32>
    %39 = arith.addf %37, %38 : vector<2x128xf32>
    %40 = vector.broadcast %9 : vector<1x128xf32> to vector<2x128xf32>
    %41 = arith.addf %39, %40 : vector<2x128xf32>
    %42 = vector.extract_strided_slice %41 {offsets = [0, 0], sizes = [2, 96], strides = [1, 1]} : vector<2x128xf32> to vector<2x96xf32>
    %43 = arith.negf %42 : vector<2x96xf32>
    %44 = math.exp %43 : vector<2x96xf32>
    %cst_28 = arith.constant 1.000000e+00 : f32
    %45 = vector.broadcast %cst_28 : f32 to vector<2x96xf32>
    %46 = arith.addf %45, %44 : vector<2x96xf32>
    %47 = arith.divf %45, %46 : vector<2x96xf32>
    %48 = vector.extract_strided_slice %47 {offsets = [0, 0], sizes = [2, 32], strides = [1, 1]} : vector<2x96xf32> to vector<2x32xf32>
    %49 = vector.extract_strided_slice %47 {offsets = [0, 32], sizes = [2, 32], strides = [1, 1]} : vector<2x96xf32> to vector<2x32xf32>
    %50 = vector.extract_strided_slice %47 {offsets = [0, 64], sizes = [2, 32], strides = [1, 1]} : vector<2x96xf32> to vector<2x32xf32>
    %51 = vector.extract_strided_slice %41 {offsets = [0, 96], sizes = [2, 32], strides = [1, 1]} : vector<2x128xf32> to vector<2x32xf32>
    %52 = math.tanh %51 : vector<2x32xf32>
    %53 = arith.mulf %49, %17 : vector<2x32xf32>
    %54 = arith.mulf %48, %52 : vector<2x32xf32>
    %55 = arith.addf %53, %54 : vector<2x32xf32>
    %56 = math.tanh %55 : vector<2x32xf32>
    %57 = arith.mulf %50, %56 : vector<2x32xf32>
    %58 = vector.extract_strided_slice %5 {offsets = [2, 0], sizes = [2, 128], strides = [1, 1]} : vector<16x128xf32> to vector<2x128xf32>
    %cst_29 = arith.constant dense<0.000000e+00> : vector<2x128xf32>
    %59 = tpu.matmul %36, %6, %cst_29 {dimension_numbers = #tpu.dot_dimension_numbers<[1], [0], [0], [1], [0, 0, 1, 1], [], []>} : vector<2x32xf32>, vector<32x128xf32>, vector<2x128xf32> -> vector<2x128xf32>
    %60 = arith.addf %58, %59 : vector<2x128xf32>
    %61 = vector.extract_strided_slice %60 {offsets = [0, 0], sizes = [2, 96], strides = [1, 1]} : vector<2x128xf32> to vector<2x96xf32>
    %62 = arith.negf %61 : vector<2x96xf32>
    %63 = math.exp %62 : vector<2x96xf32>
    %cst_30 = arith.constant 1.000000e+00 : f32
    %64 = vector.broadcast %cst_30 : f32 to vector<2x96xf32>
    %65 = arith.addf %64, %63 : vector<2x96xf32>
    %66 = arith.divf %64, %65 : vector<2x96xf32>
    %67 = vector.extract_strided_slice %66 {offsets = [0, 0], sizes = [2, 32], strides = [1, 1]} : vector<2x96xf32> to vector<2x32xf32>
    %68 = vector.extract_strided_slice %66 {offsets = [0, 32], sizes = [2, 32], strides = [1, 1]} : vector<2x96xf32> to vector<2x32xf32>
    %69 = vector.extract_strided_slice %66 {offsets = [0, 64], sizes = [2, 32], strides = [1, 1]} : vector<2x96xf32> to vector<2x32xf32>
    %70 = vector.extract_strided_slice %60 {offsets = [0, 96], sizes = [2, 32], strides = [1, 1]} : vector<2x128xf32> to vector<2x32xf32>
    %71 = math.tanh %70 : vector<2x32xf32>
    %72 = arith.mulf %68, %34 : vector<2x32xf32>
    %73 = arith.mulf %67, %71 : vector<2x32xf32>
    %74 = arith.addf %72, %73 : vector<2x32xf32>
    %75 = math.tanh %74 : vector<2x32xf32>
    %76 = arith.mulf %69, %75 : vector<2x32xf32>
    %cst_31 = arith.constant dense<0.000000e+00> : vector<2x128xf32>
    %77 = tpu.matmul %76, %7, %cst_31 {dimension_numbers = #tpu.dot_dimension_numbers<[1], [0], [0], [1], [0, 0, 1, 1], [], []>} : vector<2x32xf32>, vector<32x128xf32>, vector<2x128xf32> -> vector<2x128xf32>
    %cst_32 = arith.constant dense<0.000000e+00> : vector<2x128xf32>
    %78 = tpu.matmul %57, %8, %cst_32 {dimension_numbers = #tpu.dot_dimension_numbers<[1], [0], [0], [1], [0, 0, 1, 1], [], []>} : vector<2x32xf32>, vector<32x128xf32>, vector<2x128xf32> -> vector<2x128xf32>
    %79 = arith.addf %77, %78 : vector<2x128xf32>
    %80 = vector.broadcast %9 : vector<1x128xf32> to vector<2x128xf32>
    %81 = arith.addf %79, %80 : vector<2x128xf32>
    %82 = vector.extract_strided_slice %81 {offsets = [0, 0], sizes = [2, 96], strides = [1, 1]} : vector<2x128xf32> to vector<2x96xf32>
    %83 = arith.negf %82 : vector<2x96xf32>
    %84 = math.exp %83 : vector<2x96xf32>
    %cst_33 = arith.constant 1.000000e+00 : f32
    %85 = vector.broadcast %cst_33 : f32 to vector<2x96xf32>
    %86 = arith.addf %85, %84 : vector<2x96xf32>
    %87 = arith.divf %85, %86 : vector<2x96xf32>
    %88 = vector.extract_strided_slice %87 {offsets = [0, 0], sizes = [2, 32], strides = [1, 1]} : vector<2x96xf32> to vector<2x32xf32>
    %89 = vector.extract_strided_slice %87 {offsets = [0, 32], sizes = [2, 32], strides = [1, 1]} : vector<2x96xf32> to vector<2x32xf32>
    %90 = vector.extract_strided_slice %87 {offsets = [0, 64], sizes = [2, 32], strides = [1, 1]} : vector<2x96xf32> to vector<2x32xf32>
    %91 = vector.extract_strided_slice %81 {offsets = [0, 96], sizes = [2, 32], strides = [1, 1]} : vector<2x128xf32> to vector<2x32xf32>
    %92 = math.tanh %91 : vector<2x32xf32>
    %93 = arith.mulf %89, %55 : vector<2x32xf32>
    %94 = arith.mulf %88, %92 : vector<2x32xf32>
    %95 = arith.addf %93, %94 : vector<2x32xf32>
    %96 = math.tanh %95 : vector<2x32xf32>
    %97 = arith.mulf %90, %96 : vector<2x32xf32>
    %98 = vector.extract_strided_slice %5 {offsets = [4, 0], sizes = [2, 128], strides = [1, 1]} : vector<16x128xf32> to vector<2x128xf32>
    %cst_34 = arith.constant dense<0.000000e+00> : vector<2x128xf32>
    %99 = tpu.matmul %76, %6, %cst_34 {dimension_numbers = #tpu.dot_dimension_numbers<[1], [0], [0], [1], [0, 0, 1, 1], [], []>} : vector<2x32xf32>, vector<32x128xf32>, vector<2x128xf32> -> vector<2x128xf32>
    %100 = arith.addf %98, %99 : vector<2x128xf32>
    %101 = vector.extract_strided_slice %100 {offsets = [0, 0], sizes = [2, 96], strides = [1, 1]} : vector<2x128xf32> to vector<2x96xf32>
    %102 = arith.negf %101 : vector<2x96xf32>
    %103 = math.exp %102 : vector<2x96xf32>
    %cst_35 = arith.constant 1.000000e+00 : f32
    %104 = vector.broadcast %cst_35 : f32 to vector<2x96xf32>
    %105 = arith.addf %104, %103 : vector<2x96xf32>
    %106 = arith.divf %104, %105 : vector<2x96xf32>
    %107 = vector.extract_strided_slice %106 {offsets = [0, 0], sizes = [2, 32], strides = [1, 1]} : vector<2x96xf32> to vector<2x32xf32>
    %108 = vector.extract_strided_slice %106 {offsets = [0, 32], sizes = [2, 32], strides = [1, 1]} : vector<2x96xf32> to vector<2x32xf32>
    %109 = vector.extract_strided_slice %106 {offsets = [0, 64], sizes = [2, 32], strides = [1, 1]} : vector<2x96xf32> to vector<2x32xf32>
    %110 = vector.extract_strided_slice %100 {offsets = [0, 96], sizes = [2, 32], strides = [1, 1]} : vector<2x128xf32> to vector<2x32xf32>
    %111 = math.tanh %110 : vector<2x32xf32>
    %112 = arith.mulf %108, %74 : vector<2x32xf32>
    %113 = arith.mulf %107, %111 : vector<2x32xf32>
    %114 = arith.addf %112, %113 : vector<2x32xf32>
    %115 = math.tanh %114 : vector<2x32xf32>
    %116 = arith.mulf %109, %115 : vector<2x32xf32>
    %cst_36 = arith.constant dense<0.000000e+00> : vector<2x128xf32>
    %117 = tpu.matmul %116, %7, %cst_36 {dimension_numbers = #tpu.dot_dimension_numbers<[1], [0], [0], [1], [0, 0, 1, 1], [], []>} : vector<2x32xf32>, vector<32x128xf32>, vector<2x128xf32> -> vector<2x128xf32>
    %cst_37 = arith.constant dense<0.000000e+00> : vector<2x128xf32>
    %118 = tpu.matmul %97, %8, %cst_37 {dimension_numbers = #tpu.dot_dimension_numbers<[1], [0], [0], [1], [0, 0, 1, 1], [], []>} : vector<2x32xf32>, vector<32x128xf32>, vector<2x128xf32> -> vector<2x128xf32>
    %119 = arith.addf %117, %118 : vector<2x128xf32>
    %120 = vector.broadcast %9 : vector<1x128xf32> to vector<2x128xf32>
    %121 = arith.addf %119, %120 : vector<2x128xf32>
    %122 = vector.extract_strided_slice %121 {offsets = [0, 0], sizes = [2, 96], strides = [1, 1]} : vector<2x128xf32> to vector<2x96xf32>
    %123 = arith.negf %122 : vector<2x96xf32>
    %124 = math.exp %123 : vector<2x96xf32>
    %cst_38 = arith.constant 1.000000e+00 : f32
    %125 = vector.broadcast %cst_38 : f32 to vector<2x96xf32>
    %126 = arith.addf %125, %124 : vector<2x96xf32>
    %127 = arith.divf %125, %126 : vector<2x96xf32>
    %128 = vector.extract_strided_slice %127 {offsets = [0, 0], sizes = [2, 32], strides = [1, 1]} : vector<2x96xf32> to vector<2x32xf32>
    %129 = vector.extract_strided_slice %127 {offsets = [0, 32], sizes = [2, 32], strides = [1, 1]} : vector<2x96xf32> to vector<2x32xf32>
    %130 = vector.extract_strided_slice %127 {offsets = [0, 64], sizes = [2, 32], strides = [1, 1]} : vector<2x96xf32> to vector<2x32xf32>
    %131 = vector.extract_strided_slice %121 {offsets = [0, 96], sizes = [2, 32], strides = [1, 1]} : vector<2x128xf32> to vector<2x32xf32>
    %132 = math.tanh %131 : vector<2x32xf32>
    %133 = arith.mulf %129, %95 : vector<2x32xf32>
    %134 = arith.mulf %128, %132 : vector<2x32xf32>
    %135 = arith.addf %133, %134 : vector<2x32xf32>
    %136 = math.tanh %135 : vector<2x32xf32>
    %137 = arith.mulf %130, %136 : vector<2x32xf32>
    %138 = vector.extract_strided_slice %5 {offsets = [6, 0], sizes = [2, 128], strides = [1, 1]} : vector<16x128xf32> to vector<2x128xf32>
    %cst_39 = arith.constant dense<0.000000e+00> : vector<2x128xf32>
    %139 = tpu.matmul %116, %6, %cst_39 {dimension_numbers = #tpu.dot_dimension_numbers<[1], [0], [0], [1], [0, 0, 1, 1], [], []>} : vector<2x32xf32>, vector<32x128xf32>, vector<2x128xf32> -> vector<2x128xf32>
    %140 = arith.addf %138, %139 : vector<2x128xf32>
    %141 = vector.extract_strided_slice %140 {offsets = [0, 0], sizes = [2, 96], strides = [1, 1]} : vector<2x128xf32> to vector<2x96xf32>
    %142 = arith.negf %141 : vector<2x96xf32>
    %143 = math.exp %142 : vector<2x96xf32>
    %cst_40 = arith.constant 1.000000e+00 : f32
    %144 = vector.broadcast %cst_40 : f32 to vector<2x96xf32>
    %145 = arith.addf %144, %143 : vector<2x96xf32>
    %146 = arith.divf %144, %145 : vector<2x96xf32>
    %147 = vector.extract_strided_slice %146 {offsets = [0, 0], sizes = [2, 32], strides = [1, 1]} : vector<2x96xf32> to vector<2x32xf32>
    %148 = vector.extract_strided_slice %146 {offsets = [0, 32], sizes = [2, 32], strides = [1, 1]} : vector<2x96xf32> to vector<2x32xf32>
    %149 = vector.extract_strided_slice %146 {offsets = [0, 64], sizes = [2, 32], strides = [1, 1]} : vector<2x96xf32> to vector<2x32xf32>
    %150 = vector.extract_strided_slice %140 {offsets = [0, 96], sizes = [2, 32], strides = [1, 1]} : vector<2x128xf32> to vector<2x32xf32>
    %151 = math.tanh %150 : vector<2x32xf32>
    %152 = arith.mulf %148, %114 : vector<2x32xf32>
    %153 = arith.mulf %147, %151 : vector<2x32xf32>
    %154 = arith.addf %152, %153 : vector<2x32xf32>
    %155 = math.tanh %154 : vector<2x32xf32>
    %156 = arith.mulf %149, %155 : vector<2x32xf32>
    %cst_41 = arith.constant dense<0.000000e+00> : vector<2x128xf32>
    %157 = tpu.matmul %156, %7, %cst_41 {dimension_numbers = #tpu.dot_dimension_numbers<[1], [0], [0], [1], [0, 0, 1, 1], [], []>} : vector<2x32xf32>, vector<32x128xf32>, vector<2x128xf32> -> vector<2x128xf32>
    %cst_42 = arith.constant dense<0.000000e+00> : vector<2x128xf32>
    %158 = tpu.matmul %137, %8, %cst_42 {dimension_numbers = #tpu.dot_dimension_numbers<[1], [0], [0], [1], [0, 0, 1, 1], [], []>} : vector<2x32xf32>, vector<32x128xf32>, vector<2x128xf32> -> vector<2x128xf32>
    %159 = arith.addf %157, %158 : vector<2x128xf32>
    %160 = vector.broadcast %9 : vector<1x128xf32> to vector<2x128xf32>
    %161 = arith.addf %159, %160 : vector<2x128xf32>
    %162 = vector.extract_strided_slice %161 {offsets = [0, 0], sizes = [2, 96], strides = [1, 1]} : vector<2x128xf32> to vector<2x96xf32>
    %163 = arith.negf %162 : vector<2x96xf32>
    %164 = math.exp %163 : vector<2x96xf32>
    %cst_43 = arith.constant 1.000000e+00 : f32
    %165 = vector.broadcast %cst_43 : f32 to vector<2x96xf32>
    %166 = arith.addf %165, %164 : vector<2x96xf32>
    %167 = arith.divf %165, %166 : vector<2x96xf32>
    %168 = vector.extract_strided_slice %167 {offsets = [0, 0], sizes = [2, 32], strides = [1, 1]} : vector<2x96xf32> to vector<2x32xf32>
    %169 = vector.extract_strided_slice %167 {offsets = [0, 32], sizes = [2, 32], strides = [1, 1]} : vector<2x96xf32> to vector<2x32xf32>
    %170 = vector.extract_strided_slice %167 {offsets = [0, 64], sizes = [2, 32], strides = [1, 1]} : vector<2x96xf32> to vector<2x32xf32>
    %171 = vector.extract_strided_slice %161 {offsets = [0, 96], sizes = [2, 32], strides = [1, 1]} : vector<2x128xf32> to vector<2x32xf32>
    %172 = math.tanh %171 : vector<2x32xf32>
    %173 = arith.mulf %169, %135 : vector<2x32xf32>
    %174 = arith.mulf %168, %172 : vector<2x32xf32>
    %175 = arith.addf %173, %174 : vector<2x32xf32>
    %176 = math.tanh %175 : vector<2x32xf32>
    %177 = arith.mulf %170, %176 : vector<2x32xf32>
    %178 = vector.extract_strided_slice %5 {offsets = [8, 0], sizes = [2, 128], strides = [1, 1]} : vector<16x128xf32> to vector<2x128xf32>
    %cst_44 = arith.constant dense<0.000000e+00> : vector<2x128xf32>
    %179 = tpu.matmul %156, %6, %cst_44 {dimension_numbers = #tpu.dot_dimension_numbers<[1], [0], [0], [1], [0, 0, 1, 1], [], []>} : vector<2x32xf32>, vector<32x128xf32>, vector<2x128xf32> -> vector<2x128xf32>
    %180 = arith.addf %178, %179 : vector<2x128xf32>
    %181 = vector.extract_strided_slice %180 {offsets = [0, 0], sizes = [2, 96], strides = [1, 1]} : vector<2x128xf32> to vector<2x96xf32>
    %182 = arith.negf %181 : vector<2x96xf32>
    %183 = math.exp %182 : vector<2x96xf32>
    %cst_45 = arith.constant 1.000000e+00 : f32
    %184 = vector.broadcast %cst_45 : f32 to vector<2x96xf32>
    %185 = arith.addf %184, %183 : vector<2x96xf32>
    %186 = arith.divf %184, %185 : vector<2x96xf32>
    %187 = vector.extract_strided_slice %186 {offsets = [0, 0], sizes = [2, 32], strides = [1, 1]} : vector<2x96xf32> to vector<2x32xf32>
    %188 = vector.extract_strided_slice %186 {offsets = [0, 32], sizes = [2, 32], strides = [1, 1]} : vector<2x96xf32> to vector<2x32xf32>
    %189 = vector.extract_strided_slice %186 {offsets = [0, 64], sizes = [2, 32], strides = [1, 1]} : vector<2x96xf32> to vector<2x32xf32>
    %190 = vector.extract_strided_slice %180 {offsets = [0, 96], sizes = [2, 32], strides = [1, 1]} : vector<2x128xf32> to vector<2x32xf32>
    %191 = math.tanh %190 : vector<2x32xf32>
    %192 = arith.mulf %188, %154 : vector<2x32xf32>
    %193 = arith.mulf %187, %191 : vector<2x32xf32>
    %194 = arith.addf %192, %193 : vector<2x32xf32>
    %195 = math.tanh %194 : vector<2x32xf32>
    %196 = arith.mulf %189, %195 : vector<2x32xf32>
    %cst_46 = arith.constant dense<0.000000e+00> : vector<2x128xf32>
    %197 = tpu.matmul %196, %7, %cst_46 {dimension_numbers = #tpu.dot_dimension_numbers<[1], [0], [0], [1], [0, 0, 1, 1], [], []>} : vector<2x32xf32>, vector<32x128xf32>, vector<2x128xf32> -> vector<2x128xf32>
    %cst_47 = arith.constant dense<0.000000e+00> : vector<2x128xf32>
    %198 = tpu.matmul %177, %8, %cst_47 {dimension_numbers = #tpu.dot_dimension_numbers<[1], [0], [0], [1], [0, 0, 1, 1], [], []>} : vector<2x32xf32>, vector<32x128xf32>, vector<2x128xf32> -> vector<2x128xf32>
    %199 = arith.addf %197, %198 : vector<2x128xf32>
    %200 = vector.broadcast %9 : vector<1x128xf32> to vector<2x128xf32>
    %201 = arith.addf %199, %200 : vector<2x128xf32>
    %202 = vector.extract_strided_slice %201 {offsets = [0, 0], sizes = [2, 96], strides = [1, 1]} : vector<2x128xf32> to vector<2x96xf32>
    %203 = arith.negf %202 : vector<2x96xf32>
    %204 = math.exp %203 : vector<2x96xf32>
    %cst_48 = arith.constant 1.000000e+00 : f32
    %205 = vector.broadcast %cst_48 : f32 to vector<2x96xf32>
    %206 = arith.addf %205, %204 : vector<2x96xf32>
    %207 = arith.divf %205, %206 : vector<2x96xf32>
    %208 = vector.extract_strided_slice %207 {offsets = [0, 0], sizes = [2, 32], strides = [1, 1]} : vector<2x96xf32> to vector<2x32xf32>
    %209 = vector.extract_strided_slice %207 {offsets = [0, 32], sizes = [2, 32], strides = [1, 1]} : vector<2x96xf32> to vector<2x32xf32>
    %210 = vector.extract_strided_slice %207 {offsets = [0, 64], sizes = [2, 32], strides = [1, 1]} : vector<2x96xf32> to vector<2x32xf32>
    %211 = vector.extract_strided_slice %201 {offsets = [0, 96], sizes = [2, 32], strides = [1, 1]} : vector<2x128xf32> to vector<2x32xf32>
    %212 = math.tanh %211 : vector<2x32xf32>
    %213 = arith.mulf %209, %175 : vector<2x32xf32>
    %214 = arith.mulf %208, %212 : vector<2x32xf32>
    %215 = arith.addf %213, %214 : vector<2x32xf32>
    %216 = math.tanh %215 : vector<2x32xf32>
    %217 = arith.mulf %210, %216 : vector<2x32xf32>
    %218 = vector.extract_strided_slice %5 {offsets = [10, 0], sizes = [2, 128], strides = [1, 1]} : vector<16x128xf32> to vector<2x128xf32>
    %cst_49 = arith.constant dense<0.000000e+00> : vector<2x128xf32>
    %219 = tpu.matmul %196, %6, %cst_49 {dimension_numbers = #tpu.dot_dimension_numbers<[1], [0], [0], [1], [0, 0, 1, 1], [], []>} : vector<2x32xf32>, vector<32x128xf32>, vector<2x128xf32> -> vector<2x128xf32>
    %220 = arith.addf %218, %219 : vector<2x128xf32>
    %221 = vector.extract_strided_slice %220 {offsets = [0, 0], sizes = [2, 96], strides = [1, 1]} : vector<2x128xf32> to vector<2x96xf32>
    %222 = arith.negf %221 : vector<2x96xf32>
    %223 = math.exp %222 : vector<2x96xf32>
    %cst_50 = arith.constant 1.000000e+00 : f32
    %224 = vector.broadcast %cst_50 : f32 to vector<2x96xf32>
    %225 = arith.addf %224, %223 : vector<2x96xf32>
    %226 = arith.divf %224, %225 : vector<2x96xf32>
    %227 = vector.extract_strided_slice %226 {offsets = [0, 0], sizes = [2, 32], strides = [1, 1]} : vector<2x96xf32> to vector<2x32xf32>
    %228 = vector.extract_strided_slice %226 {offsets = [0, 32], sizes = [2, 32], strides = [1, 1]} : vector<2x96xf32> to vector<2x32xf32>
    %229 = vector.extract_strided_slice %226 {offsets = [0, 64], sizes = [2, 32], strides = [1, 1]} : vector<2x96xf32> to vector<2x32xf32>
    %230 = vector.extract_strided_slice %220 {offsets = [0, 96], sizes = [2, 32], strides = [1, 1]} : vector<2x128xf32> to vector<2x32xf32>
    %231 = math.tanh %230 : vector<2x32xf32>
    %232 = arith.mulf %228, %194 : vector<2x32xf32>
    %233 = arith.mulf %227, %231 : vector<2x32xf32>
    %234 = arith.addf %232, %233 : vector<2x32xf32>
    %235 = math.tanh %234 : vector<2x32xf32>
    %236 = arith.mulf %229, %235 : vector<2x32xf32>
    %cst_51 = arith.constant dense<0.000000e+00> : vector<2x128xf32>
    %237 = tpu.matmul %236, %7, %cst_51 {dimension_numbers = #tpu.dot_dimension_numbers<[1], [0], [0], [1], [0, 0, 1, 1], [], []>} : vector<2x32xf32>, vector<32x128xf32>, vector<2x128xf32> -> vector<2x128xf32>
    %cst_52 = arith.constant dense<0.000000e+00> : vector<2x128xf32>
    %238 = tpu.matmul %217, %8, %cst_52 {dimension_numbers = #tpu.dot_dimension_numbers<[1], [0], [0], [1], [0, 0, 1, 1], [], []>} : vector<2x32xf32>, vector<32x128xf32>, vector<2x128xf32> -> vector<2x128xf32>
    %239 = arith.addf %237, %238 : vector<2x128xf32>
    %240 = vector.broadcast %9 : vector<1x128xf32> to vector<2x128xf32>
    %241 = arith.addf %239, %240 : vector<2x128xf32>
    %242 = vector.extract_strided_slice %241 {offsets = [0, 0], sizes = [2, 96], strides = [1, 1]} : vector<2x128xf32> to vector<2x96xf32>
    %243 = arith.negf %242 : vector<2x96xf32>
    %244 = math.exp %243 : vector<2x96xf32>
    %cst_53 = arith.constant 1.000000e+00 : f32
    %245 = vector.broadcast %cst_53 : f32 to vector<2x96xf32>
    %246 = arith.addf %245, %244 : vector<2x96xf32>
    %247 = arith.divf %245, %246 : vector<2x96xf32>
    %248 = vector.extract_strided_slice %247 {offsets = [0, 0], sizes = [2, 32], strides = [1, 1]} : vector<2x96xf32> to vector<2x32xf32>
    %249 = vector.extract_strided_slice %247 {offsets = [0, 32], sizes = [2, 32], strides = [1, 1]} : vector<2x96xf32> to vector<2x32xf32>
    %250 = vector.extract_strided_slice %247 {offsets = [0, 64], sizes = [2, 32], strides = [1, 1]} : vector<2x96xf32> to vector<2x32xf32>
    %251 = vector.extract_strided_slice %241 {offsets = [0, 96], sizes = [2, 32], strides = [1, 1]} : vector<2x128xf32> to vector<2x32xf32>
    %252 = math.tanh %251 : vector<2x32xf32>
    %253 = arith.mulf %249, %215 : vector<2x32xf32>
    %254 = arith.mulf %248, %252 : vector<2x32xf32>
    %255 = arith.addf %253, %254 : vector<2x32xf32>
    %256 = math.tanh %255 : vector<2x32xf32>
    %257 = arith.mulf %250, %256 : vector<2x32xf32>
    %258 = vector.extract_strided_slice %5 {offsets = [12, 0], sizes = [2, 128], strides = [1, 1]} : vector<16x128xf32> to vector<2x128xf32>
    %cst_54 = arith.constant dense<0.000000e+00> : vector<2x128xf32>
    %259 = tpu.matmul %236, %6, %cst_54 {dimension_numbers = #tpu.dot_dimension_numbers<[1], [0], [0], [1], [0, 0, 1, 1], [], []>} : vector<2x32xf32>, vector<32x128xf32>, vector<2x128xf32> -> vector<2x128xf32>
    %260 = arith.addf %258, %259 : vector<2x128xf32>
    %261 = vector.extract_strided_slice %260 {offsets = [0, 0], sizes = [2, 96], strides = [1, 1]} : vector<2x128xf32> to vector<2x96xf32>
    %262 = arith.negf %261 : vector<2x96xf32>
    %263 = math.exp %262 : vector<2x96xf32>
    %cst_55 = arith.constant 1.000000e+00 : f32
    %264 = vector.broadcast %cst_55 : f32 to vector<2x96xf32>
    %265 = arith.addf %264, %263 : vector<2x96xf32>
    %266 = arith.divf %264, %265 : vector<2x96xf32>
    %267 = vector.extract_strided_slice %266 {offsets = [0, 0], sizes = [2, 32], strides = [1, 1]} : vector<2x96xf32> to vector<2x32xf32>
    %268 = vector.extract_strided_slice %266 {offsets = [0, 32], sizes = [2, 32], strides = [1, 1]} : vector<2x96xf32> to vector<2x32xf32>
    %269 = vector.extract_strided_slice %266 {offsets = [0, 64], sizes = [2, 32], strides = [1, 1]} : vector<2x96xf32> to vector<2x32xf32>
    %270 = vector.extract_strided_slice %260 {offsets = [0, 96], sizes = [2, 32], strides = [1, 1]} : vector<2x128xf32> to vector<2x32xf32>
    %271 = math.tanh %270 : vector<2x32xf32>
    %272 = arith.mulf %268, %234 : vector<2x32xf32>
    %273 = arith.mulf %267, %271 : vector<2x32xf32>
    %274 = arith.addf %272, %273 : vector<2x32xf32>
    %275 = math.tanh %274 : vector<2x32xf32>
    %276 = arith.mulf %269, %275 : vector<2x32xf32>
    %cst_56 = arith.constant dense<0.000000e+00> : vector<2x128xf32>
    %277 = tpu.matmul %276, %7, %cst_56 {dimension_numbers = #tpu.dot_dimension_numbers<[1], [0], [0], [1], [0, 0, 1, 1], [], []>} : vector<2x32xf32>, vector<32x128xf32>, vector<2x128xf32> -> vector<2x128xf32>
    %cst_57 = arith.constant dense<0.000000e+00> : vector<2x128xf32>
    %278 = tpu.matmul %257, %8, %cst_57 {dimension_numbers = #tpu.dot_dimension_numbers<[1], [0], [0], [1], [0, 0, 1, 1], [], []>} : vector<2x32xf32>, vector<32x128xf32>, vector<2x128xf32> -> vector<2x128xf32>
    %279 = arith.addf %277, %278 : vector<2x128xf32>
    %280 = vector.broadcast %9 : vector<1x128xf32> to vector<2x128xf32>
    %281 = arith.addf %279, %280 : vector<2x128xf32>
    %282 = vector.extract_strided_slice %281 {offsets = [0, 0], sizes = [2, 96], strides = [1, 1]} : vector<2x128xf32> to vector<2x96xf32>
    %283 = arith.negf %282 : vector<2x96xf32>
    %284 = math.exp %283 : vector<2x96xf32>
    %cst_58 = arith.constant 1.000000e+00 : f32
    %285 = vector.broadcast %cst_58 : f32 to vector<2x96xf32>
    %286 = arith.addf %285, %284 : vector<2x96xf32>
    %287 = arith.divf %285, %286 : vector<2x96xf32>
    %288 = vector.extract_strided_slice %287 {offsets = [0, 0], sizes = [2, 32], strides = [1, 1]} : vector<2x96xf32> to vector<2x32xf32>
    %289 = vector.extract_strided_slice %287 {offsets = [0, 32], sizes = [2, 32], strides = [1, 1]} : vector<2x96xf32> to vector<2x32xf32>
    %290 = vector.extract_strided_slice %287 {offsets = [0, 64], sizes = [2, 32], strides = [1, 1]} : vector<2x96xf32> to vector<2x32xf32>
    %291 = vector.extract_strided_slice %281 {offsets = [0, 96], sizes = [2, 32], strides = [1, 1]} : vector<2x128xf32> to vector<2x32xf32>
    %292 = math.tanh %291 : vector<2x32xf32>
    %293 = arith.mulf %289, %255 : vector<2x32xf32>
    %294 = arith.mulf %288, %292 : vector<2x32xf32>
    %295 = arith.addf %293, %294 : vector<2x32xf32>
    %296 = math.tanh %295 : vector<2x32xf32>
    %297 = arith.mulf %290, %296 : vector<2x32xf32>
    %298 = vector.extract_strided_slice %5 {offsets = [14, 0], sizes = [2, 128], strides = [1, 1]} : vector<16x128xf32> to vector<2x128xf32>
    %cst_59 = arith.constant dense<0.000000e+00> : vector<2x128xf32>
    %299 = tpu.matmul %276, %6, %cst_59 {dimension_numbers = #tpu.dot_dimension_numbers<[1], [0], [0], [1], [0, 0, 1, 1], [], []>} : vector<2x32xf32>, vector<32x128xf32>, vector<2x128xf32> -> vector<2x128xf32>
    %300 = arith.addf %298, %299 : vector<2x128xf32>
    %301 = vector.extract_strided_slice %300 {offsets = [0, 0], sizes = [2, 96], strides = [1, 1]} : vector<2x128xf32> to vector<2x96xf32>
    %302 = arith.negf %301 : vector<2x96xf32>
    %303 = math.exp %302 : vector<2x96xf32>
    %cst_60 = arith.constant 1.000000e+00 : f32
    %304 = vector.broadcast %cst_60 : f32 to vector<2x96xf32>
    %305 = arith.addf %304, %303 : vector<2x96xf32>
    %306 = arith.divf %304, %305 : vector<2x96xf32>
    %307 = vector.extract_strided_slice %306 {offsets = [0, 0], sizes = [2, 32], strides = [1, 1]} : vector<2x96xf32> to vector<2x32xf32>
    %308 = vector.extract_strided_slice %306 {offsets = [0, 32], sizes = [2, 32], strides = [1, 1]} : vector<2x96xf32> to vector<2x32xf32>
    %309 = vector.extract_strided_slice %306 {offsets = [0, 64], sizes = [2, 32], strides = [1, 1]} : vector<2x96xf32> to vector<2x32xf32>
    %310 = vector.extract_strided_slice %300 {offsets = [0, 96], sizes = [2, 32], strides = [1, 1]} : vector<2x128xf32> to vector<2x32xf32>
    %311 = math.tanh %310 : vector<2x32xf32>
    %312 = arith.mulf %308, %274 : vector<2x32xf32>
    %313 = arith.mulf %307, %311 : vector<2x32xf32>
    %314 = arith.addf %312, %313 : vector<2x32xf32>
    %315 = math.tanh %314 : vector<2x32xf32>
    %316 = arith.mulf %309, %315 : vector<2x32xf32>
    %cst_61 = arith.constant dense<0.000000e+00> : vector<2x128xf32>
    %317 = tpu.matmul %316, %7, %cst_61 {dimension_numbers = #tpu.dot_dimension_numbers<[1], [0], [0], [1], [0, 0, 1, 1], [], []>} : vector<2x32xf32>, vector<32x128xf32>, vector<2x128xf32> -> vector<2x128xf32>
    %cst_62 = arith.constant dense<0.000000e+00> : vector<2x128xf32>
    %318 = tpu.matmul %297, %8, %cst_62 {dimension_numbers = #tpu.dot_dimension_numbers<[1], [0], [0], [1], [0, 0, 1, 1], [], []>} : vector<2x32xf32>, vector<32x128xf32>, vector<2x128xf32> -> vector<2x128xf32>
    %319 = arith.addf %317, %318 : vector<2x128xf32>
    %320 = vector.broadcast %9 : vector<1x128xf32> to vector<2x128xf32>
    %321 = arith.addf %319, %320 : vector<2x128xf32>
    %322 = vector.extract_strided_slice %321 {offsets = [0, 0], sizes = [2, 96], strides = [1, 1]} : vector<2x128xf32> to vector<2x96xf32>
    %323 = arith.negf %322 : vector<2x96xf32>
    %324 = math.exp %323 : vector<2x96xf32>
    %cst_63 = arith.constant 1.000000e+00 : f32
    %325 = vector.broadcast %cst_63 : f32 to vector<2x96xf32>
    %326 = arith.addf %325, %324 : vector<2x96xf32>
    %327 = arith.divf %325, %326 : vector<2x96xf32>
    %328 = vector.extract_strided_slice %327 {offsets = [0, 0], sizes = [2, 32], strides = [1, 1]} : vector<2x96xf32> to vector<2x32xf32>
    %329 = vector.extract_strided_slice %327 {offsets = [0, 32], sizes = [2, 32], strides = [1, 1]} : vector<2x96xf32> to vector<2x32xf32>
    %330 = vector.extract_strided_slice %327 {offsets = [0, 64], sizes = [2, 32], strides = [1, 1]} : vector<2x96xf32> to vector<2x32xf32>
    %331 = vector.extract_strided_slice %321 {offsets = [0, 96], sizes = [2, 32], strides = [1, 1]} : vector<2x128xf32> to vector<2x32xf32>
    %332 = math.tanh %331 : vector<2x32xf32>
    %333 = arith.mulf %329, %295 : vector<2x32xf32>
    %334 = arith.mulf %328, %332 : vector<2x32xf32>
    %335 = arith.addf %333, %334 : vector<2x32xf32>
    %336 = math.tanh %335 : vector<2x32xf32>
    %337 = arith.mulf %330, %336 : vector<2x32xf32>
    %c0_64 = arith.constant 0 : index
    %c0_65 = arith.constant 0 : index
    %338 = vector.load %arg9[%c0_64, %c0_65] : memref<32x10xf32, #tpu.memory_space<vmem>>, vector<32x10xf32>
    %cst_66 = arith.constant dense<0.000000e+00> : vector<2x10xf32>
    %339 = tpu.matmul %337, %338, %cst_66 {dimension_numbers = #tpu.dot_dimension_numbers<[1], [0], [0], [1], [0, 0, 1, 1], [], []>} : vector<2x32xf32>, vector<32x10xf32>, vector<2x10xf32> -> vector<2x10xf32>
    %c0_67 = arith.constant 0 : index
    %c0_68 = arith.constant 0 : index
    %340 = vector.load %arg10[%c0_67, %c0_68] : memref<1x10xf32, #tpu.memory_space<vmem>>, vector<1x10xf32>
    %341 = vector.broadcast %340 : vector<1x10xf32> to vector<2x10xf32>
    %342 = arith.addf %339, %341 : vector<2x10xf32>
    %cst_69 = arith.constant dense<0xFF800000> : vector<2xf32>
    %343 = vector.multi_reduction <maximumf>, %342, %cst_69 [1] : vector<2x10xf32> to vector<2xf32>
    %344 = vector.shape_cast %343 : vector<2xf32> to vector<2x1xf32>
    %345 = vector.broadcast %344 : vector<2x1xf32> to vector<2x10xf32>
    %346 = arith.subf %342, %345 : vector<2x10xf32>
    %347 = math.exp %346 : vector<2x10xf32>
    %cst_70 = arith.constant dense<0.000000e+00> : vector<2xf32>
    %348 = vector.multi_reduction <add>, %347, %cst_70 [1] : vector<2x10xf32> to vector<2xf32>
    %349 = vector.shape_cast %348 : vector<2xf32> to vector<2x1xf32>
    %350 = vector.broadcast %349 : vector<2x1xf32> to vector<2x10xf32>
    %351 = arith.divf %347, %350 : vector<2x10xf32>
    %c0_71 = arith.constant 0 : index
    %c0_72 = arith.constant 0 : index
    %352 = vector.load %arg11[%c0_71, %c0_72] : memref<2x10xf32, #tpu.memory_space<vmem>>, vector<2x10xf32>
    tpu.vector_store %arg11[%c0_71, %c0_72], %351 {strides = array<i32>} : memref<2x10xf32, #tpu.memory_space<vmem>>, vector<2x10xf32>,
    return
  }
}

</mosaic_0001>

<llo_original>
// kernel: cnn_lstm_forward.2
$region0: #{cnn_lstm_forward.2}
  #allocation0 [shape = 'u32[]', space=smem, size = 0x4, offset = 0x4, fixed_abs, tag = 'smem constant byte address 0x4 - core index']
  #allocation1 [shape = 'u32[144,128]{1,0:T(1,128)}', space=vmem, size = 0x12000, scoped, tag = 'internal scratch']
  %s0 = inlined_call_operand.vmem [shape: f32[2,2048,36], index: 0, kind: input, shape index: {}]
  %s1 = inlined_call_operand.vmem [shape: f32[36,8], index: 1, kind: input, shape index: {}]
  %s2 = inlined_call_operand.vmem [shape: f32[1,8], index: 2, kind: input, shape index: {}]
  %s3 = inlined_call_operand.vmem [shape: f32[1024,8], index: 3, kind: output, shape index: {}]
  %s4 = sld [smem:[#allocation0]]
  $region45: #{cnn_lstm_forward.2} parent=0
    _
  %s6 = ssub.s32 1, %s4
  %s7 = scalar_select 0, %s6, %s4
  loop: start=0, step=1, limit=4
  $region2: #{cnn_lstm_forward.2} parent=0 // loop_pre_header
    _
  $region3: #{cnn_lstm_forward.2} parent=0 // loop_header
    %s9 = sphi 0, %s13
    %p10 = scmp.ge.s32.totalorder %s9, 4
    %s19 = sphi 0, %s21
    %s22 = sphi 0, %s19
    %s23 = sphi 0, %s22
    %s39 = sphi 0, %s23
    %s43 = sphi 0, %s43
    %s45 = sphi 0, %s43
    %s46 = sphi 0, %s45
    %s60 = sphi 0, %s46
    %s64 = sphi 0, %s64
    %s66 = sphi 0, %s64
    %s67 = sphi 0, %s66
    %s81 = sphi 0, %s67
    %s87 = sphi 0, %s89
    %s90 = sphi 0, %s87
    %s91 = sphi 0, %s90
    %s107 = sphi 0, %s91
  $region4: #{cnn_lstm_forward.2} parent=0 // loop_header_branch
    %12 = sbr.rel (%p10) target = $region8
  $region5: #{cnn_lstm_forward.2} parent=0 // loop_body
    %s14 = ssub.s32 %s9, 1
    %s15 = ssub.s32 %s9, 2
    %s16 = sadd.s32 %s9, 1
    %s17 = ssub.s32 %s9, %s16
    %p18 = scmp.eq.s32.totalorder %s17, 0
    %s20 = sadd.s32 %s19, 1
    %s21 = scalar_select %p18, %s19, %s20
    %p24 = pneg %p18
    %p25 = scmp.eq.s32.totalorder %s9, 1
    %p26 = por %p24, %p25
    %p27 = scmp.ne.s32.totalorder %s19, %s22
    %p28 = scmp.eq.s32.totalorder %s9, 0
    %p29 = por %p27, %p28
    %p30 = scmp.ne.s32.totalorder %s19, %s22
    %p31 = scmp.eq.s32.totalorder %s14, 1
    %p32 = por %p30, %p31
    %p33 = scmp.ne.s32.totalorder %s22, %s23
    %p34 = scmp.eq.s32.totalorder %s14, 0
    %p35 = por %p33, %p34
    %p36 = scmp.ne.s32.totalorder %s22, %s23
    %p37 = scmp.eq.s32.totalorder %s15, 1
    %p38 = por %p36, %p37
    %p40 = scmp.ne.s32.totalorder %s23, %s39
    %p41 = scmp.eq.s32.totalorder %s15, 0
    %p42 = por %p40, %p41
    %s44 = sadd.s32 %s43, 1
    %p47 = scmp.eq.s32.totalorder %s9, 1
    %p48 = scmp.ne.s32.totalorder %s43, %s45
    %p49 = scmp.eq.s32.totalorder %s9, 0
    %p50 = por %p48, %p49
    %p51 = scmp.ne.s32.totalorder %s43, %s45
    %p52 = scmp.eq.s32.totalorder %s14, 1
    %p53 = por %p51, %p52
    %p54 = scmp.ne.s32.totalorder %s45, %s46
    %p55 = scmp.eq.s32.totalorder %s14, 0
    %p56 = por %p54, %p55
    %p57 = scmp.ne.s32.totalorder %s45, %s46
    %p58 = scmp.eq.s32.totalorder %s15, 1
    %p59 = por %p57, %p58
    %p61 = scmp.ne.s32.totalorder %s46, %s60
    %p62 = scmp.eq.s32.totalorder %s15, 0
    %p63 = por %p61, %p62
    %s65 = sadd.s32 %s64, 1
    %p68 = scmp.eq.s32.totalorder %s9, 1
    %p69 = scmp.ne.s32.totalorder %s64, %s66
    %p70 = scmp.eq.s32.totalorder %s9, 0
    %p71 = por %p69, %p70
    %p72 = scmp.ne.s32.totalorder %s64, %s66
    %p73 = scmp.eq.s32.totalorder %s14, 1
    %p74 = por %p72, %p73
    %p75 = scmp.ne.s32.totalorder %s66, %s67
    %p76 = scmp.eq.s32.totalorder %s14, 0
    %p77 = por %p75, %p76
    %p78 = scmp.ne.s32.totalorder %s66, %s67
    %p79 = scmp.eq.s32.totalorder %s15, 1
    %p80 = por %p78, %p79
    %p82 = scmp.ne.s32.totalorder %s67, %s81
    %p83 = scmp.eq.s32.totalorder %s15, 0
    %p84 = por %p82, %p83
    %s85 = ssub.s32 %s9, %s16
    %p86 = scmp.eq.s32.totalorder %s85, 0
    %s88 = sadd.s32 %s87, 1
    %s89 = scalar_select %p86, %s87, %s88
    %p92 = pneg %p86
    %p93 = scmp.eq.s32.totalorder %s9, 1
    %p94 = por %p92, %p93
    %p95 = scmp.ne.s32.totalorder %s87, %s90
    %p96 = scmp.eq.s32.totalorder %s9, 0
    %p97 = por %p95, %p96
    %p98 = scmp.ne.s32.totalorder %s87, %s90
    %p99 = scmp.eq.s32.totalorder %s14, 1
    %p100 = por %p98, %p99
    %p101 = scmp.ne.s32.totalorder %s90, %s91
    %p102 = scmp.eq.s32.totalorder %s14, 0
    %p103 = por %p101, %p102
    %p104 = scmp.ne.s32.totalorder %s90, %s91
    %p105 = scmp.eq.s32.totalorder %s15, 1
    %p106 = por %p104, %p105
    %p108 = scmp.ne.s32.totalorder %s91, %s107
    %p109 = scmp.eq.s32.totalorder %s15, 0
    %p110 = por %p108, %p109
    %p111 = scmp.le.s32.totalorder 1, %s9
    %p112 = scmp.lt.s32.totalorder %s9, 3
    %p113 = pnand %p111, %p112
    %p114 = pneg %p113
    // Predicated region
    $region9: #{cnn_lstm_forward.2} parent=5 // pred_check
      _
    $region10: #{cnn_lstm_forward.2} parent=5 // pred_check_branch
      %116 = sbr.rel (%p113) target = $region12
    $region11: #{cnn_lstm_forward.2} parent=5 // pred_region
      %s117 = ssub.s32 %s9, 1
      // Predicated region
      $region13: #{cnn_lstm_forward.2} parent=11 // pred_check
        %p118 = pneg %p56
      $region14: #{cnn_lstm_forward.2} parent=11 // pred_check_branch
        %120 = sbr.rel (%p118) target = $region16
      $region15: #{cnn_lstm_forward.2} parent=11 // pred_region
        _
      $region16: #{cnn_lstm_forward.2} parent=11 // pred_fallthru
        _
      // Predicated region
      $region17: #{cnn_lstm_forward.2} parent=11 // pred_check
        %p121 = pneg %p77
      $region18: #{cnn_lstm_forward.2} parent=11 // pred_check_branch
        %123 = sbr.rel (%p121) target = $region20
      $region19: #{cnn_lstm_forward.2} parent=11 // pred_region
        _
      $region20: #{cnn_lstm_forward.2} parent=11 // pred_fallthru
        _
    $region12: #{cnn_lstm_forward.2} parent=5 // pred_fallthru
      _
    %p124 = scmp.lt.s32.totalorder %s9, 2
    // Predicated region
    $region21: #{cnn_lstm_forward.2} parent=5 // pred_check
      %p125 = pneg %p124
    $region22: #{cnn_lstm_forward.2} parent=5 // pred_check_branch
      %127 = sbr.rel (%p125) target = $region24
    $region23: #{cnn_lstm_forward.2} parent=5 // pred_region
      // Predicated region
      $region25: #{cnn_lstm_forward.2} parent=23 // pred_check
        %p128 = pneg %p29
      $region26: #{cnn_lstm_forward.2} parent=23 // pred_check_branch
        %130 = sbr.rel (%p128) target = $region28
      $region27: #{cnn_lstm_forward.2} parent=23 // pred_region
        %p131 = scmp.lt.s32.totalorder %s9, 1
        %s132 = scalar_select %p131, %s9, 1
        %s133 = smul.addr %s132, 256
        %s134 = smul.addr %s133, 8
        %s135 = scalar_lea.vmem %s0, %s134
      $region28: #{cnn_lstm_forward.2} parent=23 // pred_fallthru
        _
    $region24: #{cnn_lstm_forward.2} parent=5 // pred_fallthru
      _
    %p136 = scmp.le.s32.totalorder 1, %s9
    %p137 = scmp.lt.s32.totalorder %s9, 3
    %p138 = pnand %p136, %p137
    %p139 = pneg %p138
    // Predicated region
    $region29: #{cnn_lstm_forward.2} parent=5 // pred_check
      _
    $region30: #{cnn_lstm_forward.2} parent=5 // pred_check_branch
      %141 = sbr.rel (%p138) target = $region32
    $region31: #{cnn_lstm_forward.2} parent=5 // pred_region
      %s142 = ssub.s32 %s9, 1
      %p143 = scmp.lt.s32.totalorder %s14, 1
      %s144 = scalar_select %p143, %s14, 1
      %s145 = smul.addr %s144, 256
      %s146 = smul.addr %s145, 8
      %s147 = scalar_lea.vmem %s0, %s146
      %p148 = pneg %p35
      %p149 = pneg %p32
      %p150 = pneg %p56
      %p151 = pneg %p53
      %p152 = pneg %p77
      %p153 = pneg %p74
      %p154 = pneg %p103
      %p155 = pneg %p100
      %s156 = smul.u32 64, %s14
      %p157 = scmp.lt.s32.totalorder %s156, 127
      %s158 = scalar_select %p157, %s156, 127
      %s159 = smul.addr %s158, 8
      %s160 = scalar_lea.vmem %s3, %s159
      %p161 = scmp.lt.s32.totalorder %s14, 1
      %s162 = scalar_select %p161, %s14, 1
      %s163 = smul.addr %s162, 256
      %s164 = smul.addr %s163, 8
      %s165 = scalar_lea.vmem %s0, %s164
      %s166 = smul.u32 64, %s14
      %p167 = scmp.lt.s32.totalorder %s166, 127
      %s168 = scalar_select %p167, %s166, 127
      %s169 = smul.addr %s168, 8
      %s170 = scalar_lea.vmem %s3, %s169
      %s171 = smul.u32 64, %s14
      %v172 = vld [vmem:[%s165] sm:$0xff]
      %v173 = vld [vmem:[%s165 + $0x8] sm:$0xff]
      %v174 = vld [vmem:[%s165 + $0x10] sm:$0xff]
      %v175 = vld [vmem:[%s165 + $0x18] sm:$0xff]
      %v176 = vld [vmem:[%s165 + $0x20] sm:$0xff]
      %v177 = vld [vmem:[%s165 + $0x28] sm:$0xff]
      %v178 = vld [vmem:[%s165 + $0x30] sm:$0xff]
      %v179 = vld [vmem:[%s165 + $0x38] sm:$0xff]
      %v180 = vld [vmem:[%s165 + $0x40] sm:$0xff]
      %v181 = vld [vmem:[%s165 + $0x48] sm:$0xff]
      %v182 = vld [vmem:[%s165 + $0x50] sm:$0xff]
      %v183 = vld [vmem:[%s165 + $0x58] sm:$0xff]
      %v184 = vld [vmem:[%s165 + $0x60] sm:$0xff]
      %v185 = vld [vmem:[%s165 + $0x68] sm:$0xff]
      %v186 = vld [vmem:[%s165 + $0x70] sm:$0xff]
      %v187 = vld [vmem:[%s165 + $0x78] sm:$0xff]
      %v188 = vld [vmem:[%s165 + $0x80] sm:$0xff]
      %v189 = vld [vmem:[%s165 + $0x88] sm:$0xff]
      %v190 = vld [vmem:[%s165 + $0x90] sm:$0xff]
      %v191 = vld [vmem:[%s165 + $0x98] sm:$0xff]
      %v192 = vld [vmem:[%s165 + $0xa0] sm:$0xff]
      %v193 = vld [vmem:[%s165 + $0xa8] sm:$0xff]
      %v194 = vld [vmem:[%s165 + $0xb0] sm:$0xff]
      %v195 = vld [vmem:[%s165 + $0xb8] sm:$0xff]
      %v196 = vld [vmem:[%s165 + $0xc0] sm:$0xff]
      %v197 = vld [vmem:[%s165 + $0xc8] sm:$0xff]
      %v198 = vld [vmem:[%s165 + $0xd0] sm:$0xff]
      %v199 = vld [vmem:[%s165 + $0xd8] sm:$0xff]
      %v200 = vld [vmem:[%s165 + $0xe0] sm:$0xff]
      %v201 = vld [vmem:[%s165 + $0xe8] sm:$0xff]
      %v202 = vld [vmem:[%s165 + $0xf0] sm:$0xff]
      %v203 = vld [vmem:[%s165 + $0xf8] sm:$0xff]
      %v204 = vld [vmem:[%s165 + $0x100] sm:$0xff]
      %v205 = vld [vmem:[%s165 + $0x108] sm:$0xff]
      %v206 = vld [vmem:[%s165 + $0x110] sm:$0xff]
      %v207 = vld [vmem:[%s165 + $0x118] sm:$0xff]
      %v208 = vld [vmem:[%s165 + $0x120] sm:$0xff]
      %v209 = vld [vmem:[%s165 + $0x128] sm:$0xff]
      %v210 = vld [vmem:[%s165 + $0x130] sm:$0xff]
      %v211 = vld [vmem:[%s165 + $0x138] sm:$0xff]
      %v212 = vld [vmem:[%s165 + $0x140] sm:$0xff]
      %v213 = vld [vmem:[%s165 + $0x148] sm:$0xff]
      %v214 = vld [vmem:[%s165 + $0x150] sm:$0xff]
      %v215 = vld [vmem:[%s165 + $0x158] sm:$0xff]
      %v216 = vld [vmem:[%s165 + $0x160] sm:$0xff]
      %v217 = vld [vmem:[%s165 + $0x168] sm:$0xff]
      %v218 = vld [vmem:[%s165 + $0x170] sm:$0xff]
      %v219 = vld [vmem:[%s165 + $0x178] sm:$0xff]
      %v220 = vld [vmem:[%s165 + $0x180] sm:$0xff]
      %v221 = vld [vmem:[%s165 + $0x188] sm:$0xff]
      %v222 = vld [vmem:[%s165 + $0x190] sm:$0xff]
      %v223 = vld [vmem:[%s165 + $0x198] sm:$0xff]
      %v224 = vld [vmem:[%s165 + $0x1a0] sm:$0xff]
      %v225 = vld [vmem:[%s165 + $0x1a8] sm:$0xff]
      %v226 = vld [vmem:[%s165 + $0x1b0] sm:$0xff]
      %v227 = vld [vmem:[%s165 + $0x1b8] sm:$0xff]
      %v228 = vld [vmem:[%s165 + $0x1c0] sm:$0xff]
      %v229 = vld [vmem:[%s165 + $0x1c8] sm:$0xff]
      %v230 = vld [vmem:[%s165 + $0x1d0] sm:$0xff]
      %v231 = vld [vmem:[%s165 + $0x1d8] sm:$0xff]
      %v232 = vld [vmem:[%s165 + $0x1e0] sm:$0xff]
      %v233 = vld [vmem:[%s165 + $0x1e8] sm:$0xff]
      %v234 = vld [vmem:[%s165 + $0x1f0] sm:$0xff]
      %v235 = vld [vmem:[%s165 + $0x1f8] sm:$0xff]
      %v236 = vld [vmem:[%s165 + $0x200] sm:$0xff]
      %v237 = vld [vmem:[%s165 + $0x208] sm:$0xff]
      %v238 = vld [vmem:[%s165 + $0x210] sm:$0xff]
      %v239 = vld [vmem:[%s165 + $0x218] sm:$0xff]
      %v240 = vld [vmem:[%s165 + $0x220] sm:$0xff]
      %v241 = vld [vmem:[%s165 + $0x228] sm:$0xff]
      %v242 = vld [vmem:[%s165 + $0x230] sm:$0xff]
      %v243 = vld [vmem:[%s165 + $0x238] sm:$0xff]
      %v244 = vld [vmem:[%s165 + $0x240] sm:$0xff]
      %v245 = vld [vmem:[%s165 + $0x248] sm:$0xff]
      %v246 = vld [vmem:[%s165 + $0x250] sm:$0xff]
      %v247 = vld [vmem:[%s165 + $0x258] sm:$0xff]
      %v248 = vld [vmem:[%s165 + $0x260] sm:$0xff]
      %v249 = vld [vmem:[%s165 + $0x268] sm:$0xff]
      %v250 = vld [vmem:[%s165 + $0x270] sm:$0xff]
      %v251 = vld [vmem:[%s165 + $0x278] sm:$0xff]
      %v252 = vld [vmem:[%s165 + $0x280] sm:$0xff]
      %v253 = vld [vmem:[%s165 + $0x288] sm:$0xff]
      %v254 = vld [vmem:[%s165 + $0x290] sm:$0xff]
      %v255 = vld [vmem:[%s165 + $0x298] sm:$0xff]
      %v256 = vld [vmem:[%s165 + $0x2a0] sm:$0xff]
      %v257 = vld [vmem:[%s165 + $0x2a8] sm:$0xff]
      %v258 = vld [vmem:[%s165 + $0x2b0] sm:$0xff]
      %v259 = vld [vmem:[%s165 + $0x2b8] sm:$0xff]
      %v260 = vld [vmem:[%s165 + $0x2c0] sm:$0xff]
      %v261 = vld [vmem:[%s165 + $0x2c8] sm:$0xff]
      %v262 = vld [vmem:[%s165 + $0x2d0] sm:$0xff]
      %v263 = vld [vmem:[%s165 + $0x2d8] sm:$0xff]
      %v264 = vld [vmem:[%s165 + $0x2e0] sm:$0xff]
      %v265 = vld [vmem:[%s165 + $0x2e8] sm:$0xff]
      %v266 = vld [vmem:[%s165 + $0x2f0] sm:$0xff]
      %v267 = vld [vmem:[%s165 + $0x2f8] sm:$0xff]
      %v268 = vld [vmem:[%s165 + $0x300] sm:$0xff]
      %v269 = vld [vmem:[%s165 + $0x308] sm:$0xff]
      %v270 = vld [vmem:[%s165 + $0x310] sm:$0xff]
      %v271 = vld [vmem:[%s165 + $0x318] sm:$0xff]
      %v272 = vld [vmem:[%s165 + $0x320] sm:$0xff]
      %v273 = vld [vmem:[%s165 + $0x328] sm:$0xff]
      %v274 = vld [vmem:[%s165 + $0x330] sm:$0xff]
      %v275 = vld [vmem:[%s165 + $0x338] sm:$0xff]
      %v276 = vld [vmem:[%s165 + $0x340] sm:$0xff]
      %v277 = vld [vmem:[%s165 + $0x348] sm:$0xff]
      %v278 = vld [vmem:[%s165 + $0x350] sm:$0xff]
      %v279 = vld [vmem:[%s165 + $0x358] sm:$0xff]
      %v280 = vld [vmem:[%s165 + $0x360] sm:$0xff]
      %v281 = vld [vmem:[%s165 + $0x368] sm:$0xff]
      %v282 = vld [vmem:[%s165 + $0x370] sm:$0xff]
      %v283 = vld [vmem:[%s165 + $0x378] sm:$0xff]
      %v284 = vld [vmem:[%s165 + $0x380] sm:$0xff]
      %v285 = vld [vmem:[%s165 + $0x388] sm:$0xff]
      %v286 = vld [vmem:[%s165 + $0x390] sm:$0xff]
      %v287 = vld [vmem:[%s165 + $0x398] sm:$0xff]
      %v288 = vld [vmem:[%s165 + $0x3a0] sm:$0xff]
      %v289 = vld [vmem:[%s165 + $0x3a8] sm:$0xff]
      %v290 = vld [vmem:[%s165 + $0x3b0] sm:$0xff]
      %v291 = vld [vmem:[%s165 + $0x3b8] sm:$0xff]
      %v292 = vld [vmem:[%s165 + $0x3c0] sm:$0xff]
      %v293 = vld [vmem:[%s165 + $0x3c8] sm:$0xff]
      %v294 = vld [vmem:[%s165 + $0x3d0] sm:$0xff]
      %v295 = vld [vmem:[%s165 + $0x3d8] sm:$0xff]
      %v296 = vld [vmem:[%s165 + $0x3e0] sm:$0xff]
      %v297 = vld [vmem:[%s165 + $0x3e8] sm:$0xff]
      %v298 = vld [vmem:[%s165 + $0x3f0] sm:$0xff]
      %v299 = vld [vmem:[%s165 + $0x3f8] sm:$0xff]
      %v300 = vld [vmem:[%s165 + $0x400] sm:$0xff]
      %v301 = vld [vmem:[%s165 + $0x408] sm:$0xff]
      %v302 = vld [vmem:[%s165 + $0x410] sm:$0xff]
      %v303 = vld [vmem:[%s165 + $0x418] sm:$0xff]
      %v304 = vld [vmem:[%s165 + $0x420] sm:$0xff]
      %v305 = vld [vmem:[%s165 + $0x428] sm:$0xff]
      %v306 = vld [vmem:[%s165 + $0x430] sm:$0xff]
      %v307 = vld [vmem:[%s165 + $0x438] sm:$0xff]
      %v308 = vld [vmem:[%s165 + $0x440] sm:$0xff]
      %v309 = vld [vmem:[%s165 + $0x448] sm:$0xff]
      %v310 = vld [vmem:[%s165 + $0x450] sm:$0xff]
      %v311 = vld [vmem:[%s165 + $0x458] sm:$0xff]
      %v312 = vld [vmem:[%s165 + $0x460] sm:$0xff]
      %v313 = vld [vmem:[%s165 + $0x468] sm:$0xff]
      %v314 = vld [vmem:[%s165 + $0x470] sm:$0xff]
      %v315 = vld [vmem:[%s165 + $0x478] sm:$0xff]
      %v316 = vld [vmem:[%s165 + $0x480] sm:$0xff]
      %v317 = vld [vmem:[%s165 + $0x488] sm:$0xff]
      %v318 = vld [vmem:[%s165 + $0x490] sm:$0xff]
      %v319 = vld [vmem:[%s165 + $0x498] sm:$0xff]
      %v320 = vld [vmem:[%s165 + $0x4a0] sm:$0xff]
      %v321 = vld [vmem:[%s165 + $0x4a8] sm:$0xff]
      %v322 = vld [vmem:[%s165 + $0x4b0] sm:$0xff]
      %v323 = vld [vmem:[%s165 + $0x4b8] sm:$0xff]
      %v324 = vld [vmem:[%s165 + $0x4c0] sm:$0xff]
      %v325 = vld [vmem:[%s165 + $0x4c8] sm:$0xff]
      %v326 = vld [vmem:[%s165 + $0x4d0] sm:$0xff]
      %v327 = vld [vmem:[%s165 + $0x4d8] sm:$0xff]
      %v328 = vld [vmem:[%s165 + $0x4e0] sm:$0xff]
      %v329 = vld [vmem:[%s165 + $0x4e8] sm:$0xff]
      %v330 = vld [vmem:[%s165 + $0x4f0] sm:$0xff]
      %v331 = vld [vmem:[%s165 + $0x4f8] sm:$0xff]
      %v332 = vld [vmem:[%s165 + $0x500] sm:$0xff]
      %v333 = vld [vmem:[%s165 + $0x508] sm:$0xff]
      %v334 = vld [vmem:[%s165 + $0x510] sm:$0xff]
      %v335 = vld [vmem:[%s165 + $0x518] sm:$0xff]
      %v336 = vld [vmem:[%s165 + $0x520] sm:$0xff]
      %v337 = vld [vmem:[%s165 + $0x528] sm:$0xff]
      %v338 = vld [vmem:[%s165 + $0x530] sm:$0xff]
      %v339 = vld [vmem:[%s165 + $0x538] sm:$0xff]
      %v340 = vld [vmem:[%s165 + $0x540] sm:$0xff]
      %v341 = vld [vmem:[%s165 + $0x548] sm:$0xff]
      %v342 = vld [vmem:[%s165 + $0x550] sm:$0xff]
      %v343 = vld [vmem:[%s165 + $0x558] sm:$0xff]
      %v344 = vld [vmem:[%s165 + $0x560] sm:$0xff]
      %v345 = vld [vmem:[%s165 + $0x568] sm:$0xff]
      %v346 = vld [vmem:[%s165 + $0x570] sm:$0xff]
      %v347 = vld [vmem:[%s165 + $0x578] sm:$0xff]
      %v348 = vld [vmem:[%s165 + $0x580] sm:$0xff]
      %v349 = vld [vmem:[%s165 + $0x588] sm:$0xff]
      %v350 = vld [vmem:[%s165 + $0x590] sm:$0xff]
      %v351 = vld [vmem:[%s165 + $0x598] sm:$0xff]
      %v352 = vld [vmem:[%s165 + $0x5a0] sm:$0xff]
      %v353 = vld [vmem:[%s165 + $0x5a8] sm:$0xff]
      %v354 = vld [vmem:[%s165 + $0x5b0] sm:$0xff]
      %v355 = vld [vmem:[%s165 + $0x5b8] sm:$0xff]
      %v356 = vld [vmem:[%s165 + $0x5c0] sm:$0xff]
      %v357 = vld [vmem:[%s165 + $0x5c8] sm:$0xff]
      %v358 = vld [vmem:[%s165 + $0x5d0] sm:$0xff]
      %v359 = vld [vmem:[%s165 + $0x5d8] sm:$0xff]
      %v360 = vld [vmem:[%s165 + $0x5e0] sm:$0xff]
      %v361 = vld [vmem:[%s165 + $0x5e8] sm:$0xff]
      %v362 = vld [vmem:[%s165 + $0x5f0] sm:$0xff]
      %v363 = vld [vmem:[%s165 + $0x5f8] sm:$0xff]
      %v364 = vld [vmem:[%s165 + $0x600] sm:$0xff]
      %v365 = vld [vmem:[%s165 + $0x608] sm:$0xff]
      %v366 = vld [vmem:[%s165 + $0x610] sm:$0xff]
      %v367 = vld [vmem:[%s165 + $0x618] sm:$0xff]
      %v368 = vld [vmem:[%s165 + $0x620] sm:$0xff]
      %v369 = vld [vmem:[%s165 + $0x628] sm:$0xff]
      %v370 = vld [vmem:[%s165 + $0x630] sm:$0xff]
      %v371 = vld [vmem:[%s165 + $0x638] sm:$0xff]
      %v372 = vld [vmem:[%s165 + $0x640] sm:$0xff]
      %v373 = vld [vmem:[%s165 + $0x648] sm:$0xff]
      %v374 = vld [vmem:[%s165 + $0x650] sm:$0xff]
      %v375 = vld [vmem:[%s165 + $0x658] sm:$0xff]
      %v376 = vld [vmem:[%s165 + $0x660] sm:$0xff]
      %v377 = vld [vmem:[%s165 + $0x668] sm:$0xff]
      %v378 = vld [vmem:[%s165 + $0x670] sm:$0xff]
      %v379 = vld [vmem:[%s165 + $0x678] sm:$0xff]
      %v380 = vld [vmem:[%s165 + $0x680] sm:$0xff]
      %v381 = vld [vmem:[%s165 + $0x688] sm:$0xff]
      %v382 = vld [vmem:[%s165 + $0x690] sm:$0xff]
      %v383 = vld [vmem:[%s165 + $0x698] sm:$0xff]
      %v384 = vld [vmem:[%s165 + $0x6a0] sm:$0xff]
      %v385 = vld [vmem:[%s165 + $0x6a8] sm:$0xff]
      %v386 = vld [vmem:[%s165 + $0x6b0] sm:$0xff]
      %v387 = vld [vmem:[%s165 + $0x6b8] sm:$0xff]
      %v388 = vld [vmem:[%s165 + $0x6c0] sm:$0xff]
      %v389 = vld [vmem:[%s165 + $0x6c8] sm:$0xff]
      %v390 = vld [vmem:[%s165 + $0x6d0] sm:$0xff]
      %v391 = vld [vmem:[%s165 + $0x6d8] sm:$0xff]
      %v392 = vld [vmem:[%s165 + $0x6e0] sm:$0xff]
      %v393 = vld [vmem:[%s165 + $0x6e8] sm:$0xff]
      %v394 = vld [vmem:[%s165 + $0x6f0] sm:$0xff]
      %v395 = vld [vmem:[%s165 + $0x6f8] sm:$0xff]
      %v396 = vld [vmem:[%s165 + $0x700] sm:$0xff]
      %v397 = vld [vmem:[%s165 + $0x708] sm:$0xff]
      %v398 = vld [vmem:[%s165 + $0x710] sm:$0xff]
      %v399 = vld [vmem:[%s165 + $0x718] sm:$0xff]
      %v400 = vld [vmem:[%s165 + $0x720] sm:$0xff]
      %v401 = vld [vmem:[%s165 + $0x728] sm:$0xff]
      %v402 = vld [vmem:[%s165 + $0x730] sm:$0xff]
      %v403 = vld [vmem:[%s165 + $0x738] sm:$0xff]
      %v404 = vld [vmem:[%s165 + $0x740] sm:$0xff]
      %v405 = vld [vmem:[%s165 + $0x748] sm:$0xff]
      %v406 = vld [vmem:[%s165 + $0x750] sm:$0xff]
      %v407 = vld [vmem:[%s165 + $0x758] sm:$0xff]
      %v408 = vld [vmem:[%s165 + $0x760] sm:$0xff]
      %v409 = vld [vmem:[%s165 + $0x768] sm:$0xff]
      %v410 = vld [vmem:[%s165 + $0x770] sm:$0xff]
      %v411 = vld [vmem:[%s165 + $0x778] sm:$0xff]
      %v412 = vld [vmem:[%s165 + $0x780] sm:$0xff]
      %v413 = vld [vmem:[%s165 + $0x788] sm:$0xff]
      %v414 = vld [vmem:[%s165 + $0x790] sm:$0xff]
      %v415 = vld [vmem:[%s165 + $0x798] sm:$0xff]
      %v416 = vld [vmem:[%s165 + $0x7a0] sm:$0xff]
      %v417 = vld [vmem:[%s165 + $0x7a8] sm:$0xff]
      %v418 = vld [vmem:[%s165 + $0x7b0] sm:$0xff]
      %v419 = vld [vmem:[%s165 + $0x7b8] sm:$0xff]
      %v420 = vld [vmem:[%s165 + $0x7c0] sm:$0xff]
      %v421 = vld [vmem:[%s165 + $0x7c8] sm:$0xff]
      %v422 = vld [vmem:[%s165 + $0x7d0] sm:$0xff]
      %v423 = vld [vmem:[%s165 + $0x7d8] sm:$0xff]
      %v424 = vld [vmem:[%s165 + $0x7e0] sm:$0xff]
      %v425 = vld [vmem:[%s165 + $0x7e8] sm:$0xff]
      %v426 = vld [vmem:[%s165 + $0x7f0] sm:$0xff]
      %v427 = vld [vmem:[%s165 + $0x7f8] sm:$0xff]
      %v428 = vld [vmem:[%s1] sm:$0xff]
      %v429 = vld [vmem:[%s1 + $0x8] sm:$0xff]
      %v430 = vld [vmem:[%s1 + $0x10] sm:$0xff]
      %v431 = vld [vmem:[%s1 + $0x18] sm:$0xff]
      %v432 = vld [vmem:[%s1 + $0x20] sm:$0xf]
      %vm433 = vcmask 293888
      %v435 = vsel %vm433, %v172, 0
      %v438 = vsel %vm433, %v173, 0
      %v441 = vsel %vm433, %v174, 0
      %v444 = vsel %vm433, %v175, 0
      %v447 = vsel %vm433, %v176, 0
      %v450 = vsel %vm433, %v177, 0
      %v453 = vsel %vm433, %v178, 0
      %v456 = vsel %vm433, %v179, 0
      %v459 = vsel %vm433, %v180, 0
      %v462 = vsel %vm433, %v181, 0
      %v465 = vsel %vm433, %v182, 0
      %v468 = vsel %vm433, %v183, 0
      %v471 = vsel %vm433, %v184, 0
      %v474 = vsel %vm433, %v185, 0
      %v477 = vsel %vm433, %v186, 0
      %v480 = vsel %vm433, %v187, 0
      %v483 = vsel %vm433, %v188, 0
      %v486 = vsel %vm433, %v189, 0
      %v489 = vsel %vm433, %v190, 0
      %v492 = vsel %vm433, %v191, 0
      %v495 = vsel %vm433, %v192, 0
      %v498 = vsel %vm433, %v193, 0
      %v501 = vsel %vm433, %v194, 0
      %v504 = vsel %vm433, %v195, 0
      %v507 = vsel %vm433, %v196, 0
      %v510 = vsel %vm433, %v197, 0
      %v513 = vsel %vm433, %v198, 0
      %v516 = vsel %vm433, %v199, 0
      %v519 = vsel %vm433, %v200, 0
      %v522 = vsel %vm433, %v201, 0
      %v525 = vsel %vm433, %v202, 0
      %v528 = vsel %vm433, %v203, 0
      %v531 = vsel %vm433, %v204, 0
      %v534 = vsel %vm433, %v205, 0
      %v537 = vsel %vm433, %v206, 0
      %v540 = vsel %vm433, %v207, 0
      %v543 = vsel %vm433, %v208, 0
      %v546 = vsel %vm433, %v209, 0
      %v549 = vsel %vm433, %v210, 0
      %v552 = vsel %vm433, %v211, 0
      %v555 = vsel %vm433, %v212, 0
      %v558 = vsel %vm433, %v213, 0
      %v561 = vsel %vm433, %v214, 0
      %v564 = vsel %vm433, %v215, 0
      %v567 = vsel %vm433, %v216, 0
      %v570 = vsel %vm433, %v217, 0
      %v573 = vsel %vm433, %v218, 0
      %v576 = vsel %vm433, %v219, 0
      %v579 = vsel %vm433, %v220, 0
      %v582 = vsel %vm433, %v221, 0
      %v585 = vsel %vm433, %v222, 0
      %v588 = vsel %vm433, %v223, 0
      %v591 = vsel %vm433, %v224, 0
      %v594 = vsel %vm433, %v225, 0
      %v597 = vsel %vm433, %v226, 0
      %v600 = vsel %vm433, %v227, 0
      %v603 = vsel %vm433, %v228, 0
      %v606 = vsel %vm433, %v229, 0
      %v609 = vsel %vm433, %v230, 0
      %v612 = vsel %vm433, %v231, 0
      %v615 = vsel %vm433, %v232, 0
      %v618 = vsel %vm433, %v233, 0
      %v621 = vsel %vm433, %v234, 0
      %v624 = vsel %vm433, %v235, 0
      %v627 = vsel %vm433, %v236, 0
      %v630 = vsel %vm433, %v237, 0
      %v633 = vsel %vm433, %v238, 0
      %v636 = vsel %vm433, %v239, 0
      %v639 = vsel %vm433, %v240, 0
      %v642 = vsel %vm433, %v241, 0
      %v645 = vsel %vm433, %v242, 0
      %v648 = vsel %vm433, %v243, 0
      %v651 = vsel %vm433, %v244, 0
      %v654 = vsel %vm433, %v245, 0
      %v657 = vsel %vm433, %v246, 0
      %v660 = vsel %vm433, %v247, 0
      %v663 = vsel %vm433, %v248, 0
      %v666 = vsel %vm433, %v249, 0
      %v669 = vsel %vm433, %v250, 0
      %v672 = vsel %vm433, %v251, 0
      %v675 = vsel %vm433, %v252, 0
      %v678 = vsel %vm433, %v253, 0
      %v681 = vsel %vm433, %v254, 0
      %v684 = vsel %vm433, %v255, 0
      %v687 = vsel %vm433, %v256, 0
      %v690 = vsel %vm433, %v257, 0
      %v693 = vsel %vm433, %v258, 0
      %v696 = vsel %vm433, %v259, 0
      %v699 = vsel %vm433, %v260, 0
      %v702 = vsel %vm433, %v261, 0
      %v705 = vsel %vm433, %v262, 0
      %v708 = vsel %vm433, %v263, 0
      %v711 = vsel %vm433, %v264, 0
      %v714 = vsel %vm433, %v265, 0
      %v717 = vsel %vm433, %v266, 0
      %v720 = vsel %vm433, %v267, 0
      %v723 = vsel %vm433, %v268, 0
      %v726 = vsel %vm433, %v269, 0
      %v729 = vsel %vm433, %v270, 0
      %v732 = vsel %vm433, %v271, 0
      %v735 = vsel %vm433, %v272, 0
      %v738 = vsel %vm433, %v273, 0
      %v741 = vsel %vm433, %v274, 0
      %v744 = vsel %vm433, %v275, 0
      %v747 = vsel %vm433, %v276, 0
      %v750 = vsel %vm433, %v277, 0
      %v753 = vsel %vm433, %v278, 0
      %v756 = vsel %vm433, %v279, 0
      %v759 = vsel %vm433, %v280, 0
      %v762 = vsel %vm433, %v281, 0
      %v765 = vsel %vm433, %v282, 0
      %v768 = vsel %vm433, %v283, 0
      %v771 = vsel %vm433, %v284, 0
      %v774 = vsel %vm433, %v285, 0
      %v777 = vsel %vm433, %v286, 0
      %v780 = vsel %vm433, %v287, 0
      %v783 = vsel %vm433, %v288, 0
      %v786 = vsel %vm433, %v289, 0
      %v789 = vsel %vm433, %v290, 0
      %v792 = vsel %vm433, %v291, 0
      %v795 = vsel %vm433, %v292, 0
      %v798 = vsel %vm433, %v293, 0
      %v801 = vsel %vm433, %v294, 0
      %v804 = vsel %vm433, %v295, 0
      %v807 = vsel %vm433, %v296, 0
      %v810 = vsel %vm433, %v297, 0
      %v813 = vsel %vm433, %v298, 0
      %v816 = vsel %vm433, %v299, 0
      %v819 = vsel %vm433, %v300, 0
      %v822 = vsel %vm433, %v301, 0
      %v825 = vsel %vm433, %v302, 0
      %v828 = vsel %vm433, %v303, 0
      %v831 = vsel %vm433, %v304, 0
      %v834 = vsel %vm433, %v305, 0
      %v837 = vsel %vm433, %v306, 0
      %v840 = vsel %vm433, %v307, 0
      %v843 = vsel %vm433, %v308, 0
      %v846 = vsel %vm433, %v309, 0
      %v849 = vsel %vm433, %v310, 0
      %v852 = vsel %vm433, %v311, 0
      %v855 = vsel %vm433, %v312, 0
      %v858 = vsel %vm433, %v313, 0
      %v861 = vsel %vm433, %v314, 0
      %v864 = vsel %vm433, %v315, 0
      %v867 = vsel %vm433, %v316, 0
      %v870 = vsel %vm433, %v317, 0
      %v873 = vsel %vm433, %v318, 0
      %v876 = vsel %vm433, %v319, 0
      %v879 = vsel %vm433, %v320, 0
      %v882 = vsel %vm433, %v321, 0
      %v885 = vsel %vm433, %v322, 0
      %v888 = vsel %vm433, %v323, 0
      %v891 = vsel %vm433, %v324, 0
      %v894 = vsel %vm433, %v325, 0
      %v897 = vsel %vm433, %v326, 0
      %v900 = vsel %vm433, %v327, 0
      %v903 = vsel %vm433, %v328, 0
      %v906 = vsel %vm433, %v329, 0
      %v909 = vsel %vm433, %v330, 0
      %v912 = vsel %vm433, %v331, 0
      %v915 = vsel %vm433, %v332, 0
      %v918 = vsel %vm433, %v333, 0
      %v921 = vsel %vm433, %v334, 0
      %v924 = vsel %vm433, %v335, 0
      %v927 = vsel %vm433, %v336, 0
      %v930 = vsel %vm433, %v337, 0
      %v933 = vsel %vm433, %v338, 0
      %v936 = vsel %vm433, %v339, 0
      %v939 = vsel %vm433, %v340, 0
      %v942 = vsel %vm433, %v341, 0
      %v945 = vsel %vm433, %v342, 0
      %v948 = vsel %vm433, %v343, 0
      %v951 = vsel %vm433, %v344, 0
      %v954 = vsel %vm433, %v345, 0
      %v957 = vsel %vm433, %v346, 0
      %v960 = vsel %vm433, %v347, 0
      %v963 = vsel %vm433, %v348, 0
      %v966 = vsel %vm433, %v349, 0
      %v969 = vsel %vm433, %v350, 0
      %v972 = vsel %vm433, %v351, 0
      %v975 = vsel %vm433, %v352, 0
      %v978 = vsel %vm433, %v353, 0
      %v981 = vsel %vm433, %v354, 0
      %v984 = vsel %vm433, %v355, 0
      %v987 = vsel %vm433, %v356, 0
      %v990 = vsel %vm433, %v357, 0
      %v993 = vsel %vm433, %v358, 0
      %v996 = vsel %vm433, %v359, 0
      %v999 = vsel %vm433, %v360, 0
      %v1002 = vsel %vm433, %v361, 0
      %v1005 = vsel %vm433, %v362, 0
      %v1008 = vsel %vm433, %v363, 0
      %v1011 = vsel %vm433, %v364, 0
      %v1014 = vsel %vm433, %v365, 0
      %v1017 = vsel %vm433, %v366, 0
      %v1020 = vsel %vm433, %v367, 0
      %v1023 = vsel %vm433, %v368, 0
      %v1026 = vsel %vm433, %v369, 0
      %v1029 = vsel %vm433, %v370, 0
      %v1032 = vsel %vm433, %v371, 0
      %v1035 = vsel %vm433, %v372, 0
      %v1038 = vsel %vm433, %v373, 0
      %v1041 = vsel %vm433, %v374, 0
      %v1044 = vsel %vm433, %v375, 0
      %v1047 = vsel %vm433, %v376, 0
      %v1050 = vsel %vm433, %v377, 0
      %v1053 = vsel %vm433, %v378, 0
      %v1056 = vsel %vm433, %v379, 0
      %v1059 = vsel %vm433, %v380, 0
      %v1062 = vsel %vm433, %v381, 0
      %v1065 = vsel %vm433, %v382, 0
      %v1068 = vsel %vm433, %v383, 0
      %v1071 = vsel %vm433, %v384, 0
      %v1074 = vsel %vm433, %v385, 0
      %v1077 = vsel %vm433, %v386, 0
      %v1080 = vsel %vm433, %v387, 0
      %v1083 = vsel %vm433, %v388, 0
      %v1086 = vsel %vm433, %v389, 0
      %v1089 = vsel %vm433, %v390, 0
      %v1092 = vsel %vm433, %v391, 0
      %v1095 = vsel %vm433, %v392, 0
      %v1098 = vsel %vm433, %v393, 0
      %v1101 = vsel %vm433, %v394, 0
      %v1104 = vsel %vm433, %v395, 0
      %v1107 = vsel %vm433, %v396, 0
      %v1110 = vsel %vm433, %v397, 0
      %v1113 = vsel %vm433, %v398, 0
      %v1116 = vsel %vm433, %v399, 0
      %v1119 = vsel %vm433, %v400, 0
      %v1122 = vsel %vm433, %v401, 0
      %v1125 = vsel %vm433, %v402, 0
      %v1128 = vsel %vm433, %v403, 0
      %v1131 = vsel %vm433, %v404, 0
      %v1134 = vsel %vm433, %v405, 0
      %v1137 = vsel %vm433, %v406, 0
      %v1140 = vsel %vm433, %v407, 0
      %v1143 = vsel %vm433, %v408, 0
      %v1146 = vsel %vm433, %v409, 0
      %v1149 = vsel %vm433, %v410, 0
      %v1152 = vsel %vm433, %v411, 0
      %v1155 = vsel %vm433, %v412, 0
      %v1158 = vsel %vm433, %v413, 0
      %v1161 = vsel %vm433, %v414, 0
      %v1164 = vsel %vm433, %v415, 0
      %v1167 = vsel %vm433, %v416, 0
      %v1170 = vsel %vm433, %v417, 0
      %v1173 = vsel %vm433, %v418, 0
      %v1176 = vsel %vm433, %v419, 0
      %v1179 = vsel %vm433, %v420, 0
      %v1182 = vsel %vm433, %v421, 0
      %v1185 = vsel %vm433, %v422, 0
      %v1188 = vsel %vm433, %v423, 0
      %v1191 = vsel %vm433, %v424, 0
      %v1194 = vsel %vm433, %v425, 0
      %v1197 = vsel %vm433, %v426, 0
      %v1200 = vsel %vm433, %v427, 0
      %vm1202 = vcmask 1043456
      %v1204 = vsel %vm1202, %v432, 0
      %1206 = vmatprep.subr.mxu0 0.0
      %1207 = vmatpush1.msra.mxu0 %v428
      %1208 = vmatprep.subr.mxu0 0.0
      %1209 = vmatpush1.msra.mxu0 %v429
      %1210 = vmatprep.subr.mxu0 0.0
      %1211 = vmatpush1.msra.mxu0 %v430
      %1212 = vmatprep.subr.mxu0 0.0
      %1213 = vmatpush1.msra.mxu0 %v431
      %1214 = vmatprep.subr.mxu0 0.0
      %1215 = vmatpush1.msra.mxu0 %v1204
      %1216 = vmatprep.subr.mxu0 0.0
      %1217 = vmatpush1.msra.mxu0 0.0
      %1218 = vmatprep.subr.mxu0 0.0
      %1219 = vmatpush1.msra.mxu0 0.0
      %1220 = vmatprep.subr.mxu0 0.0
      %1221 = vmatpush1.msra.mxu0 0.0
      %1222 = vmatprep.subr.mxu0 0.0
      %1223 = vmatpush1.msra.mxu0 0.0
      %1224 = vmatprep.subr.mxu0 0.0
      %1225 = vmatpush1.msra.mxu0 0.0
      %1226 = vmatprep.subr.mxu0 0.0
      %1227 = vmatpush1.msra.mxu0 0.0
      %1228 = vmatprep.subr.mxu0 0.0
      %1229 = vmatpush1.msra.mxu0 0.0
      %1230 = vmatprep.subr.mxu0 0.0
      %1231 = vmatpush1.msra.mxu0 0.0
      %1232 = vmatprep.subr.mxu0 0.0
      %1233 = vmatpush1.msra.mxu0 0.0
      %1234 = vmatprep.subr.mxu0 0.0
      %1235 = vmatpush1.msra.mxu0 0.0
      %1236 = vmatprep.subr.mxu0 0.0
      %1237 = vmatpush1.msra.mxu0 0.0
      %1238 = vmatprep.subr.mxu0 0.0
      %1239 = vmatpush1.msra.mxu0 0.0
      %1240 = vmatprep.subr.mxu0 0.0
      %1241 = vmatpush1.msra.mxu0 0.0
      %1242 = vmatprep.subr.mxu0 0.0
      %1243 = vmatpush1.msra.mxu0 0.0
      %1244 = vmatprep.subr.mxu0 0.0
      %1245 = vmatpush1.msra.mxu0 0.0
      %1246 = vmatprep.subr.mxu0 0.0
      %1247 = vmatpush1.msra.mxu0 0.0
      %1248 = vmatprep.subr.mxu0 0.0
      %1249 = vmatpush1.msra.mxu0 0.0
      %1250 = vmatprep.subr.mxu0 0.0
      %1251 = vmatpush1.msra.mxu0 0.0
      %1252 = vmatprep.subr.mxu0 0.0
      %1253 = vmatpush1.msra.mxu0 0.0
      %1254 = vmatprep.subr.mxu0 0.0
      %1255 = vmatpush1.msra.mxu0 0.0
      %1256 = vmatprep.subr.mxu0 0.0
      %1257 = vmatpush1.msra.mxu0 0.0
      %1258 = vmatprep.subr.mxu0 0.0
      %1259 = vmatpush1.msra.mxu0 0.0
      %1260 = vmatprep.subr.mxu0 0.0
      %1261 = vmatpush1.msra.mxu0 0.0
      %1262 = vmatprep.subr.mxu0 0.0
      %1263 = vmatpush1.msra.mxu0 0.0
      %1264 = vmatprep.subr.mxu0 0.0
      %1265 = vmatpush1.msra.mxu0 0.0
      %1266 = vmatprep.subr.mxu0 0.0
      %1267 = vmatpush1.msra.mxu0 0.0
      %1268 = vmatprep.subr.mxu0 0.0
      %1269 = vmatpush1.msra.mxu0 0.0
      %1270 = vmatprep.mubr.f32.mxu0 0.0
      %1271 = vmatmul.mubr.f32.gmra.mrb[0].mxu0 %v435
      %v1272 = vpop.f32.mrb[0].mxu0
      %v1273 = vadd.f32 0.0, %v1272
      %v1274 = vpop.f32.mrb[0].mxu0
      %1275 = vmatprep.mubr.f32.mxu0 0.0
      %1276 = vmatmul.mubr.f32.gmra.mrb[0].mxu0 %v438
      %v1277 = vpop.f32.mrb[0].mxu0
      %v1278 = vadd.f32 0.0, %v1277
      %v1279 = vpop.f32.mrb[0].mxu0
      %1280 = vmatprep.mubr.f32.mxu0 0.0
      %1281 = vmatmul.mubr.f32.gmra.mrb[0].mxu0 %v441
      %v1282 = vpop.f32.mrb[0].mxu0
      %v1283 = vadd.f32 0.0, %v1282
      %v1284 = vpop.f32.mrb[0].mxu0
      %1285 = vmatprep.mubr.f32.mxu0 0.0
      %1286 = vmatmul.mubr.f32.gmra.mrb[0].mxu0 %v444
      %v1287 = vpop.f32.mrb[0].mxu0
      %v1288 = vadd.f32 0.0, %v1287
      %v1289 = vpop.f32.mrb[0].mxu0
      %1290 = vmatprep.mubr.f32.mxu0 0.0
      %1291 = vmatmul.mubr.f32.gmra.mrb[0].mxu0 %v447
      %v1292 = vpop.f32.mrb[0].mxu0
      %v1293 = vadd.f32 0.0, %v1292
      %v1294 = vpop.f32.mrb[0].mxu0
      %1295 = vmatprep.mubr.f32.mxu0 0.0
      %1296 = vmatmul.mubr.f32.gmra.mrb[0].mxu0 %v450
      %v1297 = vpop.f32.mrb[0].mxu0
      %v1298 = vadd.f32 0.0, %v1297
      %v1299 = vpop.f32.mrb[0].mxu0
      %1300 = vmatprep.mubr.f32.mxu0 0.0
      %1301 = vmatmul.mubr.f32.gmra.mrb[0].mxu0 %v453
      %v1302 = vpop.f32.mrb[0].mxu0
      %v1303 = vadd.f32 0.0, %v1302
      %v1304 = vpop.f32.mrb[0].mxu0
      %1305 = vmatprep.mubr.f32.mxu0 0.0
      %1306 = vmatmul.mubr.f32.gmra.mrb[0].mxu0 %v456
      %v1307 = vpop.f32.mrb[0].mxu0
      %v1308 = vadd.f32 0.0, %v1307
      %v1309 = vpop.f32.mrb[0].mxu0
      %1310 = vmatprep.mubr.f32.mxu0 0.0
      %1311 = vmatmul.mubr.f32.gmra.mrb[0].mxu0 %v459
      %v1312 = vpop.f32.mrb[0].mxu0
      %v1313 = vadd.f32 0.0, %v1312
      %v1314 = vpop.f32.mrb[0].mxu0
      %1315 = vmatprep.mubr.f32.mxu0 0.0
      %1316 = vmatmul.mubr.f32.gmra.mrb[0].mxu0 %v462
      %v1317 = vpop.f32.mrb[0].mxu0
      %v1318 = vadd.f32 0.0, %v1317
      %v1319 = vpop.f32.mrb[0].mxu0
      %1320 = vmatprep.mubr.f32.mxu0 0.0
      %1321 = vmatmul.mubr.f32.gmra.mrb[0].mxu0 %v465
      %v1322 = vpop.f32.mrb[0].mxu0
      %v1323 = vadd.f32 0.0, %v1322
      %v1324 = vpop.f32.mrb[0].mxu0
      %1325 = vmatprep.mubr.f32.mxu0 0.0
      %1326 = vmatmul.mubr.f32.gmra.mrb[0].mxu0 %v468
      %v1327 = vpop.f32.mrb[0].mxu0
      %v1328 = vadd.f32 0.0, %v1327
      %v1329 = vpop.f32.mrb[0].mxu0
      %1330 = vmatprep.mubr.f32.mxu0 0.0
      %1331 = vmatmul.mubr.f32.gmra.mrb[0].mxu0 %v471
      %v1332 = vpop.f32.mrb[0].mxu0
      %v1333 = vadd.f32 0.0, %v1332
      %v1334 = vpop.f32.mrb[0].mxu0
      %1335 = vmatprep.mubr.f32.mxu0 0.0
      %1336 = vmatmul.mubr.f32.gmra.mrb[0].mxu0 %v474
      %v1337 = vpop.f32.mrb[0].mxu0
      %v1338 = vadd.f32 0.0, %v1337
      %v1339 = vpop.f32.mrb[0].mxu0
      %1340 = vmatprep.mubr.f32.mxu0 0.0
      %1341 = vmatmul.mubr.f32.gmra.mrb[0].mxu0 %v477
      %v1342 = vpop.f32.mrb[0].mxu0
      %v1343 = vadd.f32 0.0, %v1342
      %v1344 = vpop.f32.mrb[0].mxu0
      %1345 = vmatprep.mubr.f32.mxu0 0.0
      %1346 = vmatmul.mubr.f32.gmra.mrb[0].mxu0 %v480
      %v1347 = vpop.f32.mrb[0].mxu0
      %v1348 = vadd.f32 0.0, %v1347
      %v1349 = vpop.f32.mrb[0].mxu0
      %1350 = vmatprep.mubr.f32.mxu0 0.0
      %1351 = vmatmul.mubr.f32.gmra.mrb[0].mxu0 %v483
      %v1352 = vpop.f32.mrb[0].mxu0
      %v1353 = vadd.f32 0.0, %v1352
      %v1354 = vpop.f32.mrb[0].mxu0
      %1355 = vmatprep.mubr.f32.mxu0 0.0
      %1356 = vmatmul.mubr.f32.gmra.mrb[0].mxu0 %v486
      %v1357 = vpop.f32.mrb[0].mxu0
      %v1358 = vadd.f32 0.0, %v1357
      %v1359 = vpop.f32.mrb[0].mxu0
      %1360 = vmatprep.mubr.f32.mxu0 0.0
      %1361 = vmatmul.mubr.f32.gmra.mrb[0].mxu0 %v489
      %v1362 = vpop.f32.mrb[0].mxu0
      %v1363 = vadd.f32 0.0, %v1362
      %v1364 = vpop.f32.mrb[0].mxu0
      %1365 = vmatprep.mubr.f32.mxu0 0.0
      %1366 = vmatmul.mubr.f32.gmra.mrb[0].mxu0 %v492
      %v1367 = vpop.f32.mrb[0].mxu0
      %v1368 = vadd.f32 0.0, %v1367
      %v1369 = vpop.f32.mrb[0].mxu0
      %1370 = vmatprep.mubr.f32.mxu0 0.0
      %1371 = vmatmul.mubr.f32.gmra.mrb[0].mxu0 %v495
      %v1372 = vpop.f32.mrb[0].mxu0
      %v1373 = vadd.f32 0.0, %v1372
      %v1374 = vpop.f32.mrb[0].mxu0
      %1375 = vmatprep.mubr.f32.mxu0 0.0
      %1376 = vmatmul.mubr.f32.gmra.mrb[0].mxu0 %v498
      %v1377 = vpop.f32.mrb[0].mxu0
      %v1378 = vadd.f32 0.0, %v1377
      %v1379 = vpop.f32.mrb[0].mxu0
      %1380 = vmatprep.mubr.f32.mxu0 0.0
      %1381 = vmatmul.mubr.f32.gmra.mrb[0].mxu0 %v501
      %v1382 = vpop.f32.mrb[0].mxu0
      %v1383 = vadd.f32 0.0, %v1382
      %v1384 = vpop.f32.mrb[0].mxu0
      %1385 = vmatprep.mubr.f32.mxu0 0.0
      %1386 = vmatmul.mubr.f32.gmra.mrb[0].mxu0 %v504
      %v1387 = vpop.f32.mrb[0].mxu0
      %v1388 = vadd.f32 0.0, %v1387
      %v1389 = vpop.f32.mrb[0].mxu0
      %1390 = vmatprep.mubr.f32.mxu0 0.0
      %1391 = vmatmul.mubr.f32.gmra.mrb[0].mxu0 %v507
      %v1392 = vpop.f32.mrb[0].mxu0
      %v1393 = vadd.f32 0.0, %v1392
      %v1394 = vpop.f32.mrb[0].mxu0
      %1395 = vmatprep.mubr.f32.mxu0 0.0
      %1396 = vmatmul.mubr.f32.gmra.mrb[0].mxu0 %v510
      %v1397 = vpop.f32.mrb[0].mxu0
      %v1398 = vadd.f32 0.0, %v1397
      %v1399 = vpop.f32.mrb[0].mxu0
      %1400 = vmatprep.mubr.f32.mxu0 0.0
      %1401 = vmatmul.mubr.f32.gmra.mrb[0].mxu0 %v513
      %v1402 = vpop.f32.mrb[0].mxu0
      %v1403 = vadd.f32 0.0, %v1402
      %v1404 = vpop.f32.mrb[0].mxu0
      %1405 = vmatprep.mubr.f32.mxu0 0.0
      %1406 = vmatmul.mubr.f32.gmra.mrb[0].mxu0 %v516
      %v1407 = vpop.f32.mrb[0].mxu0
      %v1408 = vadd.f32 0.0, %v1407
      %v1409 = vpop.f32.mrb[0].mxu0
      %1410 = vmatprep.mubr.f32.mxu0 0.0
      %1411 = vmatmul.mubr.f32.gmra.mrb[0].mxu0 %v519
      %v1412 = vpop.f32.mrb[0].mxu0
      %v1413 = vadd.f32 0.0, %v1412
      %v1414 = vpop.f32.mrb[0].mxu0
      %1415 = vmatprep.mubr.f32.mxu0 0.0
      %1416 = vmatmul.mubr.f32.gmra.mrb[0].mxu0 %v522
      %v1417 = vpop.f32.mrb[0].mxu0
      %v1418 = vadd.f32 0.0, %v1417
      %v1419 = vpop.f32.mrb[0].mxu0
      %1420 = vmatprep.mubr.f32.mxu0 0.0
      %1421 = vmatmul.mubr.f32.gmra.mrb[0].mxu0 %v525
      %v1422 = vpop.f32.mrb[0].mxu0
      %v1423 = vadd.f32 0.0, %v1422
      %v1424 = vpop.f32.mrb[0].mxu0
      %1425 = vmatprep.mubr.f32.mxu0 0.0
      %1426 = vmatmul.mubr.f32.gmra.mrb[0].mxu0 %v528
      %v1427 = vpop.f32.mrb[0].mxu0
      %v1428 = vadd.f32 0.0, %v1427
      %v1429 = vpop.f32.mrb[0].mxu0
      %1430 = vmatprep.mubr.f32.mxu0 0.0
      %1431 = vmatmul.mubr.f32.gmra.mrb[0].mxu0 %v531
      %v1432 = vpop.f32.mrb[0].mxu0
      %v1433 = vadd.f32 0.0, %v1432
      %v1434 = vpop.f32.mrb[0].mxu0
      %1435 = vmatprep.mubr.f32.mxu0 0.0
      %1436 = vmatmul.mubr.f32.gmra.mrb[0].mxu0 %v534
      %v1437 = vpop.f32.mrb[0].mxu0
      %v1438 = vadd.f32 0.0, %v1437
      %v1439 = vpop.f32.mrb[0].mxu0
      %1440 = vmatprep.mubr.f32.mxu0 0.0
      %1441 = vmatmul.mubr.f32.gmra.mrb[0].mxu0 %v537
      %v1442 = vpop.f32.mrb[0].mxu0
      %v1443 = vadd.f32 0.0, %v1442
      %v1444 = vpop.f32.mrb[0].mxu0
      %1445 = vmatprep.mubr.f32.mxu0 0.0
      %1446 = vmatmul.mubr.f32.gmra.mrb[0].mxu0 %v540
      %v1447 = vpop.f32.mrb[0].mxu0
      %v1448 = vadd.f32 0.0, %v1447
      %v1449 = vpop.f32.mrb[0].mxu0
      %1450 = vmatprep.mubr.f32.mxu0 0.0
      %1451 = vmatmul.mubr.f32.gmra.mrb[0].mxu0 %v543
      %v1452 = vpop.f32.mrb[0].mxu0
      %v1453 = vadd.f32 0.0, %v1452
      %v1454 = vpop.f32.mrb[0].mxu0
      %1455 = vmatprep.mubr.f32.mxu0 0.0
      %1456 = vmatmul.mubr.f32.gmra.mrb[0].mxu0 %v546
      %v1457 = vpop.f32.mrb[0].mxu0
      %v1458 = vadd.f32 0.0, %v1457
      %v1459 = vpop.f32.mrb[0].mxu0
      %1460 = vmatprep.mubr.f32.mxu0 0.0
      %1461 = vmatmul.mubr.f32.gmra.mrb[0].mxu0 %v549
      %v1462 = vpop.f32.mrb[0].mxu0
      %v1463 = vadd.f32 0.0, %v1462
      %v1464 = vpop.f32.mrb[0].mxu0
      %1465 = vmatprep.mubr.f32.mxu0 0.0
      %1466 = vmatmul.mubr.f32.gmra.mrb[0].mxu0 %v552
      %v1467 = vpop.f32.mrb[0].mxu0
      %v1468 = vadd.f32 0.0, %v1467
      %v1469 = vpop.f32.mrb[0].mxu0
      %1470 = vmatprep.mubr.f32.mxu0 0.0
      %1471 = vmatmul.mubr.f32.gmra.mrb[0].mxu0 %v555
      %v1472 = vpop.f32.mrb[0].mxu0
      %v1473 = vadd.f32 0.0, %v1472
      %v1474 = vpop.f32.mrb[0].mxu0
      %1475 = vmatprep.mubr.f32.mxu0 0.0
      %1476 = vmatmul.mubr.f32.gmra.mrb[0].mxu0 %v558
      %v1477 = vpop.f32.mrb[0].mxu0
      %v1478 = vadd.f32 0.0, %v1477
      %v1479 = vpop.f32.mrb[0].mxu0
      %1480 = vmatprep.mubr.f32.mxu0 0.0
      %1481 = vmatmul.mubr.f32.gmra.mrb[0].mxu0 %v561
      %v1482 = vpop.f32.mrb[0].mxu0
      %v1483 = vadd.f32 0.0, %v1482
      %v1484 = vpop.f32.mrb[0].mxu0
      %1485 = vmatprep.mubr.f32.mxu0 0.0
      %1486 = vmatmul.mubr.f32.gmra.mrb[0].mxu0 %v564
      %v1487 = vpop.f32.mrb[0].mxu0
      %v1488 = vadd.f32 0.0, %v1487
      %v1489 = vpop.f32.mrb[0].mxu0
      %1490 = vmatprep.mubr.f32.mxu0 0.0
      %1491 = vmatmul.mubr.f32.gmra.mrb[0].mxu0 %v567
      %v1492 = vpop.f32.mrb[0].mxu0
      %v1493 = vadd.f32 0.0, %v1492
      %v1494 = vpop.f32.mrb[0].mxu0
      %1495 = vmatprep.mubr.f32.mxu0 0.0
      %1496 = vmatmul.mubr.f32.gmra.mrb[0].mxu0 %v570
      %v1497 = vpop.f32.mrb[0].mxu0
      %v1498 = vadd.f32 0.0, %v1497
      %v1499 = vpop.f32.mrb[0].mxu0
      %1500 = vmatprep.mubr.f32.mxu0 0.0
      %1501 = vmatmul.mubr.f32.gmra.mrb[0].mxu0 %v573
      %v1502 = vpop.f32.mrb[0].mxu0
      %v1503 = vadd.f32 0.0, %v1502
      %v1504 = vpop.f32.mrb[0].mxu0
      %1505 = vmatprep.mubr.f32.mxu0 0.0
      %1506 = vmatmul.mubr.f32.gmra.mrb[0].mxu0 %v576
      %v1507 = vpop.f32.mrb[0].mxu0
      %v1508 = vadd.f32 0.0, %v1507
      %v1509 = vpop.f32.mrb[0].mxu0
      %1510 = vmatprep.mubr.f32.mxu0 0.0
      %1511 = vmatmul.mubr.f32.gmra.mrb[0].mxu0 %v579
      %v1512 = vpop.f32.mrb[0].mxu0
      %v1513 = vadd.f32 0.0, %v1512
      %v1514 = vpop.f32.mrb[0].mxu0
      %1515 = vmatprep.mubr.f32.mxu0 0.0
      %1516 = vmatmul.mubr.f32.gmra.mrb[0].mxu0 %v582
      %v1517 = vpop.f32.mrb[0].mxu0
      %v1518 = vadd.f32 0.0, %v1517
      %v1519 = vpop.f32.mrb[0].mxu0
      %1520 = vmatprep.mubr.f32.mxu0 0.0
      %1521 = vmatmul.mubr.f32.gmra.mrb[0].mxu0 %v585
      %v1522 = vpop.f32.mrb[0].mxu0
      %v1523 = vadd.f32 0.0, %v1522
      %v1524 = vpop.f32.mrb[0].mxu0
      %1525 = vmatprep.mubr.f32.mxu0 0.0
      %1526 = vmatmul.mubr.f32.gmra.mrb[0].mxu0 %v588
      %v1527 = vpop.f32.mrb[0].mxu0
      %v1528 = vadd.f32 0.0, %v1527
      %v1529 = vpop.f32.mrb[0].mxu0
      %1530 = vmatprep.mubr.f32.mxu0 0.0
      %1531 = vmatmul.mubr.f32.gmra.mrb[0].mxu0 %v591
      %v1532 = vpop.f32.mrb[0].mxu0
      %v1533 = vadd.f32 0.0, %v1532
      %v1534 = vpop.f32.mrb[0].mxu0
      %1535 = vmatprep.mubr.f32.mxu0 0.0
      %1536 = vmatmul.mubr.f32.gmra.mrb[0].mxu0 %v594
      %v1537 = vpop.f32.mrb[0].mxu0
      %v1538 = vadd.f32 0.0, %v1537
      %v1539 = vpop.f32.mrb[0].mxu0
      %1540 = vmatprep.mubr.f32.mxu0 0.0
      %1541 = vmatmul.mubr.f32.gmra.mrb[0].mxu0 %v597
      %v1542 = vpop.f32.mrb[0].mxu0
      %v1543 = vadd.f32 0.0, %v1542
      %v1544 = vpop.f32.mrb[0].mxu0
      %1545 = vmatprep.mubr.f32.mxu0 0.0
      %1546 = vmatmul.mubr.f32.gmra.mrb[0].mxu0 %v600
      %v1547 = vpop.f32.mrb[0].mxu0
      %v1548 = vadd.f32 0.0, %v1547
      %v1549 = vpop.f32.mrb[0].mxu0
      %1550 = vmatprep.mubr.f32.mxu0 0.0
      %1551 = vmatmul.mubr.f32.gmra.mrb[0].mxu0 %v603
      %v1552 = vpop.f32.mrb[0].mxu0
      %v1553 = vadd.f32 0.0, %v1552
      %v1554 = vpop.f32.mrb[0].mxu0
      %1555 = vmatprep.mubr.f32.mxu0 0.0
      %1556 = vmatmul.mubr.f32.gmra.mrb[0].mxu0 %v606
      %v1557 = vpop.f32.mrb[0].mxu0
      %v1558 = vadd.f32 0.0, %v1557
      %v1559 = vpop.f32.mrb[0].mxu0
      %1560 = vmatprep.mubr.f32.mxu0 0.0
      %1561 = vmatmul.mubr.f32.gmra.mrb[0].mxu0 %v609
      %v1562 = vpop.f32.mrb[0].mxu0
      %v1563 = vadd.f32 0.0, %v1562
      %v1564 = vpop.f32.mrb[0].mxu0
      %1565 = vmatprep.mubr.f32.mxu0 0.0
      %1566 = vmatmul.mubr.f32.gmra.mrb[0].mxu0 %v612
      %v1567 = vpop.f32.mrb[0].mxu0
      %v1568 = vadd.f32 0.0, %v1567
      %v1569 = vpop.f32.mrb[0].mxu0
      %1570 = vmatprep.mubr.f32.mxu0 0.0
      %1571 = vmatmul.mubr.f32.gmra.mrb[0].mxu0 %v615
      %v1572 = vpop.f32.mrb[0].mxu0
      %v1573 = vadd.f32 0.0, %v1572
      %v1574 = vpop.f32.mrb[0].mxu0
      %1575 = vmatprep.mubr.f32.mxu0 0.0
      %1576 = vmatmul.mubr.f32.gmra.mrb[0].mxu0 %v618
      %v1577 = vpop.f32.mrb[0].mxu0
      %v1578 = vadd.f32 0.0, %v1577
      %v1579 = vpop.f32.mrb[0].mxu0
      %1580 = vmatprep.mubr.f32.mxu0 0.0
      %1581 = vmatmul.mubr.f32.gmra.mrb[0].mxu0 %v621
      %v1582 = vpop.f32.mrb[0].mxu0
      %v1583 = vadd.f32 0.0, %v1582
      %v1584 = vpop.f32.mrb[0].mxu0
      %1585 = vmatprep.mubr.f32.mxu0 0.0
      %1586 = vmatmul.mubr.f32.gmra.mrb[0].mxu0 %v624
      %v1587 = vpop.f32.mrb[0].mxu0
      %v1588 = vadd.f32 0.0, %v1587
      %v1589 = vpop.f32.mrb[0].mxu0
      %1590 = vmatprep.mubr.f32.mxu0 0.0
      %1591 = vmatmul.mubr.f32.gmra.mrb[0].mxu0 %v627
      %v1592 = vpop.f32.mrb[0].mxu0
      %v1593 = vadd.f32 0.0, %v1592
      %v1594 = vpop.f32.mrb[0].mxu0
      %1595 = vmatprep.mubr.f32.mxu0 0.0
      %1596 = vmatmul.mubr.f32.gmra.mrb[0].mxu0 %v630
      %v1597 = vpop.f32.mrb[0].mxu0
      %v1598 = vadd.f32 0.0, %v1597
      %v1599 = vpop.f32.mrb[0].mxu0
      %1600 = vmatprep.mubr.f32.mxu0 0.0
      %1601 = vmatmul.mubr.f32.gmra.mrb[0].mxu0 %v633
      %v1602 = vpop.f32.mrb[0].mxu0
      %v1603 = vadd.f32 0.0, %v1602
      %v1604 = vpop.f32.mrb[0].mxu0
      %1605 = vmatprep.mubr.f32.mxu0 0.0
      %1606 = vmatmul.mubr.f32.gmra.mrb[0].mxu0 %v636
      %v1607 = vpop.f32.mrb[0].mxu0
      %v1608 = vadd.f32 0.0, %v1607
      %v1609 = vpop.f32.mrb[0].mxu0
      %1610 = vmatprep.mubr.f32.mxu0 0.0
      %1611 = vmatmul.mubr.f32.gmra.mrb[0].mxu0 %v639
      %v1612 = vpop.f32.mrb[0].mxu0
      %v1613 = vadd.f32 0.0, %v1612
      %v1614 = vpop.f32.mrb[0].mxu0
      %1615 = vmatprep.mubr.f32.mxu0 0.0
      %1616 = vmatmul.mubr.f32.gmra.mrb[0].mxu0 %v642
      %v1617 = vpop.f32.mrb[0].mxu0
      %v1618 = vadd.f32 0.0, %v1617
      %v1619 = vpop.f32.mrb[0].mxu0
      %1620 = vmatprep.mubr.f32.mxu0 0.0
      %1621 = vmatmul.mubr.f32.gmra.mrb[0].mxu0 %v645
      %v1622 = vpop.f32.mrb[0].mxu0
      %v1623 = vadd.f32 0.0, %v1622
      %v1624 = vpop.f32.mrb[0].mxu0
      %1625 = vmatprep.mubr.f32.mxu0 0.0
      %1626 = vmatmul.mubr.f32.gmra.mrb[0].mxu0 %v648
      %v1627 = vpop.f32.mrb[0].mxu0
      %v1628 = vadd.f32 0.0, %v1627
      %v1629 = vpop.f32.mrb[0].mxu0
      %1630 = vmatprep.mubr.f32.mxu0 0.0
      %1631 = vmatmul.mubr.f32.gmra.mrb[0].mxu0 %v651
      %v1632 = vpop.f32.mrb[0].mxu0
      %v1633 = vadd.f32 0.0, %v1632
      %v1634 = vpop.f32.mrb[0].mxu0
      %1635 = vmatprep.mubr.f32.mxu0 0.0
      %1636 = vmatmul.mubr.f32.gmra.mrb[0].mxu0 %v654
      %v1637 = vpop.f32.mrb[0].mxu0
      %v1638 = vadd.f32 0.0, %v1637
      %v1639 = vpop.f32.mrb[0].mxu0
      %1640 = vmatprep.mubr.f32.mxu0 0.0
      %1641 = vmatmul.mubr.f32.gmra.mrb[0].mxu0 %v657
      %v1642 = vpop.f32.mrb[0].mxu0
      %v1643 = vadd.f32 0.0, %v1642
      %v1644 = vpop.f32.mrb[0].mxu0
      %1645 = vmatprep.mubr.f32.mxu0 0.0
      %1646 = vmatmul.mubr.f32.gmra.mrb[0].mxu0 %v660
      %v1647 = vpop.f32.mrb[0].mxu0
      %v1648 = vadd.f32 0.0, %v1647
      %v1649 = vpop.f32.mrb[0].mxu0
      %1650 = vmatprep.mubr.f32.mxu0 0.0
      %1651 = vmatmul.mubr.f32.gmra.mrb[0].mxu0 %v663
      %v1652 = vpop.f32.mrb[0].mxu0
      %v1653 = vadd.f32 0.0, %v1652
      %v1654 = vpop.f32.mrb[0].mxu0
      %1655 = vmatprep.mubr.f32.mxu0 0.0
      %1656 = vmatmul.mubr.f32.gmra.mrb[0].mxu0 %v666
      %v1657 = vpop.f32.mrb[0].mxu0
      %v1658 = vadd.f32 0.0, %v1657
      %v1659 = vpop.f32.mrb[0].mxu0
      %1660 = vmatprep.mubr.f32.mxu0 0.0
      %1661 = vmatmul.mubr.f32.gmra.mrb[0].mxu0 %v669
      %v1662 = vpop.f32.mrb[0].mxu0
      %v1663 = vadd.f32 0.0, %v1662
      %v1664 = vpop.f32.mrb[0].mxu0
      %1665 = vmatprep.mubr.f32.mxu0 0.0
      %1666 = vmatmul.mubr.f32.gmra.mrb[0].mxu0 %v672
      %v1667 = vpop.f32.mrb[0].mxu0
      %v1668 = vadd.f32 0.0, %v1667
      %v1669 = vpop.f32.mrb[0].mxu0
      %1670 = vmatprep.mubr.f32.mxu0 0.0
      %1671 = vmatmul.mubr.f32.gmra.mrb[0].mxu0 %v675
      %v1672 = vpop.f32.mrb[0].mxu0
      %v1673 = vadd.f32 0.0, %v1672
      %v1674 = vpop.f32.mrb[0].mxu0
      %1675 = vmatprep.mubr.f32.mxu0 0.0
      %1676 = vmatmul.mubr.f32.gmra.mrb[0].mxu0 %v678
      %v1677 = vpop.f32.mrb[0].mxu0
      %v1678 = vadd.f32 0.0, %v1677
      %v1679 = vpop.f32.mrb[0].mxu0
      %1680 = vmatprep.mubr.f32.mxu0 0.0
      %1681 = vmatmul.mubr.f32.gmra.mrb[0].mxu0 %v681
      %v1682 = vpop.f32.mrb[0].mxu0
      %v1683 = vadd.f32 0.0, %v1682
      %v1684 = vpop.f32.mrb[0].mxu0
      %1685 = vmatprep.mubr.f32.mxu0 0.0
      %1686 = vmatmul.mubr.f32.gmra.mrb[0].mxu0 %v684
      %v1687 = vpop.f32.mrb[0].mxu0
      %v1688 = vadd.f32 0.0, %v1687
      %v1689 = vpop.f32.mrb[0].mxu0
      %1690 = vmatprep.mubr.f32.mxu0 0.0
      %1691 = vmatmul.mubr.f32.gmra.mrb[0].mxu0 %v687
      %v1692 = vpop.f32.mrb[0].mxu0
      %v1693 = vadd.f32 0.0, %v1692
      %v1694 = vpop.f32.mrb[0].mxu0
      %1695 = vmatprep.mubr.f32.mxu0 0.0
      %1696 = vmatmul.mubr.f32.gmra.mrb[0].mxu0 %v690
      %v1697 = vpop.f32.mrb[0].mxu0
      %v1698 = vadd.f32 0.0, %v1697
      %v1699 = vpop.f32.mrb[0].mxu0
      %1700 = vmatprep.mubr.f32.mxu0 0.0
      %1701 = vmatmul.mubr.f32.gmra.mrb[0].mxu0 %v693
      %v1702 = vpop.f32.mrb[0].mxu0
      %v1703 = vadd.f32 0.0, %v1702
      %v1704 = vpop.f32.mrb[0].mxu0
      %1705 = vmatprep.mubr.f32.mxu0 0.0
      %1706 = vmatmul.mubr.f32.gmra.mrb[0].mxu0 %v696
      %v1707 = vpop.f32.mrb[0].mxu0
      %v1708 = vadd.f32 0.0, %v1707
      %v1709 = vpop.f32.mrb[0].mxu0
      %1710 = vmatprep.mubr.f32.mxu0 0.0
      %1711 = vmatmul.mubr.f32.gmra.mrb[0].mxu0 %v699
      %v1712 = vpop.f32.mrb[0].mxu0
      %v1713 = vadd.f32 0.0, %v1712
      %v1714 = vpop.f32.mrb[0].mxu0
      %1715 = vmatprep.mubr.f32.mxu0 0.0
      %1716 = vmatmul.mubr.f32.gmra.mrb[0].mxu0 %v702
      %v1717 = vpop.f32.mrb[0].mxu0
      %v1718 = vadd.f32 0.0, %v1717
      %v1719 = vpop.f32.mrb[0].mxu0
      %1720 = vmatprep.mubr.f32.mxu0 0.0
      %1721 = vmatmul.mubr.f32.gmra.mrb[0].mxu0 %v705
      %v1722 = vpop.f32.mrb[0].mxu0
      %v1723 = vadd.f32 0.0, %v1722
      %v1724 = vpop.f32.mrb[0].mxu0
      %1725 = vmatprep.mubr.f32.mxu0 0.0
      %1726 = vmatmul.mubr.f32.gmra.mrb[0].mxu0 %v708
      %v1727 = vpop.f32.mrb[0].mxu0
      %v1728 = vadd.f32 0.0, %v1727
      %v1729 = vpop.f32.mrb[0].mxu0
      %1730 = vmatprep.mubr.f32.mxu0 0.0
      %1731 = vmatmul.mubr.f32.gmra.mrb[0].mxu0 %v711
      %v1732 = vpop.f32.mrb[0].mxu0
      %v1733 = vadd.f32 0.0, %v1732
      %v1734 = vpop.f32.mrb[0].mxu0
      %1735 = vmatprep.mubr.f32.mxu0 0.0
      %1736 = vmatmul.mubr.f32.gmra.mrb[0].mxu0 %v714
      %v1737 = vpop.f32.mrb[0].mxu0
      %v1738 = vadd.f32 0.0, %v1737
      %v1739 = vpop.f32.mrb[0].mxu0
      %1740 = vmatprep.mubr.f32.mxu0 0.0
      %1741 = vmatmul.mubr.f32.gmra.mrb[0].mxu0 %v717
      %v1742 = vpop.f32.mrb[0].mxu0
      %v1743 = vadd.f32 0.0, %v1742
      %v1744 = vpop.f32.mrb[0].mxu0
      %1745 = vmatprep.mubr.f32.mxu0 0.0
      %1746 = vmatmul.mubr.f32.gmra.mrb[0].mxu0 %v720
      %v1747 = vpop.f32.mrb[0].mxu0
      %v1748 = vadd.f32 0.0, %v1747
      %v1749 = vpop.f32.mrb[0].mxu0
      %1750 = vmatprep.mubr.f32.mxu0 0.0
      %1751 = vmatmul.mubr.f32.gmra.mrb[0].mxu0 %v723
      %v1752 = vpop.f32.mrb[0].mxu0
      %v1753 = vadd.f32 0.0, %v1752
      %v1754 = vpop.f32.mrb[0].mxu0
      %1755 = vmatprep.mubr.f32.mxu0 0.0
      %1756 = vmatmul.mubr.f32.gmra.mrb[0].mxu0 %v726
      %v1757 = vpop.f32.mrb[0].mxu0
      %v1758 = vadd.f32 0.0, %v1757
      %v1759 = vpop.f32.mrb[0].mxu0
      %1760 = vmatprep.mubr.f32.mxu0 0.0
      %1761 = vmatmul.mubr.f32.gmra.mrb[0].mxu0 %v729
      %v1762 = vpop.f32.mrb[0].mxu0
      %v1763 = vadd.f32 0.0, %v1762
      %v1764 = vpop.f32.mrb[0].mxu0
      %1765 = vmatprep.mubr.f32.mxu0 0.0
      %1766 = vmatmul.mubr.f32.gmra.mrb[0].mxu0 %v732
      %v1767 = vpop.f32.mrb[0].mxu0
      %v1768 = vadd.f32 0.0, %v1767
      %v1769 = vpop.f32.mrb[0].mxu0
      %1770 = vmatprep.mubr.f32.mxu0 0.0
      %1771 = vmatmul.mubr.f32.gmra.mrb[0].mxu0 %v735
      %v1772 = vpop.f32.mrb[0].mxu0
      %v1773 = vadd.f32 0.0, %v1772
      %v1774 = vpop.f32.mrb[0].mxu0
      %1775 = vmatprep.mubr.f32.mxu0 0.0
      %1776 = vmatmul.mubr.f32.gmra.mrb[0].mxu0 %v738
      %v1777 = vpop.f32.mrb[0].mxu0
      %v1778 = vadd.f32 0.0, %v1777
      %v1779 = vpop.f32.mrb[0].mxu0
      %1780 = vmatprep.mubr.f32.mxu0 0.0
      %1781 = vmatmul.mubr.f32.gmra.mrb[0].mxu0 %v741
      %v1782 = vpop.f32.mrb[0].mxu0
      %v1783 = vadd.f32 0.0, %v1782
      %v1784 = vpop.f32.mrb[0].mxu0
      %1785 = vmatprep.mubr.f32.mxu0 0.0
      %1786 = vmatmul.mubr.f32.gmra.mrb[0].mxu0 %v744
      %v1787 = vpop.f32.mrb[0].mxu0
      %v1788 = vadd.f32 0.0, %v1787
      %v1789 = vpop.f32.mrb[0].mxu0
      %1790 = vmatprep.mubr.f32.mxu0 0.0
      %1791 = vmatmul.mubr.f32.gmra.mrb[0].mxu0 %v747
      %v1792 = vpop.f32.mrb[0].mxu0
      %v1793 = vadd.f32 0.0, %v1792
      %v1794 = vpop.f32.mrb[0].mxu0
      %1795 = vmatprep.mubr.f32.mxu0 0.0
      %1796 = vmatmul.mubr.f32.gmra.mrb[0].mxu0 %v750
      %v1797 = vpop.f32.mrb[0].mxu0
      %v1798 = vadd.f32 0.0, %v1797
      %v1799 = vpop.f32.mrb[0].mxu0
      %1800 = vmatprep.mubr.f32.mxu0 0.0
      %1801 = vmatmul.mubr.f32.gmra.mrb[0].mxu0 %v753
      %v1802 = vpop.f32.mrb[0].mxu0
      %v1803 = vadd.f32 0.0, %v1802
      %v1804 = vpop.f32.mrb[0].mxu0
      %1805 = vmatprep.mubr.f32.mxu0 0.0
      %1806 = vmatmul.mubr.f32.gmra.mrb[0].mxu0 %v756
      %v1807 = vpop.f32.mrb[0].mxu0
      %v1808 = vadd.f32 0.0, %v1807
      %v1809 = vpop.f32.mrb[0].mxu0
      %1810 = vmatprep.mubr.f32.mxu0 0.0
      %1811 = vmatmul.mubr.f32.gmra.mrb[0].mxu0 %v759
      %v1812 = vpop.f32.mrb[0].mxu0
      %v1813 = vadd.f32 0.0, %v1812
      %v1814 = vpop.f32.mrb[0].mxu0
      %1815 = vmatprep.mubr.f32.mxu0 0.0
      %1816 = vmatmul.mubr.f32.gmra.mrb[0].mxu0 %v762
      %v1817 = vpop.f32.mrb[0].mxu0
      %v1818 = vadd.f32 0.0, %v1817
      %v1819 = vpop.f32.mrb[0].mxu0
      %1820 = vmatprep.mubr.f32.mxu0 0.0
      %1821 = vmatmul.mubr.f32.gmra.mrb[0].mxu0 %v765
      %v1822 = vpop.f32.mrb[0].mxu0
      %v1823 = vadd.f32 0.0, %v1822
      %v1824 = vpop.f32.mrb[0].mxu0
      %1825 = vmatprep.mubr.f32.mxu0 0.0
      %1826 = vmatmul.mubr.f32.gmra.mrb[0].mxu0 %v768
      %v1827 = vpop.f32.mrb[0].mxu0
      %v1828 = vadd.f32 0.0, %v1827
      %v1829 = vpop.f32.mrb[0].mxu0
      %1830 = vmatprep.mubr.f32.mxu0 0.0
      %1831 = vmatmul.mubr.f32.gmra.mrb[0].mxu0 %v771
      %v1832 = vpop.f32.mrb[0].mxu0
      %v1833 = vadd.f32 0.0, %v1832
      %v1834 = vpop.f32.mrb[0].mxu0
      %1835 = vmatprep.mubr.f32.mxu0 0.0
      %1836 = vmatmul.mubr.f32.gmra.mrb[0].mxu0 %v774
      %v1837 = vpop.f32.mrb[0].mxu0
      %v1838 = vadd.f32 0.0, %v1837
      %v1839 = vpop.f32.mrb[0].mxu0
      %1840 = vmatprep.mubr.f32.mxu0 0.0
      %1841 = vmatmul.mubr.f32.gmra.mrb[0].mxu0 %v777
      %v1842 = vpop.f32.mrb[0].mxu0
      %v1843 = vadd.f32 0.0, %v1842
      %v1844 = vpop.f32.mrb[0].mxu0
      %1845 = vmatprep.mubr.f32.mxu0 0.0
      %1846 = vmatmul.mubr.f32.gmra.mrb[0].mxu0 %v780
      %v1847 = vpop.f32.mrb[0].mxu0
      %v1848 = vadd.f32 0.0, %v1847
      %v1849 = vpop.f32.mrb[0].mxu0
      %1850 = vmatprep.mubr.f32.mxu0 0.0
      %1851 = vmatmul.mubr.f32.gmra.mrb[0].mxu0 %v783
      %v1852 = vpop.f32.mrb[0].mxu0
      %v1853 = vadd.f32 0.0, %v1852
      %v1854 = vpop.f32.mrb[0].mxu0
      %1855 = vmatprep.mubr.f32.mxu0 0.0
      %1856 = vmatmul.mubr.f32.gmra.mrb[0].mxu0 %v786
      %v1857 = vpop.f32.mrb[0].mxu0
      %v1858 = vadd.f32 0.0, %v1857
      %v1859 = vpop.f32.mrb[0].mxu0
      %1860 = vmatprep.mubr.f32.mxu0 0.0
      %1861 = vmatmul.mubr.f32.gmra.mrb[0].mxu0 %v789
      %v1862 = vpop.f32.mrb[0].mxu0
      %v1863 = vadd.f32 0.0, %v1862
      %v1864 = vpop.f32.mrb[0].mxu0
      %1865 = vmatprep.mubr.f32.mxu0 0.0
      %1866 = vmatmul.mubr.f32.gmra.mrb[0].mxu0 %v792
      %v1867 = vpop.f32.mrb[0].mxu0
      %v1868 = vadd.f32 0.0, %v1867
      %v1869 = vpop.f32.mrb[0].mxu0
      %1870 = vmatprep.mubr.f32.mxu0 0.0
      %1871 = vmatmul.mubr.f32.gmra.mrb[0].mxu0 %v795
      %v1872 = vpop.f32.mrb[0].mxu0
      %v1873 = vadd.f32 0.0, %v1872
      %v1874 = vpop.f32.mrb[0].mxu0
      %1875 = vmatprep.mubr.f32.mxu0 0.0
      %1876 = vmatmul.mubr.f32.gmra.mrb[0].mxu0 %v798
      %v1877 = vpop.f32.mrb[0].mxu0
      %v1878 = vadd.f32 0.0, %v1877
      %v1879 = vpop.f32.mrb[0].mxu0
      %1880 = vmatprep.mubr.f32.mxu0 0.0
      %1881 = vmatmul.mubr.f32.gmra.mrb[0].mxu0 %v801
      %v1882 = vpop.f32.mrb[0].mxu0
      %v1883 = vadd.f32 0.0, %v1882
      %v1884 = vpop.f32.mrb[0].mxu0
      %1885 = vmatprep.mubr.f32.mxu0 0.0
      %1886 = vmatmul.mubr.f32.gmra.mrb[0].mxu0 %v804
      %v1887 = vpop.f32.mrb[0].mxu0
      %v1888 = vadd.f32 0.0, %v1887
      %v1889 = vpop.f32.mrb[0].mxu0
      %1890 = vmatprep.mubr.f32.mxu0 0.0
      %1891 = vmatmul.mubr.f32.gmra.mrb[0].mxu0 %v807
      %v1892 = vpop.f32.mrb[0].mxu0
      %v1893 = vadd.f32 0.0, %v1892
      %v1894 = vpop.f32.mrb[0].mxu0
      %1895 = vmatprep.mubr.f32.mxu0 0.0
      %1896 = vmatmul.mubr.f32.gmra.mrb[0].mxu0 %v810
      %v1897 = vpop.f32.mrb[0].mxu0
      %v1898 = vadd.f32 0.0, %v1897
      %v1899 = vpop.f32.mrb[0].mxu0
      %1900 = vmatprep.mubr.f32.mxu0 0.0
      %1901 = vmatmul.mubr.f32.gmra.mrb[0].mxu0 %v813
      %v1902 = vpop.f32.mrb[0].mxu0
      %v1903 = vadd.f32 0.0, %v1902
      %v1904 = vpop.f32.mrb[0].mxu0
      %1905 = vmatprep.mubr.f32.mxu0 0.0
      %1906 = vmatmul.mubr.f32.gmra.mrb[0].mxu0 %v816
      %v1907 = vpop.f32.mrb[0].mxu0
      %v1908 = vadd.f32 0.0, %v1907
      %v1909 = vpop.f32.mrb[0].mxu0
      %1910 = vmatprep.mubr.f32.mxu0 0.0
      %1911 = vmatmul.mubr.f32.gmra.mrb[0].mxu0 %v819
      %v1912 = vpop.f32.mrb[0].mxu0
      %v1913 = vadd.f32 0.0, %v1912
      %v1914 = vpop.f32.mrb[0].mxu0
      %1915 = vmatprep.mubr.f32.mxu0 0.0
      %1916 = vmatmul.mubr.f32.gmra.mrb[0].mxu0 %v822
      %v1917 = vpop.f32.mrb[0].mxu0
      %v1918 = vadd.f32 0.0, %v1917
      %v1919 = vpop.f32.mrb[0].mxu0
      %1920 = vmatprep.mubr.f32.mxu0 0.0
      %1921 = vmatmul.mubr.f32.gmra.mrb[0].mxu0 %v825
      %v1922 = vpop.f32.mrb[0].mxu0
      %v1923 = vadd.f32 0.0, %v1922
      %v1924 = vpop.f32.mrb[0].mxu0
      %1925 = vmatprep.mubr.f32.mxu0 0.0
      %1926 = vmatmul.mubr.f32.gmra.mrb[0].mxu0 %v828
      %v1927 = vpop.f32.mrb[0].mxu0
      %v1928 = vadd.f32 0.0, %v1927
      %v1929 = vpop.f32.mrb[0].mxu0
      %1930 = vmatprep.mubr.f32.mxu0 0.0
      %1931 = vmatmul.mubr.f32.gmra.mrb[0].mxu0 %v831
      %v1932 = vpop.f32.mrb[0].mxu0
      %v1933 = vadd.f32 0.0, %v1932
      %v1934 = vpop.f32.mrb[0].mxu0
      %1935 = vmatprep.mubr.f32.mxu0 0.0
      %1936 = vmatmul.mubr.f32.gmra.mrb[0].mxu0 %v834
      %v1937 = vpop.f32.mrb[0].mxu0
      %v1938 = vadd.f32 0.0, %v1937
      %v1939 = vpop.f32.mrb[0].mxu0
      %1940 = vmatprep.mubr.f32.mxu0 0.0
      %1941 = vmatmul.mubr.f32.gmra.mrb[0].mxu0 %v837
      %v1942 = vpop.f32.mrb[0].mxu0
      %v1943 = vadd.f32 0.0, %v1942
      %v1944 = vpop.f32.mrb[0].mxu0
      %1945 = vmatprep.mubr.f32.mxu0 0.0
      %1946 = vmatmul.mubr.f32.gmra.mrb[0].mxu0 %v840
      %v1947 = vpop.f32.mrb[0].mxu0
      %v1948 = vadd.f32 0.0, %v1947
      %v1949 = vpop.f32.mrb[0].mxu0
      %1950 = vmatprep.mubr.f32.mxu0 0.0
      %1951 = vmatmul.mubr.f32.gmra.mrb[0].mxu0 %v843
      %v1952 = vpop.f32.mrb[0].mxu0
      %v1953 = vadd.f32 0.0, %v1952
      %v1954 = vpop.f32.mrb[0].mxu0
      %1955 = vmatprep.mubr.f32.mxu0 0.0
      %1956 = vmatmul.mubr.f32.gmra.mrb[0].mxu0 %v846
      %v1957 = vpop.f32.mrb[0].mxu0
      %v1958 = vadd.f32 0.0, %v1957
      %v1959 = vpop.f32.mrb[0].mxu0
      %1960 = vmatprep.mubr.f32.mxu0 0.0
      %1961 = vmatmul.mubr.f32.gmra.mrb[0].mxu0 %v849
      %v1962 = vpop.f32.mrb[0].mxu0
      %v1963 = vadd.f32 0.0, %v1962
      %v1964 = vpop.f32.mrb[0].mxu0
      %1965 = vmatprep.mubr.f32.mxu0 0.0
      %1966 = vmatmul.mubr.f32.gmra.mrb[0].mxu0 %v852
      %v1967 = vpop.f32.mrb[0].mxu0
      %v1968 = vadd.f32 0.0, %v1967
      %v1969 = vpop.f32.mrb[0].mxu0
      %1970 = vmatprep.mubr.f32.mxu0 0.0
      %1971 = vmatmul.mubr.f32.gmra.mrb[0].mxu0 %v855
      %v1972 = vpop.f32.mrb[0].mxu0
      %v1973 = vadd.f32 0.0, %v1972
      %v1974 = vpop.f32.mrb[0].mxu0
      %1975 = vmatprep.mubr.f32.mxu0 0.0
      %1976 = vmatmul.mubr.f32.gmra.mrb[0].mxu0 %v858
      %v1977 = vpop.f32.mrb[0].mxu0
      %v1978 = vadd.f32 0.0, %v1977
      %v1979 = vpop.f32.mrb[0].mxu0
      %1980 = vmatprep.mubr.f32.mxu0 0.0
      %1981 = vmatmul.mubr.f32.gmra.mrb[0].mxu0 %v861
      %v1982 = vpop.f32.mrb[0].mxu0
      %v1983 = vadd.f32 0.0, %v1982
      %v1984 = vpop.f32.mrb[0].mxu0
      %1985 = vmatprep.mubr.f32.mxu0 0.0
      %1986 = vmatmul.mubr.f32.gmra.mrb[0].mxu0 %v864
      %v1987 = vpop.f32.mrb[0].mxu0
      %v1988 = vadd.f32 0.0, %v1987
      %v1989 = vpop.f32.mrb[0].mxu0
      %1990 = vmatprep.mubr.f32.mxu0 0.0
      %1991 = vmatmul.mubr.f32.gmra.mrb[0].mxu0 %v867
      %v1992 = vpop.f32.mrb[0].mxu0
      %v1993 = vadd.f32 0.0, %v1992
      %v1994 = vpop.f32.mrb[0].mxu0
      %1995 = vmatprep.mubr.f32.mxu0 0.0
      %1996 = vmatmul.mubr.f32.gmra.mrb[0].mxu0 %v870
      %v1997 = vpop.f32.mrb[0].mxu0
      %v1998 = vadd.f32 0.0, %v1997
      %v1999 = vpop.f32.mrb[0].mxu0
      %2000 = vmatprep.mubr.f32.mxu0 0.0
      %2001 = vmatmul.mubr.f32.gmra.mrb[0].mxu0 %v873
      %v2002 = vpop.f32.mrb[0].mxu0
      %v2003 = vadd.f32 0.0, %v2002
      %v2004 = vpop.f32.mrb[0].mxu0
      %2005 = vmatprep.mubr.f32.mxu0 0.0
      %2006 = vmatmul.mubr.f32.gmra.mrb[0].mxu0 %v876
      %v2007 = vpop.f32.mrb[0].mxu0
      %v2008 = vadd.f32 0.0, %v2007
      %v2009 = vpop.f32.mrb[0].mxu0
      %2010 = vmatprep.mubr.f32.mxu0 0.0
      %2011 = vmatmul.mubr.f32.gmra.mrb[0].mxu0 %v879
      %v2012 = vpop.f32.mrb[0].mxu0
      %v2013 = vadd.f32 0.0, %v2012
      %v2014 = vpop.f32.mrb[0].mxu0
      %2015 = vmatprep.mubr.f32.mxu0 0.0
      %2016 = vmatmul.mubr.f32.gmra.mrb[0].mxu0 %v882
      %v2017 = vpop.f32.mrb[0].mxu0
      %v2018 = vadd.f32 0.0, %v2017
      %v2019 = vpop.f32.mrb[0].mxu0
      %2020 = vmatprep.mubr.f32.mxu0 0.0
      %2021 = vmatmul.mubr.f32.gmra.mrb[0].mxu0 %v885
      %v2022 = vpop.f32.mrb[0].mxu0
      %v2023 = vadd.f32 0.0, %v2022
      %v2024 = vpop.f32.mrb[0].mxu0
      %2025 = vmatprep.mubr.f32.mxu0 0.0
      %2026 = vmatmul.mubr.f32.gmra.mrb[0].mxu0 %v888
      %v2027 = vpop.f32.mrb[0].mxu0
      %v2028 = vadd.f32 0.0, %v2027
      %v2029 = vpop.f32.mrb[0].mxu0
      %2030 = vmatprep.mubr.f32.mxu0 0.0
      %2031 = vmatmul.mubr.f32.gmra.mrb[0].mxu0 %v891
      %v2032 = vpop.f32.mrb[0].mxu0
      %v2033 = vadd.f32 0.0, %v2032
      %v2034 = vpop.f32.mrb[0].mxu0
      %2035 = vmatprep.mubr.f32.mxu0 0.0
      %2036 = vmatmul.mubr.f32.gmra.mrb[0].mxu0 %v894
      %v2037 = vpop.f32.mrb[0].mxu0
      %v2038 = vadd.f32 0.0, %v2037
      %v2039 = vpop.f32.mrb[0].mxu0
      %2040 = vmatprep.mubr.f32.mxu0 0.0
      %2041 = vmatmul.mubr.f32.gmra.mrb[0].mxu0 %v897
      %v2042 = vpop.f32.mrb[0].mxu0
      %v2043 = vadd.f32 0.0, %v2042
      %v2044 = vpop.f32.mrb[0].mxu0
      %2045 = vmatprep.mubr.f32.mxu0 0.0
      %2046 = vmatmul.mubr.f32.gmra.mrb[0].mxu0 %v900
      %v2047 = vpop.f32.mrb[0].mxu0
      %v2048 = vadd.f32 0.0, %v2047
      %v2049 = vpop.f32.mrb[0].mxu0
      %2050 = vmatprep.mubr.f32.mxu0 0.0
      %2051 = vmatmul.mubr.f32.gmra.mrb[0].mxu0 %v903
      %v2052 = vpop.f32.mrb[0].mxu0
      %v2053 = vadd.f32 0.0, %v2052
      %v2054 = vpop.f32.mrb[0].mxu0
      %2055 = vmatprep.mubr.f32.mxu0 0.0
      %2056 = vmatmul.mubr.f32.gmra.mrb[0].mxu0 %v906
      %v2057 = vpop.f32.mrb[0].mxu0
      %v2058 = vadd.f32 0.0, %v2057
      %v2059 = vpop.f32.mrb[0].mxu0
      %2060 = vmatprep.mubr.f32.mxu0 0.0
      %2061 = vmatmul.mubr.f32.gmra.mrb[0].mxu0 %v909
      %v2062 = vpop.f32.mrb[0].mxu0
      %v2063 = vadd.f32 0.0, %v2062
      %v2064 = vpop.f32.mrb[0].mxu0
      %2065 = vmatprep.mubr.f32.mxu0 0.0
      %2066 = vmatmul.mubr.f32.gmra.mrb[0].mxu0 %v912
      %v2067 = vpop.f32.mrb[0].mxu0
      %v2068 = vadd.f32 0.0, %v2067
      %v2069 = vpop.f32.mrb[0].mxu0
      %2070 = vmatprep.mubr.f32.mxu0 0.0
      %2071 = vmatmul.mubr.f32.gmra.mrb[0].mxu0 %v915
      %v2072 = vpop.f32.mrb[0].mxu0
      %v2073 = vadd.f32 0.0, %v2072
      %v2074 = vpop.f32.mrb[0].mxu0
      %2075 = vmatprep.mubr.f32.mxu0 0.0
      %2076 = vmatmul.mubr.f32.gmra.mrb[0].mxu0 %v918
      %v2077 = vpop.f32.mrb[0].mxu0
      %v2078 = vadd.f32 0.0, %v2077
      %v2079 = vpop.f32.mrb[0].mxu0
      %2080 = vmatprep.mubr.f32.mxu0 0.0
      %2081 = vmatmul.mubr.f32.gmra.mrb[0].mxu0 %v921
      %v2082 = vpop.f32.mrb[0].mxu0
      %v2083 = vadd.f32 0.0, %v2082
      %v2084 = vpop.f32.mrb[0].mxu0
      %2085 = vmatprep.mubr.f32.mxu0 0.0
      %2086 = vmatmul.mubr.f32.gmra.mrb[0].mxu0 %v924
      %v2087 = vpop.f32.mrb[0].mxu0
      %v2088 = vadd.f32 0.0, %v2087
      %v2089 = vpop.f32.mrb[0].mxu0
      %2090 = vmatprep.mubr.f32.mxu0 0.0
      %2091 = vmatmul.mubr.f32.gmra.mrb[0].mxu0 %v927
      %v2092 = vpop.f32.mrb[0].mxu0
      %v2093 = vadd.f32 0.0, %v2092
      %v2094 = vpop.f32.mrb[0].mxu0
      %2095 = vmatprep.mubr.f32.mxu0 0.0
      %2096 = vmatmul.mubr.f32.gmra.mrb[0].mxu0 %v930
      %v2097 = vpop.f32.mrb[0].mxu0
      %v2098 = vadd.f32 0.0, %v2097
      %v2099 = vpop.f32.mrb[0].mxu0
      %2100 = vmatprep.mubr.f32.mxu0 0.0
      %2101 = vmatmul.mubr.f32.gmra.mrb[0].mxu0 %v933
      %v2102 = vpop.f32.mrb[0].mxu0
      %v2103 = vadd.f32 0.0, %v2102
      %v2104 = vpop.f32.mrb[0].mxu0
      %2105 = vmatprep.mubr.f32.mxu0 0.0
      %2106 = vmatmul.mubr.f32.gmra.mrb[0].mxu0 %v936
      %v2107 = vpop.f32.mrb[0].mxu0
      %v2108 = vadd.f32 0.0, %v2107
      %v2109 = vpop.f32.mrb[0].mxu0
      %2110 = vmatprep.mubr.f32.mxu0 0.0
      %2111 = vmatmul.mubr.f32.gmra.mrb[0].mxu0 %v939
      %v2112 = vpop.f32.mrb[0].mxu0
      %v2113 = vadd.f32 0.0, %v2112
      %v2114 = vpop.f32.mrb[0].mxu0
      %2115 = vmatprep.mubr.f32.mxu0 0.0
      %2116 = vmatmul.mubr.f32.gmra.mrb[0].mxu0 %v942
      %v2117 = vpop.f32.mrb[0].mxu0
      %v2118 = vadd.f32 0.0, %v2117
      %v2119 = vpop.f32.mrb[0].mxu0
      %2120 = vmatprep.mubr.f32.mxu0 0.0
      %2121 = vmatmul.mubr.f32.gmra.mrb[0].mxu0 %v945
      %v2122 = vpop.f32.mrb[0].mxu0
      %v2123 = vadd.f32 0.0, %v2122
      %v2124 = vpop.f32.mrb[0].mxu0
      %2125 = vmatprep.mubr.f32.mxu0 0.0
      %2126 = vmatmul.mubr.f32.gmra.mrb[0].mxu0 %v948
      %v2127 = vpop.f32.mrb[0].mxu0
      %v2128 = vadd.f32 0.0, %v2127
      %v2129 = vpop.f32.mrb[0].mxu0
      %2130 = vmatprep.mubr.f32.mxu0 0.0
      %2131 = vmatmul.mubr.f32.gmra.mrb[0].mxu0 %v951
      %v2132 = vpop.f32.mrb[0].mxu0
      %v2133 = vadd.f32 0.0, %v2132
      %v2134 = vpop.f32.mrb[0].mxu0
      %2135 = vmatprep.mubr.f32.mxu0 0.0
      %2136 = vmatmul.mubr.f32.gmra.mrb[0].mxu0 %v954
      %v2137 = vpop.f32.mrb[0].mxu0
      %v2138 = vadd.f32 0.0, %v2137
      %v2139 = vpop.f32.mrb[0].mxu0
      %2140 = vmatprep.mubr.f32.mxu0 0.0
      %2141 = vmatmul.mubr.f32.gmra.mrb[0].mxu0 %v957
      %v2142 = vpop.f32.mrb[0].mxu0
      %v2143 = vadd.f32 0.0, %v2142
      %v2144 = vpop.f32.mrb[0].mxu0
      %2145 = vmatprep.mubr.f32.mxu0 0.0
      %2146 = vmatmul.mubr.f32.gmra.mrb[0].mxu0 %v960
      %v2147 = vpop.f32.mrb[0].mxu0
      %v2148 = vadd.f32 0.0, %v2147
      %v2149 = vpop.f32.mrb[0].mxu0
      %2150 = vmatprep.mubr.f32.mxu0 0.0
      %2151 = vmatmul.mubr.f32.gmra.mrb[0].mxu0 %v963
      %v2152 = vpop.f32.mrb[0].mxu0
      %v2153 = vadd.f32 0.0, %v2152
      %v2154 = vpop.f32.mrb[0].mxu0
      %2155 = vmatprep.mubr.f32.mxu0 0.0
      %2156 = vmatmul.mubr.f32.gmra.mrb[0].mxu0 %v966
      %v2157 = vpop.f32.mrb[0].mxu0
      %v2158 = vadd.f32 0.0, %v2157
      %v2159 = vpop.f32.mrb[0].mxu0
      %2160 = vmatprep.mubr.f32.mxu0 0.0
      %2161 = vmatmul.mubr.f32.gmra.mrb[0].mxu0 %v969
      %v2162 = vpop.f32.mrb[0].mxu0
      %v2163 = vadd.f32 0.0, %v2162
      %v2164 = vpop.f32.mrb[0].mxu0
      %2165 = vmatprep.mubr.f32.mxu0 0.0
      %2166 = vmatmul.mubr.f32.gmra.mrb[0].mxu0 %v972
      %v2167 = vpop.f32.mrb[0].mxu0
      %v2168 = vadd.f32 0.0, %v2167
      %v2169 = vpop.f32.mrb[0].mxu0
      %2170 = vmatprep.mubr.f32.mxu0 0.0
      %2171 = vmatmul.mubr.f32.gmra.mrb[0].mxu0 %v975
      %v2172 = vpop.f32.mrb[0].mxu0
      %v2173 = vadd.f32 0.0, %v2172
      %v2174 = vpop.f32.mrb[0].mxu0
      %2175 = vmatprep.mubr.f32.mxu0 0.0
      %2176 = vmatmul.mubr.f32.gmra.mrb[0].mxu0 %v978
      %v2177 = vpop.f32.mrb[0].mxu0
      %v2178 = vadd.f32 0.0, %v2177
      %v2179 = vpop.f32.mrb[0].mxu0
      %2180 = vmatprep.mubr.f32.mxu0 0.0
      %2181 = vmatmul.mubr.f32.gmra.mrb[0].mxu0 %v981
      %v2182 = vpop.f32.mrb[0].mxu0
      %v2183 = vadd.f32 0.0, %v2182
      %v2184 = vpop.f32.mrb[0].mxu0
      %2185 = vmatprep.mubr.f32.mxu0 0.0
      %2186 = vmatmul.mubr.f32.gmra.mrb[0].mxu0 %v984
      %v2187 = vpop.f32.mrb[0].mxu0
      %v2188 = vadd.f32 0.0, %v2187
      %v2189 = vpop.f32.mrb[0].mxu0
      %2190 = vmatprep.mubr.f32.mxu0 0.0
      %2191 = vmatmul.mubr.f32.gmra.mrb[0].mxu0 %v987
      %v2192 = vpop.f32.mrb[0].mxu0
      %v2193 = vadd.f32 0.0, %v2192
      %v2194 = vpop.f32.mrb[0].mxu0
      %2195 = vmatprep.mubr.f32.mxu0 0.0
      %2196 = vmatmul.mubr.f32.gmra.mrb[0].mxu0 %v990
      %v2197 = vpop.f32.mrb[0].mxu0
      %v2198 = vadd.f32 0.0, %v2197
      %v2199 = vpop.f32.mrb[0].mxu0
      %2200 = vmatprep.mubr.f32.mxu0 0.0
      %2201 = vmatmul.mubr.f32.gmra.mrb[0].mxu0 %v993
      %v2202 = vpop.f32.mrb[0].mxu0
      %v2203 = vadd.f32 0.0, %v2202
      %v2204 = vpop.f32.mrb[0].mxu0
      %2205 = vmatprep.mubr.f32.mxu0 0.0
      %2206 = vmatmul.mubr.f32.gmra.mrb[0].mxu0 %v996
      %v2207 = vpop.f32.mrb[0].mxu0
      %v2208 = vadd.f32 0.0, %v2207
      %v2209 = vpop.f32.mrb[0].mxu0
      %2210 = vmatprep.mubr.f32.mxu0 0.0
      %2211 = vmatmul.mubr.f32.gmra.mrb[0].mxu0 %v999
      %v2212 = vpop.f32.mrb[0].mxu0
      %v2213 = vadd.f32 0.0, %v2212
      %v2214 = vpop.f32.mrb[0].mxu0
      %2215 = vmatprep.mubr.f32.mxu0 0.0
      %2216 = vmatmul.mubr.f32.gmra.mrb[0].mxu0 %v1002
      %v2217 = vpop.f32.mrb[0].mxu0
      %v2218 = vadd.f32 0.0, %v2217
      %v2219 = vpop.f32.mrb[0].mxu0
      %2220 = vmatprep.mubr.f32.mxu0 0.0
      %2221 = vmatmul.mubr.f32.gmra.mrb[0].mxu0 %v1005
      %v2222 = vpop.f32.mrb[0].mxu0
      %v2223 = vadd.f32 0.0, %v2222
      %v2224 = vpop.f32.mrb[0].mxu0
      %2225 = vmatprep.mubr.f32.mxu0 0.0
      %2226 = vmatmul.mubr.f32.gmra.mrb[0].mxu0 %v1008
      %v2227 = vpop.f32.mrb[0].mxu0
      %v2228 = vadd.f32 0.0, %v2227
      %v2229 = vpop.f32.mrb[0].mxu0
      %2230 = vmatprep.mubr.f32.mxu0 0.0
      %2231 = vmatmul.mubr.f32.gmra.mrb[0].mxu0 %v1011
      %v2232 = vpop.f32.mrb[0].mxu0
      %v2233 = vadd.f32 0.0, %v2232
      %v2234 = vpop.f32.mrb[0].mxu0
      %2235 = vmatprep.mubr.f32.mxu0 0.0
      %2236 = vmatmul.mubr.f32.gmra.mrb[0].mxu0 %v1014
      %v2237 = vpop.f32.mrb[0].mxu0
      %v2238 = vadd.f32 0.0, %v2237
      %v2239 = vpop.f32.mrb[0].mxu0
      %2240 = vmatprep.mubr.f32.mxu0 0.0
      %2241 = vmatmul.mubr.f32.gmra.mrb[0].mxu0 %v1017
      %v2242 = vpop.f32.mrb[0].mxu0
      %v2243 = vadd.f32 0.0, %v2242
      %v2244 = vpop.f32.mrb[0].mxu0
      %2245 = vmatprep.mubr.f32.mxu0 0.0
      %2246 = vmatmul.mubr.f32.gmra.mrb[0].mxu0 %v1020
      %v2247 = vpop.f32.mrb[0].mxu0
      %v2248 = vadd.f32 0.0, %v2247
      %v2249 = vpop.f32.mrb[0].mxu0
      %2250 = vmatprep.mubr.f32.mxu0 0.0
      %2251 = vmatmul.mubr.f32.gmra.mrb[0].mxu0 %v1023
      %v2252 = vpop.f32.mrb[0].mxu0
      %v2253 = vadd.f32 0.0, %v2252
      %v2254 = vpop.f32.mrb[0].mxu0
      %2255 = vmatprep.mubr.f32.mxu0 0.0
      %2256 = vmatmul.mubr.f32.gmra.mrb[0].mxu0 %v1026
      %v2257 = vpop.f32.mrb[0].mxu0
      %v2258 = vadd.f32 0.0, %v2257
      %v2259 = vpop.f32.mrb[0].mxu0
      %2260 = vmatprep.mubr.f32.mxu0 0.0
      %2261 = vmatmul.mubr.f32.gmra.mrb[0].mxu0 %v1029
      %v2262 = vpop.f32.mrb[0].mxu0
      %v2263 = vadd.f32 0.0, %v2262
      %v2264 = vpop.f32.mrb[0].mxu0
      %2265 = vmatprep.mubr.f32.mxu0 0.0
      %2266 = vmatmul.mubr.f32.gmra.mrb[0].mxu0 %v1032
      %v2267 = vpop.f32.mrb[0].mxu0
      %v2268 = vadd.f32 0.0, %v2267
      %v2269 = vpop.f32.mrb[0].mxu0
      %2270 = vmatprep.mubr.f32.mxu0 0.0
      %2271 = vmatmul.mubr.f32.gmra.mrb[0].mxu0 %v1035
      %v2272 = vpop.f32.mrb[0].mxu0
      %v2273 = vadd.f32 0.0, %v2272
      %v2274 = vpop.f32.mrb[0].mxu0
      %2275 = vmatprep.mubr.f32.mxu0 0.0
      %2276 = vmatmul.mubr.f32.gmra.mrb[0].mxu0 %v1038
      %v2277 = vpop.f32.mrb[0].mxu0
      %v2278 = vadd.f32 0.0, %v2277
      %v2279 = vpop.f32.mrb[0].mxu0
      %2280 = vmatprep.mubr.f32.mxu0 0.0
      %2281 = vmatmul.mubr.f32.gmra.mrb[0].mxu0 %v1041
      %v2282 = vpop.f32.mrb[0].mxu0
      %v2283 = vadd.f32 0.0, %v2282
      %v2284 = vpop.f32.mrb[0].mxu0
      %2285 = vmatprep.mubr.f32.mxu0 0.0
      %2286 = vmatmul.mubr.f32.gmra.mrb[0].mxu0 %v1044
      %v2287 = vpop.f32.mrb[0].mxu0
      %v2288 = vadd.f32 0.0, %v2287
      %v2289 = vpop.f32.mrb[0].mxu0
      %2290 = vmatprep.mubr.f32.mxu0 0.0
      %2291 = vmatmul.mubr.f32.gmra.mrb[0].mxu0 %v1047
      %v2292 = vpop.f32.mrb[0].mxu0
      %v2293 = vadd.f32 0.0, %v2292
      %v2294 = vpop.f32.mrb[0].mxu0
      %2295 = vmatprep.mubr.f32.mxu0 0.0
      %2296 = vmatmul.mubr.f32.gmra.mrb[0].mxu0 %v1050
      %v2297 = vpop.f32.mrb[0].mxu0
      %v2298 = vadd.f32 0.0, %v2297
      %v2299 = vpop.f32.mrb[0].mxu0
      %2300 = vmatprep.mubr.f32.mxu0 0.0
      %2301 = vmatmul.mubr.f32.gmra.mrb[0].mxu0 %v1053
      %v2302 = vpop.f32.mrb[0].mxu0
      %v2303 = vadd.f32 0.0, %v2302
      %v2304 = vpop.f32.mrb[0].mxu0
      %2305 = vmatprep.mubr.f32.mxu0 0.0
      %2306 = vmatmul.mubr.f32.gmra.mrb[0].mxu0 %v1056
      %v2307 = vpop.f32.mrb[0].mxu0
      %v2308 = vadd.f32 0.0, %v2307
      %v2309 = vpop.f32.mrb[0].mxu0
      %2310 = vmatprep.mubr.f32.mxu0 0.0
      %2311 = vmatmul.mubr.f32.gmra.mrb[0].mxu0 %v1059
      %v2312 = vpop.f32.mrb[0].mxu0
      %v2313 = vadd.f32 0.0, %v2312
      %v2314 = vpop.f32.mrb[0].mxu0
      %2315 = vmatprep.mubr.f32.mxu0 0.0
      %2316 = vmatmul.mubr.f32.gmra.mrb[0].mxu0 %v1062
      %v2317 = vpop.f32.mrb[0].mxu0
      %v2318 = vadd.f32 0.0, %v2317
      %v2319 = vpop.f32.mrb[0].mxu0
      %2320 = vmatprep.mubr.f32.mxu0 0.0
      %2321 = vmatmul.mubr.f32.gmra.mrb[0].mxu0 %v1065
      %v2322 = vpop.f32.mrb[0].mxu0
      %v2323 = vadd.f32 0.0, %v2322
      %v2324 = vpop.f32.mrb[0].mxu0
      %2325 = vmatprep.mubr.f32.mxu0 0.0
      %2326 = vmatmul.mubr.f32.gmra.mrb[0].mxu0 %v1068
      %v2327 = vpop.f32.mrb[0].mxu0
      %v2328 = vadd.f32 0.0, %v2327
      %v2329 = vpop.f32.mrb[0].mxu0
      %2330 = vmatprep.mubr.f32.mxu0 0.0
      %2331 = vmatmul.mubr.f32.gmra.mrb[0].mxu0 %v1071
      %v2332 = vpop.f32.mrb[0].mxu0
      %v2333 = vadd.f32 0.0, %v2332
      %v2334 = vpop.f32.mrb[0].mxu0
      %2335 = vmatprep.mubr.f32.mxu0 0.0
      %2336 = vmatmul.mubr.f32.gmra.mrb[0].mxu0 %v1074
      %v2337 = vpop.f32.mrb[0].mxu0
      %v2338 = vadd.f32 0.0, %v2337
      %v2339 = vpop.f32.mrb[0].mxu0
      %2340 = vmatprep.mubr.f32.mxu0 0.0
      %2341 = vmatmul.mubr.f32.gmra.mrb[0].mxu0 %v1077
      %v2342 = vpop.f32.mrb[0].mxu0
      %v2343 = vadd.f32 0.0, %v2342
      %v2344 = vpop.f32.mrb[0].mxu0
      %2345 = vmatprep.mubr.f32.mxu0 0.0
      %2346 = vmatmul.mubr.f32.gmra.mrb[0].mxu0 %v1080
      %v2347 = vpop.f32.mrb[0].mxu0
      %v2348 = vadd.f32 0.0, %v2347
      %v2349 = vpop.f32.mrb[0].mxu0
      %2350 = vmatprep.mubr.f32.mxu0 0.0
      %2351 = vmatmul.mubr.f32.gmra.mrb[0].mxu0 %v1083
      %v2352 = vpop.f32.mrb[0].mxu0
      %v2353 = vadd.f32 0.0, %v2352
      %v2354 = vpop.f32.mrb[0].mxu0
      %2355 = vmatprep.mubr.f32.mxu0 0.0
      %2356 = vmatmul.mubr.f32.gmra.mrb[0].mxu0 %v1086
      %v2357 = vpop.f32.mrb[0].mxu0
      %v2358 = vadd.f32 0.0, %v2357
      %v2359 = vpop.f32.mrb[0].mxu0
      %2360 = vmatprep.mubr.f32.mxu0 0.0
      %2361 = vmatmul.mubr.f32.gmra.mrb[0].mxu0 %v1089
      %v2362 = vpop.f32.mrb[0].mxu0
      %v2363 = vadd.f32 0.0, %v2362
      %v2364 = vpop.f32.mrb[0].mxu0
      %2365 = vmatprep.mubr.f32.mxu0 0.0
      %2366 = vmatmul.mubr.f32.gmra.mrb[0].mxu0 %v1092
      %v2367 = vpop.f32.mrb[0].mxu0
      %v2368 = vadd.f32 0.0, %v2367
      %v2369 = vpop.f32.mrb[0].mxu0
      %2370 = vmatprep.mubr.f32.mxu0 0.0
      %2371 = vmatmul.mubr.f32.gmra.mrb[0].mxu0 %v1095
      %v2372 = vpop.f32.mrb[0].mxu0
      %v2373 = vadd.f32 0.0, %v2372
      %v2374 = vpop.f32.mrb[0].mxu0
      %2375 = vmatprep.mubr.f32.mxu0 0.0
      %2376 = vmatmul.mubr.f32.gmra.mrb[0].mxu0 %v1098
      %v2377 = vpop.f32.mrb[0].mxu0
      %v2378 = vadd.f32 0.0, %v2377
      %v2379 = vpop.f32.mrb[0].mxu0
      %2380 = vmatprep.mubr.f32.mxu0 0.0
      %2381 = vmatmul.mubr.f32.gmra.mrb[0].mxu0 %v1101
      %v2382 = vpop.f32.mrb[0].mxu0
      %v2383 = vadd.f32 0.0, %v2382
      %v2384 = vpop.f32.mrb[0].mxu0
      %2385 = vmatprep.mubr.f32.mxu0 0.0
      %2386 = vmatmul.mubr.f32.gmra.mrb[0].mxu0 %v1104
      %v2387 = vpop.f32.mrb[0].mxu0
      %v2388 = vadd.f32 0.0, %v2387
      %v2389 = vpop.f32.mrb[0].mxu0
      %2390 = vmatprep.mubr.f32.mxu0 0.0
      %2391 = vmatmul.mubr.f32.gmra.mrb[0].mxu0 %v1107
      %v2392 = vpop.f32.mrb[0].mxu0
      %v2393 = vadd.f32 0.0, %v2392
      %v2394 = vpop.f32.mrb[0].mxu0
      %2395 = vmatprep.mubr.f32.mxu0 0.0
      %2396 = vmatmul.mubr.f32.gmra.mrb[0].mxu0 %v1110
      %v2397 = vpop.f32.mrb[0].mxu0
      %v2398 = vadd.f32 0.0, %v2397
      %v2399 = vpop.f32.mrb[0].mxu0
      %2400 = vmatprep.mubr.f32.mxu0 0.0
      %2401 = vmatmul.mubr.f32.gmra.mrb[0].mxu0 %v1113
      %v2402 = vpop.f32.mrb[0].mxu0
      %v2403 = vadd.f32 0.0, %v2402
      %v2404 = vpop.f32.mrb[0].mxu0
      %2405 = vmatprep.mubr.f32.mxu0 0.0
      %2406 = vmatmul.mubr.f32.gmra.mrb[0].mxu0 %v1116
      %v2407 = vpop.f32.mrb[0].mxu0
      %v2408 = vadd.f32 0.0, %v2407
      %v2409 = vpop.f32.mrb[0].mxu0
      %2410 = vmatprep.mubr.f32.mxu0 0.0
      %2411 = vmatmul.mubr.f32.gmra.mrb[0].mxu0 %v1119
      %v2412 = vpop.f32.mrb[0].mxu0
      %v2413 = vadd.f32 0.0, %v2412
      %v2414 = vpop.f32.mrb[0].mxu0
      %2415 = vmatprep.mubr.f32.mxu0 0.0
      %2416 = vmatmul.mubr.f32.gmra.mrb[0].mxu0 %v1122
      %v2417 = vpop.f32.mrb[0].mxu0
      %v2418 = vadd.f32 0.0, %v2417
      %v2419 = vpop.f32.mrb[0].mxu0
      %2420 = vmatprep.mubr.f32.mxu0 0.0
      %2421 = vmatmul.mubr.f32.gmra.mrb[0].mxu0 %v1125
      %v2422 = vpop.f32.mrb[0].mxu0
      %v2423 = vadd.f32 0.0, %v2422
      %v2424 = vpop.f32.mrb[0].mxu0
      %2425 = vmatprep.mubr.f32.mxu0 0.0
      %2426 = vmatmul.mubr.f32.gmra.mrb[0].mxu0 %v1128
      %v2427 = vpop.f32.mrb[0].mxu0
      %v2428 = vadd.f32 0.0, %v2427
      %v2429 = vpop.f32.mrb[0].mxu0
      %2430 = vmatprep.mubr.f32.mxu0 0.0
      %2431 = vmatmul.mubr.f32.gmra.mrb[0].mxu0 %v1131
      %v2432 = vpop.f32.mrb[0].mxu0
      %v2433 = vadd.f32 0.0, %v2432
      %v2434 = vpop.f32.mrb[0].mxu0
      %2435 = vmatprep.mubr.f32.mxu0 0.0
      %2436 = vmatmul.mubr.f32.gmra.mrb[0].mxu0 %v1134
      %v2437 = vpop.f32.mrb[0].mxu0
      %v2438 = vadd.f32 0.0, %v2437
      %v2439 = vpop.f32.mrb[0].mxu0
      %2440 = vmatprep.mubr.f32.mxu0 0.0
      %2441 = vmatmul.mubr.f32.gmra.mrb[0].mxu0 %v1137
      %v2442 = vpop.f32.mrb[0].mxu0
      %v2443 = vadd.f32 0.0, %v2442
      %v2444 = vpop.f32.mrb[0].mxu0
      %2445 = vmatprep.mubr.f32.mxu0 0.0
      %2446 = vmatmul.mubr.f32.gmra.mrb[0].mxu0 %v1140
      %v2447 = vpop.f32.mrb[0].mxu0
      %v2448 = vadd.f32 0.0, %v2447
      %v2449 = vpop.f32.mrb[0].mxu0
      %2450 = vmatprep.mubr.f32.mxu0 0.0
      %2451 = vmatmul.mubr.f32.gmra.mrb[0].mxu0 %v1143
      %v2452 = vpop.f32.mrb[0].mxu0
      %v2453 = vadd.f32 0.0, %v2452
      %v2454 = vpop.f32.mrb[0].mxu0
      %2455 = vmatprep.mubr.f32.mxu0 0.0
      %2456 = vmatmul.mubr.f32.gmra.mrb[0].mxu0 %v1146
      %v2457 = vpop.f32.mrb[0].mxu0
      %v2458 = vadd.f32 0.0, %v2457
      %v2459 = vpop.f32.mrb[0].mxu0
      %2460 = vmatprep.mubr.f32.mxu0 0.0
      %2461 = vmatmul.mubr.f32.gmra.mrb[0].mxu0 %v1149
      %v2462 = vpop.f32.mrb[0].mxu0
      %v2463 = vadd.f32 0.0, %v2462
      %v2464 = vpop.f32.mrb[0].mxu0
      %2465 = vmatprep.mubr.f32.mxu0 0.0
      %2466 = vmatmul.mubr.f32.gmra.mrb[0].mxu0 %v1152
      %v2467 = vpop.f32.mrb[0].mxu0
      %v2468 = vadd.f32 0.0, %v2467
      %v2469 = vpop.f32.mrb[0].mxu0
      %2470 = vmatprep.mubr.f32.mxu0 0.0
      %2471 = vmatmul.mubr.f32.gmra.mrb[0].mxu0 %v1155
      %v2472 = vpop.f32.mrb[0].mxu0
      %v2473 = vadd.f32 0.0, %v2472
      %v2474 = vpop.f32.mrb[0].mxu0
      %2475 = vmatprep.mubr.f32.mxu0 0.0
      %2476 = vmatmul.mubr.f32.gmra.mrb[0].mxu0 %v1158
      %v2477 = vpop.f32.mrb[0].mxu0
      %v2478 = vadd.f32 0.0, %v2477
      %v2479 = vpop.f32.mrb[0].mxu0
      %2480 = vmatprep.mubr.f32.mxu0 0.0
      %2481 = vmatmul.mubr.f32.gmra.mrb[0].mxu0 %v1161
      %v2482 = vpop.f32.mrb[0].mxu0
      %v2483 = vadd.f32 0.0, %v2482
      %v2484 = vpop.f32.mrb[0].mxu0
      %2485 = vmatprep.mubr.f32.mxu0 0.0
      %2486 = vmatmul.mubr.f32.gmra.mrb[0].mxu0 %v1164
      %v2487 = vpop.f32.mrb[0].mxu0
      %v2488 = vadd.f32 0.0, %v2487
      %v2489 = vpop.f32.mrb[0].mxu0
      %2490 = vmatprep.mubr.f32.mxu0 0.0
      %2491 = vmatmul.mubr.f32.gmra.mrb[0].mxu0 %v1167
      %v2492 = vpop.f32.mrb[0].mxu0
      %v2493 = vadd.f32 0.0, %v2492
      %v2494 = vpop.f32.mrb[0].mxu0
      %2495 = vmatprep.mubr.f32.mxu0 0.0
      %2496 = vmatmul.mubr.f32.gmra.mrb[0].mxu0 %v1170
      %v2497 = vpop.f32.mrb[0].mxu0
      %v2498 = vadd.f32 0.0, %v2497
      %v2499 = vpop.f32.mrb[0].mxu0
      %2500 = vmatprep.mubr.f32.mxu0 0.0
      %2501 = vmatmul.mubr.f32.gmra.mrb[0].mxu0 %v1173
      %v2502 = vpop.f32.mrb[0].mxu0
      %v2503 = vadd.f32 0.0, %v2502
      %v2504 = vpop.f32.mrb[0].mxu0
      %2505 = vmatprep.mubr.f32.mxu0 0.0
      %2506 = vmatmul.mubr.f32.gmra.mrb[0].mxu0 %v1176
      %v2507 = vpop.f32.mrb[0].mxu0
      %v2508 = vadd.f32 0.0, %v2507
      %v2509 = vpop.f32.mrb[0].mxu0
      %2510 = vmatprep.mubr.f32.mxu0 0.0
      %2511 = vmatmul.mubr.f32.gmra.mrb[0].mxu0 %v1179
      %v2512 = vpop.f32.mrb[0].mxu0
      %v2513 = vadd.f32 0.0, %v2512
      %v2514 = vpop.f32.mrb[0].mxu0
      %2515 = vmatprep.mubr.f32.mxu0 0.0
      %2516 = vmatmul.mubr.f32.gmra.mrb[0].mxu0 %v1182
      %v2517 = vpop.f32.mrb[0].mxu0
      %v2518 = vadd.f32 0.0, %v2517
      %v2519 = vpop.f32.mrb[0].mxu0
      %2520 = vmatprep.mubr.f32.mxu0 0.0
      %2521 = vmatmul.mubr.f32.gmra.mrb[0].mxu0 %v1185
      %v2522 = vpop.f32.mrb[0].mxu0
      %v2523 = vadd.f32 0.0, %v2522
      %v2524 = vpop.f32.mrb[0].mxu0
      %2525 = vmatprep.mubr.f32.mxu0 0.0
      %2526 = vmatmul.mubr.f32.gmra.mrb[0].mxu0 %v1188
      %v2527 = vpop.f32.mrb[0].mxu0
      %v2528 = vadd.f32 0.0, %v2527
      %v2529 = vpop.f32.mrb[0].mxu0
      %2530 = vmatprep.mubr.f32.mxu0 0.0
      %2531 = vmatmul.mubr.f32.gmra.mrb[0].mxu0 %v1191
      %v2532 = vpop.f32.mrb[0].mxu0
      %v2533 = vadd.f32 0.0, %v2532
      %v2534 = vpop.f32.mrb[0].mxu0
      %2535 = vmatprep.mubr.f32.mxu0 0.0
      %2536 = vmatmul.mubr.f32.gmra.mrb[0].mxu0 %v1194
      %v2537 = vpop.f32.mrb[0].mxu0
      %v2538 = vadd.f32 0.0, %v2537
      %v2539 = vpop.f32.mrb[0].mxu0
      %2540 = vmatprep.mubr.f32.mxu0 0.0
      %2541 = vmatmul.mubr.f32.gmra.mrb[0].mxu0 %v1197
      %v2542 = vpop.f32.mrb[0].mxu0
      %v2543 = vadd.f32 0.0, %v2542
      %v2544 = vpop.f32.mrb[0].mxu0
      %2545 = vmatprep.mubr.f32.mxu0 0.0
      %2546 = vmatmul.mubr.f32.gmra.mrb[0].mxu0 %v1200
      %v2547 = vpop.f32.mrb[0].mxu0
      %v2548 = vadd.f32 0.0, %v2547
      %v2549 = vpop.f32.mrb[0].mxu0
      %2550 = vdwg.mxu0
      %v2551 = vmax.f32 %v1273, %v1593
      %v2552 = vmax.f32 %v1278, %v1598
      %v2553 = vmax.f32 %v1283, %v1603
      %v2554 = vmax.f32 %v1288, %v1608
      %v2555 = vmax.f32 %v1293, %v1613
      %v2556 = vmax.f32 %v1298, %v1618
      %v2557 = vmax.f32 %v1303, %v1623
      %v2558 = vmax.f32 %v1308, %v1628
      %v2559 = vmax.f32 %v1313, %v1633
      %v2560 = vmax.f32 %v1318, %v1638
      %v2561 = vmax.f32 %v1323, %v1643
      %v2562 = vmax.f32 %v1328, %v1648
      %v2563 = vmax.f32 %v1333, %v1653
      %v2564 = vmax.f32 %v1338, %v1658
      %v2565 = vmax.f32 %v1343, %v1663
      %v2566 = vmax.f32 %v1348, %v1668
      %v2567 = vmax.f32 %v1353, %v1673
      %v2568 = vmax.f32 %v1358, %v1678
      %v2569 = vmax.f32 %v1363, %v1683
      %v2570 = vmax.f32 %v1368, %v1688
      %v2571 = vmax.f32 %v1373, %v1693
      %v2572 = vmax.f32 %v1378, %v1698
      %v2573 = vmax.f32 %v1383, %v1703
      %v2574 = vmax.f32 %v1388, %v1708
      %v2575 = vmax.f32 %v1393, %v1713
      %v2576 = vmax.f32 %v1398, %v1718
      %v2577 = vmax.f32 %v1403, %v1723
      %v2578 = vmax.f32 %v1408, %v1728
      %v2579 = vmax.f32 %v1413, %v1733
      %v2580 = vmax.f32 %v1418, %v1738
      %v2581 = vmax.f32 %v1423, %v1743
      %v2582 = vmax.f32 %v1428, %v1748
      %v2583 = vmax.f32 %v1433, %v1753
      %v2584 = vmax.f32 %v1438, %v1758
      %v2585 = vmax.f32 %v1443, %v1763
      %v2586 = vmax.f32 %v1448, %v1768
      %v2587 = vmax.f32 %v1453, %v1773
      %v2588 = vmax.f32 %v1458, %v1778
      %v2589 = vmax.f32 %v1463, %v1783
      %v2590 = vmax.f32 %v1468, %v1788
      %v2591 = vmax.f32 %v1473, %v1793
      %v2592 = vmax.f32 %v1478, %v1798
      %v2593 = vmax.f32 %v1483, %v1803
      %v2594 = vmax.f32 %v1488, %v1808
      %v2595 = vmax.f32 %v1493, %v1813
      %v2596 = vmax.f32 %v1498, %v1818
      %v2597 = vmax.f32 %v1503, %v1823
      %v2598 = vmax.f32 %v1508, %v1828
      %v2599 = vmax.f32 %v1513, %v1833
      %v2600 = vmax.f32 %v1518, %v1838
      %v2601 = vmax.f32 %v1523, %v1843
      %v2602 = vmax.f32 %v1528, %v1848
      %v2603 = vmax.f32 %v1533, %v1853
      %v2604 = vmax.f32 %v1538, %v1858
      %v2605 = vmax.f32 %v1543, %v1863
      %v2606 = vmax.f32 %v1548, %v1868
      %v2607 = vmax.f32 %v1553, %v1873
      %v2608 = vmax.f32 %v1558, %v1878
      %v2609 = vmax.f32 %v1563, %v1883
      %v2610 = vmax.f32 %v1568, %v1888
      %v2611 = vmax.f32 %v1573, %v1893
      %v2612 = vmax.f32 %v1578, %v1898
      %v2613 = vmax.f32 %v1583, %v1903
      %v2614 = vmax.f32 %v1588, %v1908
      %v2615 = vmax.f32 %v1913, %v2233
      %v2616 = vmax.f32 %v1918, %v2238
      %v2617 = vmax.f32 %v1923, %v2243
      %v2618 = vmax.f32 %v1928, %v2248
      %v2619 = vmax.f32 %v1933, %v2253
      %v2620 = vmax.f32 %v1938, %v2258
      %v2621 = vmax.f32 %v1943, %v2263
      %v2622 = vmax.f32 %v1948, %v2268
      %v2623 = vmax.f32 %v1953, %v2273
      %v2624 = vmax.f32 %v1958, %v2278
      %v2625 = vmax.f32 %v1963, %v2283
      %v2626 = vmax.f32 %v1968, %v2288
      %v2627 = vmax.f32 %v1973, %v2293
      %v2628 = vmax.f32 %v1978, %v2298
      %v2629 = vmax.f32 %v1983, %v2303
      %v2630 = vmax.f32 %v1988, %v2308
      %v2631 = vmax.f32 %v1993, %v2313
      %v2632 = vmax.f32 %v1998, %v2318
      %v2633 = vmax.f32 %v2003, %v2323
      %v2634 = vmax.f32 %v2008, %v2328
      %v2635 = vmax.f32 %v2013, %v2333
      %v2636 = vmax.f32 %v2018, %v2338
      %v2637 = vmax.f32 %v2023, %v2343
      %v2638 = vmax.f32 %v2028, %v2348
      %v2639 = vmax.f32 %v2033, %v2353
      %v2640 = vmax.f32 %v2038, %v2358
      %v2641 = vmax.f32 %v2043, %v2363
      %v2642 = vmax.f32 %v2048, %v2368
      %v2643 = vmax.f32 %v2053, %v2373
      %v2644 = vmax.f32 %v2058, %v2378
      %v2645 = vmax.f32 %v2063, %v2383
      %v2646 = vmax.f32 %v2068, %v2388
      %v2647 = vmax.f32 %v2073, %v2393
      %v2648 = vmax.f32 %v2078, %v2398
      %v2649 = vmax.f32 %v2083, %v2403
      %v2650 = vmax.f32 %v2088, %v2408
      %v2651 = vmax.f32 %v2093, %v2413
      %v2652 = vmax.f32 %v2098, %v2418
      %v2653 = vmax.f32 %v2103, %v2423
      %v2654 = vmax.f32 %v2108, %v2428
      %v2655 = vmax.f32 %v2113, %v2433
      %v2656 = vmax.f32 %v2118, %v2438
      %v2657 = vmax.f32 %v2123, %v2443
      %v2658 = vmax.f32 %v2128, %v2448
      %v2659 = vmax.f32 %v2133, %v2453
      %v2660 = vmax.f32 %v2138, %v2458
      %v2661 = vmax.f32 %v2143, %v2463
      %v2662 = vmax.f32 %v2148, %v2468
      %v2663 = vmax.f32 %v2153, %v2473
      %v2664 = vmax.f32 %v2158, %v2478
      %v2665 = vmax.f32 %v2163, %v2483
      %v2666 = vmax.f32 %v2168, %v2488
      %v2667 = vmax.f32 %v2173, %v2493
      %v2668 = vmax.f32 %v2178, %v2498
      %v2669 = vmax.f32 %v2183, %v2503
      %v2670 = vmax.f32 %v2188, %v2508
      %v2671 = vmax.f32 %v2193, %v2513
      %v2672 = vmax.f32 %v2198, %v2518
      %v2673 = vmax.f32 %v2203, %v2523
      %v2674 = vmax.f32 %v2208, %v2528
      %v2675 = vmax.f32 %v2213, %v2533
      %v2676 = vmax.f32 %v2218, %v2538
      %v2677 = vmax.f32 %v2223, %v2543
      %v2678 = vmax.f32 %v2228, %v2548
      %v2679 = vmax.f32 %v2551, %v2615
      %v2680 = vmax.f32 %v2552, %v2616
      %v2681 = vmax.f32 %v2553, %v2617
      %v2682 = vmax.f32 %v2554, %v2618
      %v2683 = vmax.f32 %v2555, %v2619
      %v2684 = vmax.f32 %v2556, %v2620
      %v2685 = vmax.f32 %v2557, %v2621
      %v2686 = vmax.f32 %v2558, %v2622
      %v2687 = vmax.f32 %v2559, %v2623
      %v2688 = vmax.f32 %v2560, %v2624
      %v2689 = vmax.f32 %v2561, %v2625
      %v2690 = vmax.f32 %v2562, %v2626
      %v2691 = vmax.f32 %v2563, %v2627
      %v2692 = vmax.f32 %v2564, %v2628
      %v2693 = vmax.f32 %v2565, %v2629
      %v2694 = vmax.f32 %v2566, %v2630
      %v2695 = vmax.f32 %v2567, %v2631
      %v2696 = vmax.f32 %v2568, %v2632
      %v2697 = vmax.f32 %v2569, %v2633
      %v2698 = vmax.f32 %v2570, %v2634
      %v2699 = vmax.f32 %v2571, %v2635
      %v2700 = vmax.f32 %v2572, %v2636
      %v2701 = vmax.f32 %v2573, %v2637
      %v2702 = vmax.f32 %v2574, %v2638
      %v2703 = vmax.f32 %v2575, %v2639
      %v2704 = vmax.f32 %v2576, %v2640
      %v2705 = vmax.f32 %v2577, %v2641
      %v2706 = vmax.f32 %v2578, %v2642
      %v2707 = vmax.f32 %v2579, %v2643
      %v2708 = vmax.f32 %v2580, %v2644
      %v2709 = vmax.f32 %v2581, %v2645
      %v2710 = vmax.f32 %v2582, %v2646
      %v2711 = vmax.f32 %v2583, %v2647
      %v2712 = vmax.f32 %v2584, %v2648
      %v2713 = vmax.f32 %v2585, %v2649
      %v2714 = vmax.f32 %v2586, %v2650
      %v2715 = vmax.f32 %v2587, %v2651
      %v2716 = vmax.f32 %v2588, %v2652
      %v2717 = vmax.f32 %v2589, %v2653
      %v2718 = vmax.f32 %v2590, %v2654
      %v2719 = vmax.f32 %v2591, %v2655
      %v2720 = vmax.f32 %v2592, %v2656
      %v2721 = vmax.f32 %v2593, %v2657
      %v2722 = vmax.f32 %v2594, %v2658
      %v2723 = vmax.f32 %v2595, %v2659
      %v2724 = vmax.f32 %v2596, %v2660
      %v2725 = vmax.f32 %v2597, %v2661
      %v2726 = vmax.f32 %v2598, %v2662
      %v2727 = vmax.f32 %v2599, %v2663
      %v2728 = vmax.f32 %v2600, %v2664
      %v2729 = vmax.f32 %v2601, %v2665
      %v2730 = vmax.f32 %v2602, %v2666
      %v2731 = vmax.f32 %v2603, %v2667
      %v2732 = vmax.f32 %v2604, %v2668
      %v2733 = vmax.f32 %v2605, %v2669
      %v2734 = vmax.f32 %v2606, %v2670
      %v2735 = vmax.f32 %v2607, %v2671
      %v2736 = vmax.f32 %v2608, %v2672
      %v2737 = vmax.f32 %v2609, %v2673
      %v2738 = vmax.f32 %v2610, %v2674
      %v2739 = vmax.f32 %v2611, %v2675
      %v2740 = vmax.f32 %v2612, %v2676
      %v2741 = vmax.f32 %v2613, %v2677
      %v2742 = vmax.f32 %v2614, %v2678
      %v2743 = vld [vmem:[%s2] sm:$0x1]
      %v2745 = vlaneseq
      %v2746 = vshrl.u32 %v2745, 7
      %v2747 = vsub.s32 0, %v2746
      %v2748 = vrot.slane %v2743, %v2747
      %v2750 = vadd.f32 %v2679, %v2748
      %v2751 = vadd.f32 %v2680, %v2748
      %v2752 = vadd.f32 %v2681, %v2748
      %v2753 = vadd.f32 %v2682, %v2748
      %v2754 = vadd.f32 %v2683, %v2748
      %v2755 = vadd.f32 %v2684, %v2748
      %v2756 = vadd.f32 %v2685, %v2748
      %v2757 = vadd.f32 %v2686, %v2748
      %v2758 = vadd.f32 %v2687, %v2748
      %v2759 = vadd.f32 %v2688, %v2748
      %v2760 = vadd.f32 %v2689, %v2748
      %v2761 = vadd.f32 %v2690, %v2748
      %v2762 = vadd.f32 %v2691, %v2748
      %v2763 = vadd.f32 %v2692, %v2748
      %v2764 = vadd.f32 %v2693, %v2748
      %v2765 = vadd.f32 %v2694, %v2748
      %v2766 = vadd.f32 %v2695, %v2748
      %v2767 = vadd.f32 %v2696, %v2748
      %v2768 = vadd.f32 %v2697, %v2748
      %v2769 = vadd.f32 %v2698, %v2748
      %v2770 = vadd.f32 %v2699, %v2748
      %v2771 = vadd.f32 %v2700, %v2748
      %v2772 = vadd.f32 %v2701, %v2748
      %v2773 = vadd.f32 %v2702, %v2748
      %v2774 = vadd.f32 %v2703, %v2748
      %v2775 = vadd.f32 %v2704, %v2748
      %v2776 = vadd.f32 %v2705, %v2748
      %v2777 = vadd.f32 %v2706, %v2748
      %v2778 = vadd.f32 %v2707, %v2748
      %v2779 = vadd.f32 %v2708, %v2748
      %v2780 = vadd.f32 %v2709, %v2748
      %v2781 = vadd.f32 %v2710, %v2748
      %v2782 = vadd.f32 %v2711, %v2748
      %v2783 = vadd.f32 %v2712, %v2748
      %v2784 = vadd.f32 %v2713, %v2748
      %v2785 = vadd.f32 %v2714, %v2748
      %v2786 = vadd.f32 %v2715, %v2748
      %v2787 = vadd.f32 %v2716, %v2748
      %v2788 = vadd.f32 %v2717, %v2748
      %v2789 = vadd.f32 %v2718, %v2748
      %v2790 = vadd.f32 %v2719, %v2748
      %v2791 = vadd.f32 %v2720, %v2748
      %v2792 = vadd.f32 %v2721, %v2748
      %v2793 = vadd.f32 %v2722, %v2748
      %v2794 = vadd.f32 %v2723, %v2748
      %v2795 = vadd.f32 %v2724, %v2748
      %v2796 = vadd.f32 %v2725, %v2748
      %v2797 = vadd.f32 %v2726, %v2748
      %v2798 = vadd.f32 %v2727, %v2748
      %v2799 = vadd.f32 %v2728, %v2748
      %v2800 = vadd.f32 %v2729, %v2748
      %v2801 = vadd.f32 %v2730, %v2748
      %v2802 = vadd.f32 %v2731, %v2748
      %v2803 = vadd.f32 %v2732, %v2748
      %v2804 = vadd.f32 %v2733, %v2748
      %v2805 = vadd.f32 %v2734, %v2748
      %v2806 = vadd.f32 %v2735, %v2748
      %v2807 = vadd.f32 %v2736, %v2748
      %v2808 = vadd.f32 %v2737, %v2748
      %v2809 = vadd.f32 %v2738, %v2748
      %v2810 = vadd.f32 %v2739, %v2748
      %v2811 = vadd.f32 %v2740, %v2748
      %v2812 = vadd.f32 %v2741, %v2748
      %v2813 = vadd.f32 %v2742, %v2748
      %v2814 = vmax.f32 %v2750, 0.0
      %v2815 = vmax.f32 %v2751, 0.0
      %v2816 = vmax.f32 %v2752, 0.0
      %v2817 = vmax.f32 %v2753, 0.0
      %v2818 = vmax.f32 %v2754, 0.0
      %v2819 = vmax.f32 %v2755, 0.0
      %v2820 = vmax.f32 %v2756, 0.0
      %v2821 = vmax.f32 %v2757, 0.0
      %v2822 = vmax.f32 %v2758, 0.0
      %v2823 = vmax.f32 %v2759, 0.0
      %v2824 = vmax.f32 %v2760, 0.0
      %v2825 = vmax.f32 %v2761, 0.0
      %v2826 = vmax.f32 %v2762, 0.0
      %v2827 = vmax.f32 %v2763, 0.0
      %v2828 = vmax.f32 %v2764, 0.0
      %v2829 = vmax.f32 %v2765, 0.0
      %v2830 = vmax.f32 %v2766, 0.0
      %v2831 = vmax.f32 %v2767, 0.0
      %v2832 = vmax.f32 %v2768, 0.0
      %v2833 = vmax.f32 %v2769, 0.0
      %v2834 = vmax.f32 %v2770, 0.0
      %v2835 = vmax.f32 %v2771, 0.0
      %v2836 = vmax.f32 %v2772, 0.0
      %v2837 = vmax.f32 %v2773, 0.0
      %v2838 = vmax.f32 %v2774, 0.0
      %v2839 = vmax.f32 %v2775, 0.0
      %v2840 = vmax.f32 %v2776, 0.0
      %v2841 = vmax.f32 %v2777, 0.0
      %v2842 = vmax.f32 %v2778, 0.0
      %v2843 = vmax.f32 %v2779, 0.0
      %v2844 = vmax.f32 %v2780, 0.0
      %v2845 = vmax.f32 %v2781, 0.0
      %v2846 = vmax.f32 %v2782, 0.0
      %v2847 = vmax.f32 %v2783, 0.0
      %v2848 = vmax.f32 %v2784, 0.0
      %v2849 = vmax.f32 %v2785, 0.0
      %v2850 = vmax.f32 %v2786, 0.0
      %v2851 = vmax.f32 %v2787, 0.0
      %v2852 = vmax.f32 %v2788, 0.0
      %v2853 = vmax.f32 %v2789, 0.0
      %v2854 = vmax.f32 %v2790, 0.0
      %v2855 = vmax.f32 %v2791, 0.0
      %v2856 = vmax.f32 %v2792, 0.0
      %v2857 = vmax.f32 %v2793, 0.0
      %v2858 = vmax.f32 %v2794, 0.0
      %v2859 = vmax.f32 %v2795, 0.0
      %v2860 = vmax.f32 %v2796, 0.0
      %v2861 = vmax.f32 %v2797, 0.0
      %v2862 = vmax.f32 %v2798, 0.0
      %v2863 = vmax.f32 %v2799, 0.0
      %v2864 = vmax.f32 %v2800, 0.0
      %v2865 = vmax.f32 %v2801, 0.0
      %v2866 = vmax.f32 %v2802, 0.0
      %v2867 = vmax.f32 %v2803, 0.0
      %v2868 = vmax.f32 %v2804, 0.0
      %v2869 = vmax.f32 %v2805, 0.0
      %v2870 = vmax.f32 %v2806, 0.0
      %v2871 = vmax.f32 %v2807, 0.0
      %v2872 = vmax.f32 %v2808, 0.0
      %v2873 = vmax.f32 %v2809, 0.0
      %v2874 = vmax.f32 %v2810, 0.0
      %v2875 = vmax.f32 %v2811, 0.0
      %v2876 = vmax.f32 %v2812, 0.0
      %v2877 = vmax.f32 %v2813, 0.0
      %vm2878 = vcmask 64512
      %2879 = vst.msk [vmem:[%s170] sm:$0xff] %vm2878, %v2814
      %2880 = vst.msk [vmem:[%s170 + $0x8] sm:$0xff] %vm2878, %v2815
      %2881 = vst.msk [vmem:[%s170 + $0x10] sm:$0xff] %vm2878, %v2816
      %2882 = vst.msk [vmem:[%s170 + $0x18] sm:$0xff] %vm2878, %v2817
      %2883 = vst.msk [vmem:[%s170 + $0x20] sm:$0xff] %vm2878, %v2818
      %2884 = vst.msk [vmem:[%s170 + $0x28] sm:$0xff] %vm2878, %v2819
      %2885 = vst.msk [vmem:[%s170 + $0x30] sm:$0xff] %vm2878, %v2820
      %2886 = vst.msk [vmem:[%s170 + $0x38] sm:$0xff] %vm2878, %v2821
      %2887 = vst.msk [vmem:[%s170 + $0x40] sm:$0xff] %vm2878, %v2822
      %2888 = vst.msk [vmem:[%s170 + $0x48] sm:$0xff] %vm2878, %v2823
      %2889 = vst.msk [vmem:[%s170 + $0x50] sm:$0xff] %vm2878, %v2824
      %2890 = vst.msk [vmem:[%s170 + $0x58] sm:$0xff] %vm2878, %v2825
      %2891 = vst.msk [vmem:[%s170 + $0x60] sm:$0xff] %vm2878, %v2826
      %2892 = vst.msk [vmem:[%s170 + $0x68] sm:$0xff] %vm2878, %v2827
      %2893 = vst.msk [vmem:[%s170 + $0x70] sm:$0xff] %vm2878, %v2828
      %2894 = vst.msk [vmem:[%s170 + $0x78] sm:$0xff] %vm2878, %v2829
      %2895 = vst.msk [vmem:[%s170 + $0x80] sm:$0xff] %vm2878, %v2830
      %2896 = vst.msk [vmem:[%s170 + $0x88] sm:$0xff] %vm2878, %v2831
      %2897 = vst.msk [vmem:[%s170 + $0x90] sm:$0xff] %vm2878, %v2832
      %2898 = vst.msk [vmem:[%s170 + $0x98] sm:$0xff] %vm2878, %v2833
      %2899 = vst.msk [vmem:[%s170 + $0xa0] sm:$0xff] %vm2878, %v2834
      %2900 = vst.msk [vmem:[%s170 + $0xa8] sm:$0xff] %vm2878, %v2835
      %2901 = vst.msk [vmem:[%s170 + $0xb0] sm:$0xff] %vm2878, %v2836
      %2902 = vst.msk [vmem:[%s170 + $0xb8] sm:$0xff] %vm2878, %v2837
      %2903 = vst.msk [vmem:[%s170 + $0xc0] sm:$0xff] %vm2878, %v2838
      %2904 = vst.msk [vmem:[%s170 + $0xc8] sm:$0xff] %vm2878, %v2839
      %2905 = vst.msk [vmem:[%s170 + $0xd0] sm:$0xff] %vm2878, %v2840
      %2906 = vst.msk [vmem:[%s170 + $0xd8] sm:$0xff] %vm2878, %v2841
      %2907 = vst.msk [vmem:[%s170 + $0xe0] sm:$0xff] %vm2878, %v2842
      %2908 = vst.msk [vmem:[%s170 + $0xe8] sm:$0xff] %vm2878, %v2843
      %2909 = vst.msk [vmem:[%s170 + $0xf0] sm:$0xff] %vm2878, %v2844
      %2910 = vst.msk [vmem:[%s170 + $0xf8] sm:$0xff] %vm2878, %v2845
      %2911 = vst.msk [vmem:[%s170 + $0x100] sm:$0xff] %vm2878, %v2846
      %2912 = vst.msk [vmem:[%s170 + $0x108] sm:$0xff] %vm2878, %v2847
      %2913 = vst.msk [vmem:[%s170 + $0x110] sm:$0xff] %vm2878, %v2848
      %2914 = vst.msk [vmem:[%s170 + $0x118] sm:$0xff] %vm2878, %v2849
      %2915 = vst.msk [vmem:[%s170 + $0x120] sm:$0xff] %vm2878, %v2850
      %2916 = vst.msk [vmem:[%s170 + $0x128] sm:$0xff] %vm2878, %v2851
      %2917 = vst.msk [vmem:[%s170 + $0x130] sm:$0xff] %vm2878, %v2852
      %2918 = vst.msk [vmem:[%s170 + $0x138] sm:$0xff] %vm2878, %v2853
      %2919 = vst.msk [vmem:[%s170 + $0x140] sm:$0xff] %vm2878, %v2854
      %2920 = vst.msk [vmem:[%s170 + $0x148] sm:$0xff] %vm2878, %v2855
      %2921 = vst.msk [vmem:[%s170 + $0x150] sm:$0xff] %vm2878, %v2856
      %2922 = vst.msk [vmem:[%s170 + $0x158] sm:$0xff] %vm2878, %v2857
      %2923 = vst.msk [vmem:[%s170 + $0x160] sm:$0xff] %vm2878, %v2858
      %2924 = vst.msk [vmem:[%s170 + $0x168] sm:$0xff] %vm2878, %v2859
      %2925 = vst.msk [vmem:[%s170 + $0x170] sm:$0xff] %vm2878, %v2860
      %2926 = vst.msk [vmem:[%s170 + $0x178] sm:$0xff] %vm2878, %v2861
      %2927 = vst.msk [vmem:[%s170 + $0x180] sm:$0xff] %vm2878, %v2862
      %2928 = vst.msk [vmem:[%s170 + $0x188] sm:$0xff] %vm2878, %v2863
      %2929 = vst.msk [vmem:[%s170 + $0x190] sm:$0xff] %vm2878, %v2864
      %2930 = vst.msk [vmem:[%s170 + $0x198] sm:$0xff] %vm2878, %v2865
      %2931 = vst.msk [vmem:[%s170 + $0x1a0] sm:$0xff] %vm2878, %v2866
      %2932 = vst.msk [vmem:[%s170 + $0x1a8] sm:$0xff] %vm2878, %v2867
      %2933 = vst.msk [vmem:[%s170 + $0x1b0] sm:$0xff] %vm2878, %v2868
      %2934 = vst.msk [vmem:[%s170 + $0x1b8] sm:$0xff] %vm2878, %v2869
      %2935 = vst.msk [vmem:[%s170 + $0x1c0] sm:$0xff] %vm2878, %v2870
      %2936 = vst.msk [vmem:[%s170 + $0x1c8] sm:$0xff] %vm2878, %v2871
      %2937 = vst.msk [vmem:[%s170 + $0x1d0] sm:$0xff] %vm2878, %v2872
      %2938 = vst.msk [vmem:[%s170 + $0x1d8] sm:$0xff] %vm2878, %v2873
      %2939 = vst.msk [vmem:[%s170 + $0x1e0] sm:$0xff] %vm2878, %v2874
      %2940 = vst.msk [vmem:[%s170 + $0x1e8] sm:$0xff] %vm2878, %v2875
      %2941 = vst.msk [vmem:[%s170 + $0x1f0] sm:$0xff] %vm2878, %v2876
      %2942 = vst.msk [vmem:[%s170 + $0x1f8] sm:$0xff] %vm2878, %v2877
      %s2943 = smul.u32 64, %s14
      %p2944 = scmp.lt.s32.totalorder %s2943, 127
      %s2945 = scalar_select %p2944, %s2943, 127
      %s2946 = smul.addr %s2945, 8
      %s2947 = scalar_lea.vmem %s3, %s2946
      // Predicated region
      $region33: #{cnn_lstm_forward.2} parent=31 // pred_check
        %p2948 = pneg %p100
      $region34: #{cnn_lstm_forward.2} parent=31 // pred_check_branch
        %2950 = sbr.rel (%p2948) target = $region36
      $region35: #{cnn_lstm_forward.2} parent=31 // pred_region
        %s2951 = smul.u32 64, %s14
      $region36: #{cnn_lstm_forward.2} parent=31 // pred_fallthru
        _
    $region32: #{cnn_lstm_forward.2} parent=5 // pred_fallthru
      _
    %p2952 = scmp.le.s32.totalorder 2, %s9
    // Predicated region
    $region37: #{cnn_lstm_forward.2} parent=5 // pred_check
      %p2953 = pneg %p2952
    $region38: #{cnn_lstm_forward.2} parent=5 // pred_check_branch
      %2955 = sbr.rel (%p2953) target = $region40
    $region39: #{cnn_lstm_forward.2} parent=5 // pred_region
      %s2956 = ssub.s32 %s9, 2
      // Predicated region
      $region41: #{cnn_lstm_forward.2} parent=39 // pred_check
        %p2957 = pneg %p106
      $region42: #{cnn_lstm_forward.2} parent=39 // pred_check_branch
        %2959 = sbr.rel (%p2957) target = $region44
      $region43: #{cnn_lstm_forward.2} parent=39 // pred_region
        %s2960 = smul.u32 64, %s15
        %p2961 = scmp.lt.s32.totalorder %s2960, 127
        %s2962 = scalar_select %p2961, %s2960, 127
        %s2963 = smul.addr %s2962, 8
        %s2964 = scalar_lea.vmem %s3, %s2963
      $region44: #{cnn_lstm_forward.2} parent=39 // pred_fallthru
        _
    $region40: #{cnn_lstm_forward.2} parent=5 // pred_fallthru
      _
  $region6: #{cnn_lstm_forward.2} parent=0 // loop_footer
    %s13 = sadd.s32 1, %s9
  $region7: #{cnn_lstm_forward.2} parent=0 // loop_footer_branch
    %8 = sbr.rel target = $region3
  $region8: #{cnn_lstm_forward.2} parent=0 // loop_exit
    _

// kernel: cnn_lstm_forward.3
$region0: #{cnn_lstm_forward.3}
  #allocation0 [shape = 'u32[]', space=smem, size = 0x4, offset = 0x4, fixed_abs, tag = 'smem constant byte address 0x4 - core index']
  #allocation1 [shape = 'u32[144,128]{1,0:T(1,128)}', space=vmem, size = 0x12000, scoped, tag = 'internal scratch']
  %s0 = inlined_call_operand.vmem [shape: f32[16,512], index: 0, kind: input, shape index: {}]
  %s1 = inlined_call_operand.vmem [shape: f32[2,2,32], index: 1, kind: input, shape index: {}]
  %s2 = inlined_call_operand.vmem [shape: f32[2,2,32], index: 2, kind: input, shape index: {}]
  %s3 = inlined_call_operand.vmem [shape: f32[512,128], index: 3, kind: input, shape index: {}]
  %s4 = inlined_call_operand.vmem [shape: f32[32,128], index: 4, kind: input, shape index: {}]
  %s5 = inlined_call_operand.vmem [shape: f32[1,128], index: 5, kind: input, shape index: {}]
  %s6 = inlined_call_operand.vmem [shape: f32[32,128], index: 6, kind: input, shape index: {}]
  %s7 = inlined_call_operand.vmem [shape: f32[32,128], index: 7, kind: input, shape index: {}]
  %s8 = inlined_call_operand.vmem [shape: f32[1,128], index: 8, kind: input, shape index: {}]
  %s9 = inlined_call_operand.vmem [shape: f32[32,10], index: 9, kind: input, shape index: {}]
  %s10 = inlined_call_operand.vmem [shape: f32[1,10], index: 10, kind: input, shape index: {}]
  %s11 = inlined_call_operand.hbm [shape: f32[2,10], index: 11, kind: output, shape index: {}]
  %s12 = sld [smem:[#allocation0]]
  $region54: #{cnn_lstm_forward.3} parent=0
    _
  %s14 = ssub.s32 1, %s12
  %s15 = scalar_select 0, %s14, %s12
  $region1: #{cnn_lstm_forward.3} parent=0
    #allocation2 [shape = 'u8[1024]{0}', space=vmem, size = 0x400, scoped, tag = 'output window, operand 0, single buffered']
    #allocation3 [shape = 's32[1]{0}', space=sflag, size = 0x4, scoped, tag = 'scoped memory for cnn_lstm_forward.3']
    %16 = vsyncpa [#allocation3], 0
    // Predicated region
    $region2: #{cnn_lstm_forward.3} parent=1 // pred_check
      _
    $region3: #{cnn_lstm_forward.3} parent=1 // pred_check_branch
      %18 = sbr.rel (0) target = $region5
    $region4: #{cnn_lstm_forward.3} parent=1 // pred_region
      _
    $region5: #{cnn_lstm_forward.3} parent=1 // pred_fallthru
      _
    // Predicated region
    $region6: #{cnn_lstm_forward.3} parent=1 // pred_check
      _
    $region7: #{cnn_lstm_forward.3} parent=1 // pred_check_branch
      %20 = sbr.rel (0) target = $region9
    $region8: #{cnn_lstm_forward.3} parent=1 // pred_region
      _
    $region9: #{cnn_lstm_forward.3} parent=1 // pred_fallthru
      _
    // Predicated region
    $region10: #{cnn_lstm_forward.3} parent=1 // pred_check
      _
    $region11: #{cnn_lstm_forward.3} parent=1 // pred_check_branch
      %22 = sbr.rel (0) target = $region13
    $region12: #{cnn_lstm_forward.3} parent=1 // pred_region
      _
    $region13: #{cnn_lstm_forward.3} parent=1 // pred_fallthru
      _
    // Predicated region
    $region14: #{cnn_lstm_forward.3} parent=1 // pred_check
      _
    $region15: #{cnn_lstm_forward.3} parent=1 // pred_check_branch
      %24 = sbr.rel (0) target = $region17
    $region16: #{cnn_lstm_forward.3} parent=1 // pred_region
      _
    $region17: #{cnn_lstm_forward.3} parent=1 // pred_fallthru
      _
    // Predicated region
    $region18: #{cnn_lstm_forward.3} parent=1 // pred_check
      _
    $region19: #{cnn_lstm_forward.3} parent=1 // pred_check_branch
      %26 = sbr.rel (0) target = $region21
    $region20: #{cnn_lstm_forward.3} parent=1 // pred_region
      _
    $region21: #{cnn_lstm_forward.3} parent=1 // pred_fallthru
      _
    // Predicated region
    $region22: #{cnn_lstm_forward.3} parent=1 // pred_check
      _
    $region23: #{cnn_lstm_forward.3} parent=1 // pred_check_branch
      %28 = sbr.rel (0) target = $region25
    $region24: #{cnn_lstm_forward.3} parent=1 // pred_region
      _
    $region25: #{cnn_lstm_forward.3} parent=1 // pred_fallthru
      _
    // Predicated region
    $region26: #{cnn_lstm_forward.3} parent=1 // pred_check
      _
    $region27: #{cnn_lstm_forward.3} parent=1 // pred_check_branch
      %30 = sbr.rel (0) target = $region29
    $region28: #{cnn_lstm_forward.3} parent=1 // pred_region
      _
    $region29: #{cnn_lstm_forward.3} parent=1 // pred_fallthru
      _
    // Predicated region
    $region30: #{cnn_lstm_forward.3} parent=1 // pred_check
      _
    $region31: #{cnn_lstm_forward.3} parent=1 // pred_check_branch
      %32 = sbr.rel (0) target = $region33
    $region32: #{cnn_lstm_forward.3} parent=1 // pred_region
      _
    $region33: #{cnn_lstm_forward.3} parent=1 // pred_fallthru
      _
    // Predicated region
    $region34: #{cnn_lstm_forward.3} parent=1 // pred_check
      _
    $region35: #{cnn_lstm_forward.3} parent=1 // pred_check_branch
      %34 = sbr.rel (0) target = $region37
    $region36: #{cnn_lstm_forward.3} parent=1 // pred_region
      _
    $region37: #{cnn_lstm_forward.3} parent=1 // pred_fallthru
      _
    // Predicated region
    $region38: #{cnn_lstm_forward.3} parent=1 // pred_check
      _
    $region39: #{cnn_lstm_forward.3} parent=1 // pred_check_branch
      %36 = sbr.rel (0) target = $region41
    $region40: #{cnn_lstm_forward.3} parent=1 // pred_region
      _
    $region41: #{cnn_lstm_forward.3} parent=1 // pred_fallthru
      _
    // Predicated region
    $region42: #{cnn_lstm_forward.3} parent=1 // pred_check
      _
    $region43: #{cnn_lstm_forward.3} parent=1 // pred_check_branch
      %38 = sbr.rel (0) target = $region45
    $region44: #{cnn_lstm_forward.3} parent=1 // pred_region
      _
    $region45: #{cnn_lstm_forward.3} parent=1 // pred_fallthru
      _
    %v39 = vld [vmem:[%s0] sm:$0xff]
    %v40 = vld [vmem:[%s0 + $0x8] sm:$0xff]
    %v41 = vld [vmem:[%s0 + $0x10] sm:$0xff]
    %v42 = vld [vmem:[%s0 + $0x18] sm:$0xff]
    %v43 = vld [vmem:[%s0 + $0x20] sm:$0xff]
    %v44 = vld [vmem:[%s0 + $0x28] sm:$0xff]
    %v45 = vld [vmem:[%s0 + $0x30] sm:$0xff]
    %v46 = vld [vmem:[%s0 + $0x38] sm:$0xff]
    %v47 = vld [vmem:[%s3] sm:$0xff]
    %v48 = vld [vmem:[%s3 + $0x8] sm:$0xff]
    %v49 = vld [vmem:[%s3 + $0x10] sm:$0xff]
    %v50 = vld [vmem:[%s3 + $0x18] sm:$0xff]
    %v51 = vld [vmem:[%s3 + $0x20] sm:$0xff]
    %v52 = vld [vmem:[%s3 + $0x28] sm:$0xff]
    %v53 = vld [vmem:[%s3 + $0x30] sm:$0xff]
    %v54 = vld [vmem:[%s3 + $0x38] sm:$0xff]
    %v55 = vld [vmem:[%s3 + $0x40] sm:$0xff]
    %v56 = vld [vmem:[%s3 + $0x48] sm:$0xff]
    %v57 = vld [vmem:[%s3 + $0x50] sm:$0xff]
    %v58 = vld [vmem:[%s3 + $0x58] sm:$0xff]
    %v59 = vld [vmem:[%s3 + $0x60] sm:$0xff]
    %v60 = vld [vmem:[%s3 + $0x68] sm:$0xff]
    %v61 = vld [vmem:[%s3 + $0x70] sm:$0xff]
    %v62 = vld [vmem:[%s3 + $0x78] sm:$0xff]
    %v63 = vld [vmem:[%s3 + $0x80] sm:$0xff]
    %v64 = vld [vmem:[%s3 + $0x88] sm:$0xff]
    %v65 = vld [vmem:[%s3 + $0x90] sm:$0xff]
    %v66 = vld [vmem:[%s3 + $0x98] sm:$0xff]
    %v67 = vld [vmem:[%s3 + $0xa0] sm:$0xff]
    %v68 = vld [vmem:[%s3 + $0xa8] sm:$0xff]
    %v69 = vld [vmem:[%s3 + $0xb0] sm:$0xff]
    %v70 = vld [vmem:[%s3 + $0xb8] sm:$0xff]
    %v71 = vld [vmem:[%s3 + $0xc0] sm:$0xff]
    %v72 = vld [vmem:[%s3 + $0xc8] sm:$0xff]
    %v73 = vld [vmem:[%s3 + $0xd0] sm:$0xff]
    %v74 = vld [vmem:[%s3 + $0xd8] sm:$0xff]
    %v75 = vld [vmem:[%s3 + $0xe0] sm:$0xff]
    %v76 = vld [vmem:[%s3 + $0xe8] sm:$0xff]
    %v77 = vld [vmem:[%s3 + $0xf0] sm:$0xff]
    %v78 = vld [vmem:[%s3 + $0xf8] sm:$0xff]
    %v79 = vld [vmem:[%s3 + $0x100] sm:$0xff]
    %v80 = vld [vmem:[%s3 + $0x108] sm:$0xff]
    %v81 = vld [vmem:[%s3 + $0x110] sm:$0xff]
    %v82 = vld [vmem:[%s3 + $0x118] sm:$0xff]
    %v83 = vld [vmem:[%s3 + $0x120] sm:$0xff]
    %v84 = vld [vmem:[%s3 + $0x128] sm:$0xff]
    %v85 = vld [vmem:[%s3 + $0x130] sm:$0xff]
    %v86 = vld [vmem:[%s3 + $0x138] sm:$0xff]
    %v87 = vld [vmem:[%s3 + $0x140] sm:$0xff]
    %v88 = vld [vmem:[%s3 + $0x148] sm:$0xff]
    %v89 = vld [vmem:[%s3 + $0x150] sm:$0xff]
    %v90 = vld [vmem:[%s3 + $0x158] sm:$0xff]
    %v91 = vld [vmem:[%s3 + $0x160] sm:$0xff]
    %v92 = vld [vmem:[%s3 + $0x168] sm:$0xff]
    %v93 = vld [vmem:[%s3 + $0x170] sm:$0xff]
    %v94 = vld [vmem:[%s3 + $0x178] sm:$0xff]
    %v95 = vld [vmem:[%s3 + $0x180] sm:$0xff]
    %v96 = vld [vmem:[%s3 + $0x188] sm:$0xff]
    %v97 = vld [vmem:[%s3 + $0x190] sm:$0xff]
    %v98 = vld [vmem:[%s3 + $0x198] sm:$0xff]
    %v99 = vld [vmem:[%s3 + $0x1a0] sm:$0xff]
    %v100 = vld [vmem:[%s3 + $0x1a8] sm:$0xff]
    %v101 = vld [vmem:[%s3 + $0x1b0] sm:$0xff]
    %v102 = vld [vmem:[%s3 + $0x1b8] sm:$0xff]
    %v103 = vld [vmem:[%s3 + $0x1c0] sm:$0xff]
    %v104 = vld [vmem:[%s3 + $0x1c8] sm:$0xff]
    %v105 = vld [vmem:[%s3 + $0x1d0] sm:$0xff]
    %v106 = vld [vmem:[%s3 + $0x1d8] sm:$0xff]
    %v107 = vld [vmem:[%s3 + $0x1e0] sm:$0xff]
    %v108 = vld [vmem:[%s3 + $0x1e8] sm:$0xff]
    %v109 = vld [vmem:[%s3 + $0x1f0] sm:$0xff]
    %v110 = vld [vmem:[%s3 + $0x1f8] sm:$0xff]
    %v111 = vld [vmem:[%s5] sm:$0x1]
    %v113 = vlaneseq
    %v114 = vshrl.u32 %v113, 7
    %v115 = vsub.s32 0, %v114
    %v116 = vrot.slane %v111, %v115
    %118 = vmatprep.subr.mxu0 0.0
    %119 = vmatpush1.msra.mxu0 %v47
    %120 = vmatprep.subr.mxu0 0.0
    %121 = vmatpush1.msra.mxu0 %v48
    %122 = vmatprep.subr.mxu0 0.0
    %123 = vmatpush1.msra.mxu0 %v49
    %124 = vmatprep.subr.mxu0 0.0
    %125 = vmatpush1.msra.mxu0 %v50
    %126 = vmatprep.subr.mxu0 0.0
    %127 = vmatpush1.msra.mxu0 %v51
    %128 = vmatprep.subr.mxu0 0.0
    %129 = vmatpush1.msra.mxu0 %v52
    %130 = vmatprep.subr.mxu0 0.0
    %131 = vmatpush1.msra.mxu0 %v53
    %132 = vmatprep.subr.mxu0 0.0
    %133 = vmatpush1.msra.mxu0 %v54
    %134 = vmatprep.subr.mxu0 0.0
    %135 = vmatpush1.msra.mxu0 %v55
    %136 = vmatprep.subr.mxu0 0.0
    %137 = vmatpush1.msra.mxu0 %v56
    %138 = vmatprep.subr.mxu0 0.0
    %139 = vmatpush1.msra.mxu0 %v57
    %140 = vmatprep.subr.mxu0 0.0
    %141 = vmatpush1.msra.mxu0 %v58
    %142 = vmatprep.subr.mxu0 0.0
    %143 = vmatpush1.msra.mxu0 %v59
    %144 = vmatprep.subr.mxu0 0.0
    %145 = vmatpush1.msra.mxu0 %v60
    %146 = vmatprep.subr.mxu0 0.0
    %147 = vmatpush1.msra.mxu0 %v61
    %148 = vmatprep.subr.mxu0 0.0
    %149 = vmatpush1.msra.mxu0 %v62
    %150 = vmatprep.subr.mxu0 0.0
    %151 = vmatpush1.msra.mxu0 %v63
    %152 = vmatprep.subr.mxu0 0.0
    %153 = vmatpush1.msra.mxu0 %v64
    %154 = vmatprep.subr.mxu0 0.0
    %155 = vmatpush1.msra.mxu0 %v65
    %156 = vmatprep.subr.mxu0 0.0
    %157 = vmatpush1.msra.mxu0 %v66
    %158 = vmatprep.subr.mxu0 0.0
    %159 = vmatpush1.msra.mxu0 %v67
    %160 = vmatprep.subr.mxu0 0.0
    %161 = vmatpush1.msra.mxu0 %v68
    %162 = vmatprep.subr.mxu0 0.0
    %163 = vmatpush1.msra.mxu0 %v69
    %164 = vmatprep.subr.mxu0 0.0
    %165 = vmatpush1.msra.mxu0 %v70
    %166 = vmatprep.subr.mxu0 0.0
    %167 = vmatpush1.msra.mxu0 %v71
    %168 = vmatprep.subr.mxu0 0.0
    %169 = vmatpush1.msra.mxu0 %v72
    %170 = vmatprep.subr.mxu0 0.0
    %171 = vmatpush1.msra.mxu0 %v73
    %172 = vmatprep.subr.mxu0 0.0
    %173 = vmatpush1.msra.mxu0 %v74
    %174 = vmatprep.subr.mxu0 0.0
    %175 = vmatpush1.msra.mxu0 %v75
    %176 = vmatprep.subr.mxu0 0.0
    %177 = vmatpush1.msra.mxu0 %v76
    %178 = vmatprep.subr.mxu0 0.0
    %179 = vmatpush1.msra.mxu0 %v77
    %180 = vmatprep.subr.mxu0 0.0
    %181 = vmatpush1.msra.mxu0 %v78
    %182 = vmatprep.mubr.f32.mxu0 %v40
    %183 = vmatmul.mubr.f32.gmra.mrb[0].mxu0 %v39
    %v184 = vpop.f32.mrb[0].mxu0
    %v185 = vadd.f32 %v116, %v184
    %v186 = vpop.f32.mrb[0].mxu0
    %187 = vmatprep.mubr.f32.mxu0 %v44
    %188 = vmatmul.mubr.f32.gmra.mrb[0].mxu0 %v43
    %v189 = vpop.f32.mrb[0].mxu0
    %v190 = vadd.f32 %v116, %v189
    %v191 = vpop.f32.mrb[0].mxu0
    %192 = vdwg.mxu0
    %193 = vmatprep.subr.mxu0 0.0
    %194 = vmatpush1.msra.mxu0 %v79
    %195 = vmatprep.subr.mxu0 0.0
    %196 = vmatpush1.msra.mxu0 %v80
    %197 = vmatprep.subr.mxu0 0.0
    %198 = vmatpush1.msra.mxu0 %v81
    %199 = vmatprep.subr.mxu0 0.0
    %200 = vmatpush1.msra.mxu0 %v82
    %201 = vmatprep.subr.mxu0 0.0
    %202 = vmatpush1.msra.mxu0 %v83
    %203 = vmatprep.subr.mxu0 0.0
    %204 = vmatpush1.msra.mxu0 %v84
    %205 = vmatprep.subr.mxu0 0.0
    %206 = vmatpush1.msra.mxu0 %v85
    %207 = vmatprep.subr.mxu0 0.0
    %208 = vmatpush1.msra.mxu0 %v86
    %209 = vmatprep.subr.mxu0 0.0
    %210 = vmatpush1.msra.mxu0 %v87
    %211 = vmatprep.subr.mxu0 0.0
    %212 = vmatpush1.msra.mxu0 %v88
    %213 = vmatprep.subr.mxu0 0.0
    %214 = vmatpush1.msra.mxu0 %v89
    %215 = vmatprep.subr.mxu0 0.0
    %216 = vmatpush1.msra.mxu0 %v90
    %217 = vmatprep.subr.mxu0 0.0
    %218 = vmatpush1.msra.mxu0 %v91
    %219 = vmatprep.subr.mxu0 0.0
    %220 = vmatpush1.msra.mxu0 %v92
    %221 = vmatprep.subr.mxu0 0.0
    %222 = vmatpush1.msra.mxu0 %v93
    %223 = vmatprep.subr.mxu0 0.0
    %224 = vmatpush1.msra.mxu0 %v94
    %225 = vmatprep.subr.mxu0 0.0
    %226 = vmatpush1.msra.mxu0 %v95
    %227 = vmatprep.subr.mxu0 0.0
    %228 = vmatpush1.msra.mxu0 %v96
    %229 = vmatprep.subr.mxu0 0.0
    %230 = vmatpush1.msra.mxu0 %v97
    %231 = vmatprep.subr.mxu0 0.0
    %232 = vmatpush1.msra.mxu0 %v98
    %233 = vmatprep.subr.mxu0 0.0
    %234 = vmatpush1.msra.mxu0 %v99
    %235 = vmatprep.subr.mxu0 0.0
    %236 = vmatpush1.msra.mxu0 %v100
    %237 = vmatprep.subr.mxu0 0.0
    %238 = vmatpush1.msra.mxu0 %v101
    %239 = vmatprep.subr.mxu0 0.0
    %240 = vmatpush1.msra.mxu0 %v102
    %241 = vmatprep.subr.mxu0 0.0
    %242 = vmatpush1.msra.mxu0 %v103
    %243 = vmatprep.subr.mxu0 0.0
    %244 = vmatpush1.msra.mxu0 %v104
    %245 = vmatprep.subr.mxu0 0.0
    %246 = vmatpush1.msra.mxu0 %v105
    %247 = vmatprep.subr.mxu0 0.0
    %248 = vmatpush1.msra.mxu0 %v106
    %249 = vmatprep.subr.mxu0 0.0
    %250 = vmatpush1.msra.mxu0 %v107
    %251 = vmatprep.subr.mxu0 0.0
    %252 = vmatpush1.msra.mxu0 %v108
    %253 = vmatprep.subr.mxu0 0.0
    %254 = vmatpush1.msra.mxu0 %v109
    %255 = vmatprep.subr.mxu0 0.0
    %256 = vmatpush1.msra.mxu0 %v110
    %257 = vmatprep.mubr.f32.mxu0 %v42
    %258 = vmatmul.mubr.f32.gmra.mrb[0].mxu0 %v41
    %v259 = vpop.f32.mrb[0].mxu0
    %v260 = vadd.f32 %v185, %v259
    %v261 = vpop.f32.mrb[0].mxu0
    %262 = vmatprep.mubr.f32.mxu0 %v46
    %263 = vmatmul.mubr.f32.gmra.mrb[0].mxu0 %v45
    %v264 = vpop.f32.mrb[0].mxu0
    %v265 = vadd.f32 %v190, %v264
    %v266 = vpop.f32.mrb[0].mxu0
    %267 = vdwg.mxu0
    %v268 = vld [vmem:[%s4] sm:$0xff]
    %v269 = vld [vmem:[%s4 + $0x8] sm:$0xff]
    %v270 = vld [vmem:[%s4 + $0x10] sm:$0xff]
    %v271 = vld [vmem:[%s4 + $0x18] sm:$0xff]
    %v272 = vld [vmem:[%s6] sm:$0xff]
    %v273 = vld [vmem:[%s6 + $0x8] sm:$0xff]
    %v274 = vld [vmem:[%s6 + $0x10] sm:$0xff]
    %v275 = vld [vmem:[%s6 + $0x18] sm:$0xff]
    %v276 = vld [vmem:[%s7] sm:$0xff]
    %v277 = vld [vmem:[%s7 + $0x8] sm:$0xff]
    %v278 = vld [vmem:[%s7 + $0x10] sm:$0xff]
    %v279 = vld [vmem:[%s7 + $0x18] sm:$0xff]
    %v280 = vld [vmem:[%s8] sm:$0x1]
    %v281 = vld [vmem:[%s1] sm:$0x3]
    %v282 = vld [vmem:[%s2] sm:$0x3]
    %s283 = scalar_lea.vmem %s1, 2
    %v284 = vld [vmem:[%s283] sm:$0x3]
    %s285 = scalar_lea.vmem %s2, 2
    %v286 = vld [vmem:[%s285] sm:$0x3]
    %vm287 = vcmask 261120
    %v289 = vsel %vm287, %v281, 0
    %291 = vmatprep.subr.mxu0 0.0
    %292 = vmatpush1.msra.mxu0 %v268
    %293 = vmatprep.subr.mxu0 0.0
    %294 = vmatpush1.msra.mxu0 %v269
    %295 = vmatprep.subr.mxu0 0.0
    %296 = vmatpush1.msra.mxu0 %v270
    %297 = vmatprep.subr.mxu0 0.0
    %298 = vmatpush1.msra.mxu0 %v271
    %299 = vmatprep.subr.mxu0 0.0
    %300 = vmatpush1.msra.mxu0 0.0
    %301 = vmatprep.subr.mxu0 0.0
    %302 = vmatpush1.msra.mxu0 0.0
    %303 = vmatprep.subr.mxu0 0.0
    %304 = vmatpush1.msra.mxu0 0.0
    %305 = vmatprep.subr.mxu0 0.0
    %306 = vmatpush1.msra.mxu0 0.0
    %307 = vmatprep.subr.mxu0 0.0
    %308 = vmatpush1.msra.mxu0 0.0
    %309 = vmatprep.subr.mxu0 0.0
    %310 = vmatpush1.msra.mxu0 0.0
    %311 = vmatprep.subr.mxu0 0.0
    %312 = vmatpush1.msra.mxu0 0.0
    %313 = vmatprep.subr.mxu0 0.0
    %314 = vmatpush1.msra.mxu0 0.0
    %315 = vmatprep.subr.mxu0 0.0
    %316 = vmatpush1.msra.mxu0 0.0
    %317 = vmatprep.subr.mxu0 0.0
    %318 = vmatpush1.msra.mxu0 0.0
    %319 = vmatprep.subr.mxu0 0.0
    %320 = vmatpush1.msra.mxu0 0.0
    %321 = vmatprep.subr.mxu0 0.0
    %322 = vmatpush1.msra.mxu0 0.0
    %323 = vmatprep.subr.mxu0 0.0
    %324 = vmatpush1.msra.mxu0 0.0
    %325 = vmatprep.subr.mxu0 0.0
    %326 = vmatpush1.msra.mxu0 0.0
    %327 = vmatprep.subr.mxu0 0.0
    %328 = vmatpush1.msra.mxu0 0.0
    %329 = vmatprep.subr.mxu0 0.0
    %330 = vmatpush1.msra.mxu0 0.0
    %331 = vmatprep.subr.mxu0 0.0
    %332 = vmatpush1.msra.mxu0 0.0
    %333 = vmatprep.subr.mxu0 0.0
    %334 = vmatpush1.msra.mxu0 0.0
    %335 = vmatprep.subr.mxu0 0.0
    %336 = vmatpush1.msra.mxu0 0.0
    %337 = vmatprep.subr.mxu0 0.0
    %338 = vmatpush1.msra.mxu0 0.0
    %339 = vmatprep.subr.mxu0 0.0
    %340 = vmatpush1.msra.mxu0 0.0
    %341 = vmatprep.subr.mxu0 0.0
    %342 = vmatpush1.msra.mxu0 0.0
    %343 = vmatprep.subr.mxu0 0.0
    %344 = vmatpush1.msra.mxu0 0.0
    %345 = vmatprep.subr.mxu0 0.0
    %346 = vmatpush1.msra.mxu0 0.0
    %347 = vmatprep.subr.mxu0 0.0
    %348 = vmatpush1.msra.mxu0 0.0
    %349 = vmatprep.subr.mxu0 0.0
    %350 = vmatpush1.msra.mxu0 0.0
    %351 = vmatprep.subr.mxu0 0.0
    %352 = vmatpush1.msra.mxu0 0.0
    %353 = vmatprep.subr.mxu0 0.0
    %354 = vmatpush1.msra.mxu0 0.0
    %355 = vmatprep.mubr.f32.mxu0 0.0
    %356 = vmatmul.mubr.f32.gmra.mrb[0].mxu0 %v289
    %v357 = vpop.f32.mrb[0].mxu0
    %v358 = vadd.f32 0.0, %v357
    %v359 = vpop.f32.mrb[0].mxu0
    %360 = vdwg.mxu0
    %v361 = vadd.f32 %v260, %v358
    %v362 = vxor.u32 %v361, 2147483648
    %v363 = vmul.f32 %v362, 1.442695
    %v364 = vpow.pop %v363
    %v365 = vadd.f32 %v364, 1.0
    %v366 = vrcp.pop %v365
    %v367 = vmul.f32 1.0, %v366
    %v368 = vtanh.pop %v361
    %370 = vrot.lane.b32.xlu0 %v282, 32
    %v371 = vpop.permute.xlu0 %370
    %v373 = vmul.f32 %v367, %v371
    %375 = vrot.lane.b32.xlu0 %v368, 32
    %v376 = vpop.permute.xlu0 %375
    %v378 = vmul.f32 %v367, %v376
    %380 = vrot.lane.b32.xlu0 %v378, 32
    %v381 = vpop.permute.xlu0 %380
    %v383 = vadd.f32 %v373, %v381
    %v384 = vtanh.pop %v383
    %386 = vrot.lane.b32.xlu0 %v384, 32
    %v387 = vpop.permute.xlu0 %386
    %v389 = vmul.f32 %v367, %v387
    %v391 = vsel %vm287, %v284, 0
    %393 = vmatprep.subr.mxu0 0.0
    %394 = vmatpush1.msra.mxu0 %v276
    %395 = vmatprep.subr.mxu0 0.0
    %396 = vmatpush1.msra.mxu0 %v277
    %397 = vmatprep.subr.mxu0 0.0
    %398 = vmatpush1.msra.mxu0 %v278
    %399 = vmatprep.subr.mxu0 0.0
    %400 = vmatpush1.msra.mxu0 %v279
    %401 = vmatprep.subr.mxu0 0.0
    %402 = vmatpush1.msra.mxu0 0.0
    %403 = vmatprep.subr.mxu0 0.0
    %404 = vmatpush1.msra.mxu0 0.0
    %405 = vmatprep.subr.mxu0 0.0
    %406 = vmatpush1.msra.mxu0 0.0
    %407 = vmatprep.subr.mxu0 0.0
    %408 = vmatpush1.msra.mxu0 0.0
    %409 = vmatprep.subr.mxu0 0.0
    %410 = vmatpush1.msra.mxu0 0.0
    %411 = vmatprep.subr.mxu0 0.0
    %412 = vmatpush1.msra.mxu0 0.0
    %413 = vmatprep.subr.mxu0 0.0
    %414 = vmatpush1.msra.mxu0 0.0
    %415 = vmatprep.subr.mxu0 0.0
    %416 = vmatpush1.msra.mxu0 0.0
    %417 = vmatprep.subr.mxu0 0.0
    %418 = vmatpush1.msra.mxu0 0.0
    %419 = vmatprep.subr.mxu0 0.0
    %420 = vmatpush1.msra.mxu0 0.0
    %421 = vmatprep.subr.mxu0 0.0
    %422 = vmatpush1.msra.mxu0 0.0
    %423 = vmatprep.subr.mxu0 0.0
    %424 = vmatpush1.msra.mxu0 0.0
    %425 = vmatprep.subr.mxu0 0.0
    %426 = vmatpush1.msra.mxu0 0.0
    %427 = vmatprep.subr.mxu0 0.0
    %428 = vmatpush1.msra.mxu0 0.0
    %429 = vmatprep.subr.mxu0 0.0
    %430 = vmatpush1.msra.mxu0 0.0
    %431 = vmatprep.subr.mxu0 0.0
    %432 = vmatpush1.msra.mxu0 0.0
    %433 = vmatprep.subr.mxu0 0.0
    %434 = vmatpush1.msra.mxu0 0.0
    %435 = vmatprep.subr.mxu0 0.0
    %436 = vmatpush1.msra.mxu0 0.0
    %437 = vmatprep.subr.mxu0 0.0
    %438 = vmatpush1.msra.mxu0 0.0
    %439 = vmatprep.subr.mxu0 0.0
    %440 = vmatpush1.msra.mxu0 0.0
    %441 = vmatprep.subr.mxu0 0.0
    %442 = vmatpush1.msra.mxu0 0.0
    %443 = vmatprep.subr.mxu0 0.0
    %444 = vmatpush1.msra.mxu0 0.0
    %445 = vmatprep.subr.mxu0 0.0
    %446 = vmatpush1.msra.mxu0 0.0
    %447 = vmatprep.subr.mxu0 0.0
    %448 = vmatpush1.msra.mxu0 0.0
    %449 = vmatprep.subr.mxu0 0.0
    %450 = vmatpush1.msra.mxu0 0.0
    %451 = vmatprep.subr.mxu0 0.0
    %452 = vmatpush1.msra.mxu0 0.0
    %453 = vmatprep.subr.mxu0 0.0
    %454 = vmatpush1.msra.mxu0 0.0
    %455 = vmatprep.subr.mxu0 0.0
    %456 = vmatpush1.msra.mxu0 0.0
    %457 = vmatprep.mubr.f32.mxu0 0.0
    %458 = vmatmul.mubr.f32.gmra.mrb[0].mxu0 %v391
    %v459 = vpop.f32.mrb[0].mxu0
    %v460 = vadd.f32 0.0, %v459
    %v461 = vpop.f32.mrb[0].mxu0
    %462 = vdwg.mxu0
    %464 = vrot.lane.b32.xlu0 %v389, 64
    %v465 = vpop.permute.xlu0 %464
    %v466 = vsel %vm287, %v465, 0
    %468 = vmatprep.subr.mxu0 0.0
    %469 = vmatpush1.msra.mxu0 %v272
    %470 = vmatprep.subr.mxu0 0.0
    %471 = vmatpush1.msra.mxu0 %v273
    %472 = vmatprep.subr.mxu0 0.0
    %473 = vmatpush1.msra.mxu0 %v274
    %474 = vmatprep.subr.mxu0 0.0
    %475 = vmatpush1.msra.mxu0 %v275
    %476 = vmatprep.subr.mxu0 0.0
    %477 = vmatpush1.msra.mxu0 0.0
    %478 = vmatprep.subr.mxu0 0.0
    %479 = vmatpush1.msra.mxu0 0.0
    %480 = vmatprep.subr.mxu0 0.0
    %481 = vmatpush1.msra.mxu0 0.0
    %482 = vmatprep.subr.mxu0 0.0
    %483 = vmatpush1.msra.mxu0 0.0
    %484 = vmatprep.subr.mxu0 0.0
    %485 = vmatpush1.msra.mxu0 0.0
    %486 = vmatprep.subr.mxu0 0.0
    %487 = vmatpush1.msra.mxu0 0.0
    %488 = vmatprep.subr.mxu0 0.0
    %489 = vmatpush1.msra.mxu0 0.0
    %490 = vmatprep.subr.mxu0 0.0
    %491 = vmatpush1.msra.mxu0 0.0
    %492 = vmatprep.subr.mxu0 0.0
    %493 = vmatpush1.msra.mxu0 0.0
    %494 = vmatprep.subr.mxu0 0.0
    %495 = vmatpush1.msra.mxu0 0.0
    %496 = vmatprep.subr.mxu0 0.0
    %497 = vmatpush1.msra.mxu0 0.0
    %498 = vmatprep.subr.mxu0 0.0
    %499 = vmatpush1.msra.mxu0 0.0
    %500 = vmatprep.subr.mxu0 0.0
    %501 = vmatpush1.msra.mxu0 0.0
    %502 = vmatprep.subr.mxu0 0.0
    %503 = vmatpush1.msra.mxu0 0.0
    %504 = vmatprep.subr.mxu0 0.0
    %505 = vmatpush1.msra.mxu0 0.0
    %506 = vmatprep.subr.mxu0 0.0
    %507 = vmatpush1.msra.mxu0 0.0
    %508 = vmatprep.subr.mxu0 0.0
    %509 = vmatpush1.msra.mxu0 0.0
    %510 = vmatprep.subr.mxu0 0.0
    %511 = vmatpush1.msra.mxu0 0.0
    %512 = vmatprep.subr.mxu0 0.0
    %513 = vmatpush1.msra.mxu0 0.0
    %514 = vmatprep.subr.mxu0 0.0
    %515 = vmatpush1.msra.mxu0 0.0
    %516 = vmatprep.subr.mxu0 0.0
    %517 = vmatpush1.msra.mxu0 0.0
    %518 = vmatprep.subr.mxu0 0.0
    %519 = vmatpush1.msra.mxu0 0.0
    %520 = vmatprep.subr.mxu0 0.0
    %521 = vmatpush1.msra.mxu0 0.0
    %522 = vmatprep.subr.mxu0 0.0
    %523 = vmatpush1.msra.mxu0 0.0
    %524 = vmatprep.subr.mxu0 0.0
    %525 = vmatpush1.msra.mxu0 0.0
    %526 = vmatprep.subr.mxu0 0.0
    %527 = vmatpush1.msra.mxu0 0.0
    %528 = vmatprep.subr.mxu0 0.0
    %529 = vmatpush1.msra.mxu0 0.0
    %530 = vmatprep.subr.mxu0 0.0
    %531 = vmatpush1.msra.mxu0 0.0
    %532 = vmatprep.mubr.f32.mxu0 0.0
    %533 = vmatmul.mubr.f32.gmra.mrb[0].mxu0 %v466
    %v534 = vpop.f32.mrb[0].mxu0
    %v535 = vadd.f32 %v460, %v534
    %v536 = vpop.f32.mrb[0].mxu0
    %537 = vdwg.mxu0
    %v539 = vlaneseq
    %v540 = vshrl.u32 %v539, 7
    %v541 = vsub.s32 0, %v540
    %v542 = vrot.slane %v280, %v541
    %v544 = vadd.f32 %v535, %v542
    %v545 = vxor.u32 %v544, 2147483648
    %v546 = vmul.f32 %v545, 1.442695
    %v547 = vpow.pop %v546
    %v548 = vadd.f32 %v547, 1.0
    %v549 = vrcp.pop %v548
    %v550 = vmul.f32 1.0, %v549
    %v551 = vtanh.pop %v544
    %553 = vrot.lane.b32.xlu0 %v286, 32
    %v554 = vpop.permute.xlu0 %553
    %v556 = vmul.f32 %v550, %v554
    %558 = vrot.lane.b32.xlu0 %v551, 32
    %v559 = vpop.permute.xlu0 %558
    %v561 = vmul.f32 %v550, %v559
    %563 = vrot.lane.b32.xlu0 %v561, 32
    %v564 = vpop.permute.xlu0 %563
    %v566 = vadd.f32 %v556, %v564
    %v567 = vtanh.pop %v566
    %569 = vrot.lane.b32.xlu0 %v567, 32
    %v570 = vpop.permute.xlu0 %569
    %v572 = vmul.f32 %v550, %v570
    %573 = vmatprep.subr.mxu0 0.0
    %574 = vmatpush1.msra.mxu0 %v268
    %575 = vmatprep.subr.mxu0 0.0
    %576 = vmatpush1.msra.mxu0 %v269
    %577 = vmatprep.subr.mxu0 0.0
    %578 = vmatpush1.msra.mxu0 %v270
    %579 = vmatprep.subr.mxu0 0.0
    %580 = vmatpush1.msra.mxu0 %v271
    %581 = vmatprep.subr.mxu0 0.0
    %582 = vmatpush1.msra.mxu0 0.0
    %583 = vmatprep.subr.mxu0 0.0
    %584 = vmatpush1.msra.mxu0 0.0
    %585 = vmatprep.subr.mxu0 0.0
    %586 = vmatpush1.msra.mxu0 0.0
    %587 = vmatprep.subr.mxu0 0.0
    %588 = vmatpush1.msra.mxu0 0.0
    %589 = vmatprep.subr.mxu0 0.0
    %590 = vmatpush1.msra.mxu0 0.0
    %591 = vmatprep.subr.mxu0 0.0
    %592 = vmatpush1.msra.mxu0 0.0
    %593 = vmatprep.subr.mxu0 0.0
    %594 = vmatpush1.msra.mxu0 0.0
    %595 = vmatprep.subr.mxu0 0.0
    %596 = vmatpush1.msra.mxu0 0.0
    %597 = vmatprep.subr.mxu0 0.0
    %598 = vmatpush1.msra.mxu0 0.0
    %599 = vmatprep.subr.mxu0 0.0
    %600 = vmatpush1.msra.mxu0 0.0
    %601 = vmatprep.subr.mxu0 0.0
    %602 = vmatpush1.msra.mxu0 0.0
    %603 = vmatprep.subr.mxu0 0.0
    %604 = vmatpush1.msra.mxu0 0.0
    %605 = vmatprep.subr.mxu0 0.0
    %606 = vmatpush1.msra.mxu0 0.0
    %607 = vmatprep.subr.mxu0 0.0
    %608 = vmatpush1.msra.mxu0 0.0
    %609 = vmatprep.subr.mxu0 0.0
    %610 = vmatpush1.msra.mxu0 0.0
    %611 = vmatprep.subr.mxu0 0.0
    %612 = vmatpush1.msra.mxu0 0.0
    %613 = vmatprep.subr.mxu0 0.0
    %614 = vmatpush1.msra.mxu0 0.0
    %615 = vmatprep.subr.mxu0 0.0
    %616 = vmatpush1.msra.mxu0 0.0
    %617 = vmatprep.subr.mxu0 0.0
    %618 = vmatpush1.msra.mxu0 0.0
    %619 = vmatprep.subr.mxu0 0.0
    %620 = vmatpush1.msra.mxu0 0.0
    %621 = vmatprep.subr.mxu0 0.0
    %622 = vmatpush1.msra.mxu0 0.0
    %623 = vmatprep.subr.mxu0 0.0
    %624 = vmatpush1.msra.mxu0 0.0
    %625 = vmatprep.subr.mxu0 0.0
    %626 = vmatpush1.msra.mxu0 0.0
    %627 = vmatprep.subr.mxu0 0.0
    %628 = vmatpush1.msra.mxu0 0.0
    %629 = vmatprep.subr.mxu0 0.0
    %630 = vmatpush1.msra.mxu0 0.0
    %631 = vmatprep.subr.mxu0 0.0
    %632 = vmatpush1.msra.mxu0 0.0
    %633 = vmatprep.subr.mxu0 0.0
    %634 = vmatpush1.msra.mxu0 0.0
    %635 = vmatprep.subr.mxu0 0.0
    %636 = vmatpush1.msra.mxu0 0.0
    %637 = vmatprep.mubr.f32.mxu0 0.0
    %638 = vmatmul.mubr.f32.gmra.mrb[0].mxu0 %v466
    %v639 = vpop.f32.mrb[0].mxu0
    %v640 = vadd.f32 0.0, %v639
    %v641 = vpop.f32.mrb[0].mxu0
    %642 = vdwg.mxu0
    %v644 = vrot.slane %v640, 6
    %v646 = vadd.f32 %v260, %v644
    %v647 = vxor.u32 %v646, 2147483648
    %v648 = vmul.f32 %v647, 1.442695
    %v649 = vpow.pop %v648
    %v650 = vadd.f32 %v649, 1.0
    %v651 = vrcp.pop %v650
    %v652 = vmul.f32 1.0, %v651
    %v653 = vtanh.pop %v646
    %v655 = vrot.slane %v383, 6
    %v657 = vmul.f32 %v652, %v655
    %659 = vrot.lane.b32.xlu0 %v653, 32
    %v660 = vpop.permute.xlu0 %659
    %v662 = vmul.f32 %v652, %v660
    %664 = vrot.lane.b32.xlu0 %v662, 32
    %v665 = vpop.permute.xlu0 %664
    %v667 = vadd.f32 %v657, %v665
    %v668 = vtanh.pop %v667
    %670 = vrot.lane.b32.xlu0 %v668, 32
    %v671 = vpop.permute.xlu0 %670
    %v673 = vmul.f32 %v652, %v671
    %675 = vrot.lane.b32.xlu0 %v572, 64
    %v676 = vpop.permute.xlu0 %675
    %v677 = vsel %vm287, %v676, 0
    %679 = vmatprep.subr.mxu0 0.0
    %680 = vmatpush1.msra.mxu0 %v276
    %681 = vmatprep.subr.mxu0 0.0
    %682 = vmatpush1.msra.mxu0 %v277
    %683 = vmatprep.subr.mxu0 0.0
    %684 = vmatpush1.msra.mxu0 %v278
    %685 = vmatprep.subr.mxu0 0.0
    %686 = vmatpush1.msra.mxu0 %v279
    %687 = vmatprep.subr.mxu0 0.0
    %688 = vmatpush1.msra.mxu0 0.0
    %689 = vmatprep.subr.mxu0 0.0
    %690 = vmatpush1.msra.mxu0 0.0
    %691 = vmatprep.subr.mxu0 0.0
    %692 = vmatpush1.msra.mxu0 0.0
    %693 = vmatprep.subr.mxu0 0.0
    %694 = vmatpush1.msra.mxu0 0.0
    %695 = vmatprep.subr.mxu0 0.0
    %696 = vmatpush1.msra.mxu0 0.0
    %697 = vmatprep.subr.mxu0 0.0
    %698 = vmatpush1.msra.mxu0 0.0
    %699 = vmatprep.subr.mxu0 0.0
    %700 = vmatpush1.msra.mxu0 0.0
    %701 = vmatprep.subr.mxu0 0.0
    %702 = vmatpush1.msra.mxu0 0.0
    %703 = vmatprep.subr.mxu0 0.0
    %704 = vmatpush1.msra.mxu0 0.0
    %705 = vmatprep.subr.mxu0 0.0
    %706 = vmatpush1.msra.mxu0 0.0
    %707 = vmatprep.subr.mxu0 0.0
    %708 = vmatpush1.msra.mxu0 0.0
    %709 = vmatprep.subr.mxu0 0.0
    %710 = vmatpush1.msra.mxu0 0.0
    %711 = vmatprep.subr.mxu0 0.0
    %712 = vmatpush1.msra.mxu0 0.0
    %713 = vmatprep.subr.mxu0 0.0
    %714 = vmatpush1.msra.mxu0 0.0
    %715 = vmatprep.subr.mxu0 0.0
    %716 = vmatpush1.msra.mxu0 0.0
    %717 = vmatprep.subr.mxu0 0.0
    %718 = vmatpush1.msra.mxu0 0.0
    %719 = vmatprep.subr.mxu0 0.0
    %720 = vmatpush1.msra.mxu0 0.0
    %721 = vmatprep.subr.mxu0 0.0
    %722 = vmatpush1.msra.mxu0 0.0
    %723 = vmatprep.subr.mxu0 0.0
    %724 = vmatpush1.msra.mxu0 0.0
    %725 = vmatprep.subr.mxu0 0.0
    %726 = vmatpush1.msra.mxu0 0.0
    %727 = vmatprep.subr.mxu0 0.0
    %728 = vmatpush1.msra.mxu0 0.0
    %729 = vmatprep.subr.mxu0 0.0
    %730 = vmatpush1.msra.mxu0 0.0
    %731 = vmatprep.subr.mxu0 0.0
    %732 = vmatpush1.msra.mxu0 0.0
    %733 = vmatprep.subr.mxu0 0.0
    %734 = vmatpush1.msra.mxu0 0.0
    %735 = vmatprep.subr.mxu0 0.0
    %736 = vmatpush1.msra.mxu0 0.0
    %737 = vmatprep.subr.mxu0 0.0
    %738 = vmatpush1.msra.mxu0 0.0
    %739 = vmatprep.subr.mxu0 0.0
    %740 = vmatpush1.msra.mxu0 0.0
    %741 = vmatprep.subr.mxu0 0.0
    %742 = vmatpush1.msra.mxu0 0.0
    %743 = vmatprep.mubr.f32.mxu0 0.0
    %744 = vmatmul.mubr.f32.gmra.mrb[0].mxu0 %v677
    %v745 = vpop.f32.mrb[0].mxu0
    %v746 = vadd.f32 0.0, %v745
    %v747 = vpop.f32.mrb[0].mxu0
    %748 = vdwg.mxu0
    %v750 = vrot.slane %v673, 2
    %751 = vrot.lane.b32.xlu0 %v750, 64
    %v752 = vpop.permute.xlu0 %751
    %v753 = vsel %vm287, %v752, 0
    %755 = vmatprep.subr.mxu0 0.0
    %756 = vmatpush1.msra.mxu0 %v272
    %757 = vmatprep.subr.mxu0 0.0
    %758 = vmatpush1.msra.mxu0 %v273
    %759 = vmatprep.subr.mxu0 0.0
    %760 = vmatpush1.msra.mxu0 %v274
    %761 = vmatprep.subr.mxu0 0.0
    %762 = vmatpush1.msra.mxu0 %v275
    %763 = vmatprep.subr.mxu0 0.0
    %764 = vmatpush1.msra.mxu0 0.0
    %765 = vmatprep.subr.mxu0 0.0
    %766 = vmatpush1.msra.mxu0 0.0
    %767 = vmatprep.subr.mxu0 0.0
    %768 = vmatpush1.msra.mxu0 0.0
    %769 = vmatprep.subr.mxu0 0.0
    %770 = vmatpush1.msra.mxu0 0.0
    %771 = vmatprep.subr.mxu0 0.0
    %772 = vmatpush1.msra.mxu0 0.0
    %773 = vmatprep.subr.mxu0 0.0
    %774 = vmatpush1.msra.mxu0 0.0
    %775 = vmatprep.subr.mxu0 0.0
    %776 = vmatpush1.msra.mxu0 0.0
    %777 = vmatprep.subr.mxu0 0.0
    %778 = vmatpush1.msra.mxu0 0.0
    %779 = vmatprep.subr.mxu0 0.0
    %780 = vmatpush1.msra.mxu0 0.0
    %781 = vmatprep.subr.mxu0 0.0
    %782 = vmatpush1.msra.mxu0 0.0
    %783 = vmatprep.subr.mxu0 0.0
    %784 = vmatpush1.msra.mxu0 0.0
    %785 = vmatprep.subr.mxu0 0.0
    %786 = vmatpush1.msra.mxu0 0.0
    %787 = vmatprep.subr.mxu0 0.0
    %788 = vmatpush1.msra.mxu0 0.0
    %789 = vmatprep.subr.mxu0 0.0
    %790 = vmatpush1.msra.mxu0 0.0
    %791 = vmatprep.subr.mxu0 0.0
    %792 = vmatpush1.msra.mxu0 0.0
    %793 = vmatprep.subr.mxu0 0.0
    %794 = vmatpush1.msra.mxu0 0.0
    %795 = vmatprep.subr.mxu0 0.0
    %796 = vmatpush1.msra.mxu0 0.0
    %797 = vmatprep.subr.mxu0 0.0
    %798 = vmatpush1.msra.mxu0 0.0
    %799 = vmatprep.subr.mxu0 0.0
    %800 = vmatpush1.msra.mxu0 0.0
    %801 = vmatprep.subr.mxu0 0.0
    %802 = vmatpush1.msra.mxu0 0.0
    %803 = vmatprep.subr.mxu0 0.0
    %804 = vmatpush1.msra.mxu0 0.0
    %805 = vmatprep.subr.mxu0 0.0
    %806 = vmatpush1.msra.mxu0 0.0
    %807 = vmatprep.subr.mxu0 0.0
    %808 = vmatpush1.msra.mxu0 0.0
    %809 = vmatprep.subr.mxu0 0.0
    %810 = vmatpush1.msra.mxu0 0.0
    %811 = vmatprep.subr.mxu0 0.0
    %812 = vmatpush1.msra.mxu0 0.0
    %813 = vmatprep.subr.mxu0 0.0
    %814 = vmatpush1.msra.mxu0 0.0
    %815 = vmatprep.subr.mxu0 0.0
    %816 = vmatpush1.msra.mxu0 0.0
    %817 = vmatprep.subr.mxu0 0.0
    %818 = vmatpush1.msra.mxu0 0.0
    %819 = vmatprep.mubr.f32.mxu0 0.0
    %820 = vmatmul.mubr.f32.gmra.mrb[0].mxu0 %v753
    %v821 = vpop.f32.mrb[0].mxu0
    %v822 = vadd.f32 %v746, %v821
    %v823 = vpop.f32.mrb[0].mxu0
    %824 = vdwg.mxu0
    %v825 = vadd.f32 %v822, %v542
    %v826 = vxor.u32 %v825, 2147483648
    %v827 = vmul.f32 %v826, 1.442695
    %v828 = vpow.pop %v827
    %v829 = vadd.f32 %v828, 1.0
    %v830 = vrcp.pop %v829
    %v831 = vmul.f32 1.0, %v830
    %v832 = vtanh.pop %v825
    %v833 = vmul.f32 %v831, %v566
    %835 = vrot.lane.b32.xlu0 %v832, 32
    %v836 = vpop.permute.xlu0 %835
    %v838 = vmul.f32 %v831, %v836
    %840 = vrot.lane.b32.xlu0 %v838, 32
    %v841 = vpop.permute.xlu0 %840
    %v843 = vadd.f32 %v833, %v841
    %v844 = vtanh.pop %v843
    %846 = vrot.lane.b32.xlu0 %v844, 32
    %v847 = vpop.permute.xlu0 %846
    %v849 = vmul.f32 %v831, %v847
    %850 = vmatprep.subr.mxu0 0.0
    %851 = vmatpush1.msra.mxu0 %v268
    %852 = vmatprep.subr.mxu0 0.0
    %853 = vmatpush1.msra.mxu0 %v269
    %854 = vmatprep.subr.mxu0 0.0
    %855 = vmatpush1.msra.mxu0 %v270
    %856 = vmatprep.subr.mxu0 0.0
    %857 = vmatpush1.msra.mxu0 %v271
    %858 = vmatprep.subr.mxu0 0.0
    %859 = vmatpush1.msra.mxu0 0.0
    %860 = vmatprep.subr.mxu0 0.0
    %861 = vmatpush1.msra.mxu0 0.0
    %862 = vmatprep.subr.mxu0 0.0
    %863 = vmatpush1.msra.mxu0 0.0
    %864 = vmatprep.subr.mxu0 0.0
    %865 = vmatpush1.msra.mxu0 0.0
    %866 = vmatprep.subr.mxu0 0.0
    %867 = vmatpush1.msra.mxu0 0.0
    %868 = vmatprep.subr.mxu0 0.0
    %869 = vmatpush1.msra.mxu0 0.0
    %870 = vmatprep.subr.mxu0 0.0
    %871 = vmatpush1.msra.mxu0 0.0
    %872 = vmatprep.subr.mxu0 0.0
    %873 = vmatpush1.msra.mxu0 0.0
    %874 = vmatprep.subr.mxu0 0.0
    %875 = vmatpush1.msra.mxu0 0.0
    %876 = vmatprep.subr.mxu0 0.0
    %877 = vmatpush1.msra.mxu0 0.0
    %878 = vmatprep.subr.mxu0 0.0
    %879 = vmatpush1.msra.mxu0 0.0
    %880 = vmatprep.subr.mxu0 0.0
    %881 = vmatpush1.msra.mxu0 0.0
    %882 = vmatprep.subr.mxu0 0.0
    %883 = vmatpush1.msra.mxu0 0.0
    %884 = vmatprep.subr.mxu0 0.0
    %885 = vmatpush1.msra.mxu0 0.0
    %886 = vmatprep.subr.mxu0 0.0
    %887 = vmatpush1.msra.mxu0 0.0
    %888 = vmatprep.subr.mxu0 0.0
    %889 = vmatpush1.msra.mxu0 0.0
    %890 = vmatprep.subr.mxu0 0.0
    %891 = vmatpush1.msra.mxu0 0.0
    %892 = vmatprep.subr.mxu0 0.0
    %893 = vmatpush1.msra.mxu0 0.0
    %894 = vmatprep.subr.mxu0 0.0
    %895 = vmatpush1.msra.mxu0 0.0
    %896 = vmatprep.subr.mxu0 0.0
    %897 = vmatpush1.msra.mxu0 0.0
    %898 = vmatprep.subr.mxu0 0.0
    %899 = vmatpush1.msra.mxu0 0.0
    %900 = vmatprep.subr.mxu0 0.0
    %901 = vmatpush1.msra.mxu0 0.0
    %902 = vmatprep.subr.mxu0 0.0
    %903 = vmatpush1.msra.mxu0 0.0
    %904 = vmatprep.subr.mxu0 0.0
    %905 = vmatpush1.msra.mxu0 0.0
    %906 = vmatprep.subr.mxu0 0.0
    %907 = vmatpush1.msra.mxu0 0.0
    %908 = vmatprep.subr.mxu0 0.0
    %909 = vmatpush1.msra.mxu0 0.0
    %910 = vmatprep.subr.mxu0 0.0
    %911 = vmatpush1.msra.mxu0 0.0
    %912 = vmatprep.subr.mxu0 0.0
    %913 = vmatpush1.msra.mxu0 0.0
    %914 = vmatprep.mubr.f32.mxu0 0.0
    %915 = vmatmul.mubr.f32.gmra.mrb[0].mxu0 %v753
    %v916 = vpop.f32.mrb[0].mxu0
    %v917 = vadd.f32 0.0, %v916
    %v918 = vpop.f32.mrb[0].mxu0
    %919 = vdwg.mxu0
    %v921 = vrot.slane %v917, 4
    %v923 = vadd.f32 %v260, %v921
    %v924 = vxor.u32 %v923, 2147483648
    %v925 = vmul.f32 %v924, 1.442695
    %v926 = vpow.pop %v925
    %v927 = vadd.f32 %v926, 1.0
    %v928 = vrcp.pop %v927
    %v929 = vmul.f32 1.0, %v928
    %v930 = vtanh.pop %v923
    %v932 = vrot.slane %v667, 6
    %v934 = vmul.f32 %v929, %v932
    %936 = vrot.lane.b32.xlu0 %v930, 32
    %v937 = vpop.permute.xlu0 %936
    %v939 = vmul.f32 %v929, %v937
    %941 = vrot.lane.b32.xlu0 %v939, 32
    %v942 = vpop.permute.xlu0 %941
    %v944 = vadd.f32 %v934, %v942
    %v945 = vtanh.pop %v944
    %947 = vrot.lane.b32.xlu0 %v945, 32
    %v948 = vpop.permute.xlu0 %947
    %v950 = vmul.f32 %v929, %v948
    %952 = vrot.lane.b32.xlu0 %v849, 64
    %v953 = vpop.permute.xlu0 %952
    %v954 = vsel %vm287, %v953, 0
    %956 = vmatprep.subr.mxu0 0.0
    %957 = vmatpush1.msra.mxu0 %v276
    %958 = vmatprep.subr.mxu0 0.0
    %959 = vmatpush1.msra.mxu0 %v277
    %960 = vmatprep.subr.mxu0 0.0
    %961 = vmatpush1.msra.mxu0 %v278
    %962 = vmatprep.subr.mxu0 0.0
    %963 = vmatpush1.msra.mxu0 %v279
    %964 = vmatprep.subr.mxu0 0.0
    %965 = vmatpush1.msra.mxu0 0.0
    %966 = vmatprep.subr.mxu0 0.0
    %967 = vmatpush1.msra.mxu0 0.0
    %968 = vmatprep.subr.mxu0 0.0
    %969 = vmatpush1.msra.mxu0 0.0
    %970 = vmatprep.subr.mxu0 0.0
    %971 = vmatpush1.msra.mxu0 0.0
    %972 = vmatprep.subr.mxu0 0.0
    %973 = vmatpush1.msra.mxu0 0.0
    %974 = vmatprep.subr.mxu0 0.0
    %975 = vmatpush1.msra.mxu0 0.0
    %976 = vmatprep.subr.mxu0 0.0
    %977 = vmatpush1.msra.mxu0 0.0
    %978 = vmatprep.subr.mxu0 0.0
    %979 = vmatpush1.msra.mxu0 0.0
    %980 = vmatprep.subr.mxu0 0.0
    %981 = vmatpush1.msra.mxu0 0.0
    %982 = vmatprep.subr.mxu0 0.0
    %983 = vmatpush1.msra.mxu0 0.0
    %984 = vmatprep.subr.mxu0 0.0
    %985 = vmatpush1.msra.mxu0 0.0
    %986 = vmatprep.subr.mxu0 0.0
    %987 = vmatpush1.msra.mxu0 0.0
    %988 = vmatprep.subr.mxu0 0.0
    %989 = vmatpush1.msra.mxu0 0.0
    %990 = vmatprep.subr.mxu0 0.0
    %991 = vmatpush1.msra.mxu0 0.0
    %992 = vmatprep.subr.mxu0 0.0
    %993 = vmatpush1.msra.mxu0 0.0
    %994 = vmatprep.subr.mxu0 0.0
    %995 = vmatpush1.msra.mxu0 0.0
    %996 = vmatprep.subr.mxu0 0.0
    %997 = vmatpush1.msra.mxu0 0.0
    %998 = vmatprep.subr.mxu0 0.0
    %999 = vmatpush1.msra.mxu0 0.0
    %1000 = vmatprep.subr.mxu0 0.0
    %1001 = vmatpush1.msra.mxu0 0.0
    %1002 = vmatprep.subr.mxu0 0.0
    %1003 = vmatpush1.msra.mxu0 0.0
    %1004 = vmatprep.subr.mxu0 0.0
    %1005 = vmatpush1.msra.mxu0 0.0
    %1006 = vmatprep.subr.mxu0 0.0
    %1007 = vmatpush1.msra.mxu0 0.0
    %1008 = vmatprep.subr.mxu0 0.0
    %1009 = vmatpush1.msra.mxu0 0.0
    %1010 = vmatprep.subr.mxu0 0.0
    %1011 = vmatpush1.msra.mxu0 0.0
    %1012 = vmatprep.subr.mxu0 0.0
    %1013 = vmatpush1.msra.mxu0 0.0
    %1014 = vmatprep.subr.mxu0 0.0
    %1015 = vmatpush1.msra.mxu0 0.0
    %1016 = vmatprep.subr.mxu0 0.0
    %1017 = vmatpush1.msra.mxu0 0.0
    %1018 = vmatprep.subr.mxu0 0.0
    %1019 = vmatpush1.msra.mxu0 0.0
    %1020 = vmatprep.mubr.f32.mxu0 0.0
    %1021 = vmatmul.mubr.f32.gmra.mrb[0].mxu0 %v954
    %v1022 = vpop.f32.mrb[0].mxu0
    %v1023 = vadd.f32 0.0, %v1022
    %v1024 = vpop.f32.mrb[0].mxu0
    %1025 = vdwg.mxu0
    %v1027 = vrot.slane %v950, 4
    %1028 = vrot.lane.b32.xlu0 %v1027, 64
    %v1029 = vpop.permute.xlu0 %1028
    %v1030 = vsel %vm287, %v1029, 0
    %1032 = vmatprep.subr.mxu0 0.0
    %1033 = vmatpush1.msra.mxu0 %v272
    %1034 = vmatprep.subr.mxu0 0.0
    %1035 = vmatpush1.msra.mxu0 %v273
    %1036 = vmatprep.subr.mxu0 0.0
    %1037 = vmatpush1.msra.mxu0 %v274
    %1038 = vmatprep.subr.mxu0 0.0
    %1039 = vmatpush1.msra.mxu0 %v275
    %1040 = vmatprep.subr.mxu0 0.0
    %1041 = vmatpush1.msra.mxu0 0.0
    %1042 = vmatprep.subr.mxu0 0.0
    %1043 = vmatpush1.msra.mxu0 0.0
    %1044 = vmatprep.subr.mxu0 0.0
    %1045 = vmatpush1.msra.mxu0 0.0
    %1046 = vmatprep.subr.mxu0 0.0
    %1047 = vmatpush1.msra.mxu0 0.0
    %1048 = vmatprep.subr.mxu0 0.0
    %1049 = vmatpush1.msra.mxu0 0.0
    %1050 = vmatprep.subr.mxu0 0.0
    %1051 = vmatpush1.msra.mxu0 0.0
    %1052 = vmatprep.subr.mxu0 0.0
    %1053 = vmatpush1.msra.mxu0 0.0
    %1054 = vmatprep.subr.mxu0 0.0
    %1055 = vmatpush1.msra.mxu0 0.0
    %1056 = vmatprep.subr.mxu0 0.0
    %1057 = vmatpush1.msra.mxu0 0.0
    %1058 = vmatprep.subr.mxu0 0.0
    %1059 = vmatpush1.msra.mxu0 0.0
    %1060 = vmatprep.subr.mxu0 0.0
    %1061 = vmatpush1.msra.mxu0 0.0
    %1062 = vmatprep.subr.mxu0 0.0
    %1063 = vmatpush1.msra.mxu0 0.0
    %1064 = vmatprep.subr.mxu0 0.0
    %1065 = vmatpush1.msra.mxu0 0.0
    %1066 = vmatprep.subr.mxu0 0.0
    %1067 = vmatpush1.msra.mxu0 0.0
    %1068 = vmatprep.subr.mxu0 0.0
    %1069 = vmatpush1.msra.mxu0 0.0
    %1070 = vmatprep.subr.mxu0 0.0
    %1071 = vmatpush1.msra.mxu0 0.0
    %1072 = vmatprep.subr.mxu0 0.0
    %1073 = vmatpush1.msra.mxu0 0.0
    %1074 = vmatprep.subr.mxu0 0.0
    %1075 = vmatpush1.msra.mxu0 0.0
    %1076 = vmatprep.subr.mxu0 0.0
    %1077 = vmatpush1.msra.mxu0 0.0
    %1078 = vmatprep.subr.mxu0 0.0
    %1079 = vmatpush1.msra.mxu0 0.0
    %1080 = vmatprep.subr.mxu0 0.0
    %1081 = vmatpush1.msra.mxu0 0.0
    %1082 = vmatprep.subr.mxu0 0.0
    %1083 = vmatpush1.msra.mxu0 0.0
    %1084 = vmatprep.subr.mxu0 0.0
    %1085 = vmatpush1.msra.mxu0 0.0
    %1086 = vmatprep.subr.mxu0 0.0
    %1087 = vmatpush1.msra.mxu0 0.0
    %1088 = vmatprep.subr.mxu0 0.0
    %1089 = vmatpush1.msra.mxu0 0.0
    %1090 = vmatprep.subr.mxu0 0.0
    %1091 = vmatpush1.msra.mxu0 0.0
    %1092 = vmatprep.subr.mxu0 0.0
    %1093 = vmatpush1.msra.mxu0 0.0
    %1094 = vmatprep.subr.mxu0 0.0
    %1095 = vmatpush1.msra.mxu0 0.0
    %1096 = vmatprep.mubr.f32.mxu0 0.0
    %1097 = vmatmul.mubr.f32.gmra.mrb[0].mxu0 %v1030
    %v1098 = vpop.f32.mrb[0].mxu0
    %v1099 = vadd.f32 %v1023, %v1098
    %v1100 = vpop.f32.mrb[0].mxu0
    %1101 = vdwg.mxu0
    %v1102 = vadd.f32 %v1099, %v542
    %v1103 = vxor.u32 %v1102, 2147483648
    %v1104 = vmul.f32 %v1103, 1.442695
    %v1105 = vpow.pop %v1104
    %v1106 = vadd.f32 %v1105, 1.0
    %v1107 = vrcp.pop %v1106
    %v1108 = vmul.f32 1.0, %v1107
    %v1109 = vtanh.pop %v1102
    %v1110 = vmul.f32 %v1108, %v843
    %1112 = vrot.lane.b32.xlu0 %v1109, 32
    %v1113 = vpop.permute.xlu0 %1112
    %v1115 = vmul.f32 %v1108, %v1113
    %1117 = vrot.lane.b32.xlu0 %v1115, 32
    %v1118 = vpop.permute.xlu0 %1117
    %v1120 = vadd.f32 %v1110, %v1118
    %v1121 = vtanh.pop %v1120
    %1123 = vrot.lane.b32.xlu0 %v1121, 32
    %v1124 = vpop.permute.xlu0 %1123
    %v1126 = vmul.f32 %v1108, %v1124
    %1127 = vmatprep.subr.mxu0 0.0
    %1128 = vmatpush1.msra.mxu0 %v268
    %1129 = vmatprep.subr.mxu0 0.0
    %1130 = vmatpush1.msra.mxu0 %v269
    %1131 = vmatprep.subr.mxu0 0.0
    %1132 = vmatpush1.msra.mxu0 %v270
    %1133 = vmatprep.subr.mxu0 0.0
    %1134 = vmatpush1.msra.mxu0 %v271
    %1135 = vmatprep.subr.mxu0 0.0
    %1136 = vmatpush1.msra.mxu0 0.0
    %1137 = vmatprep.subr.mxu0 0.0
    %1138 = vmatpush1.msra.mxu0 0.0
    %1139 = vmatprep.subr.mxu0 0.0
    %1140 = vmatpush1.msra.mxu0 0.0
    %1141 = vmatprep.subr.mxu0 0.0
    %1142 = vmatpush1.msra.mxu0 0.0
    %1143 = vmatprep.subr.mxu0 0.0
    %1144 = vmatpush1.msra.mxu0 0.0
    %1145 = vmatprep.subr.mxu0 0.0
    %1146 = vmatpush1.msra.mxu0 0.0
    %1147 = vmatprep.subr.mxu0 0.0
    %1148 = vmatpush1.msra.mxu0 0.0
    %1149 = vmatprep.subr.mxu0 0.0
    %1150 = vmatpush1.msra.mxu0 0.0
    %1151 = vmatprep.subr.mxu0 0.0
    %1152 = vmatpush1.msra.mxu0 0.0
    %1153 = vmatprep.subr.mxu0 0.0
    %1154 = vmatpush1.msra.mxu0 0.0
    %1155 = vmatprep.subr.mxu0 0.0
    %1156 = vmatpush1.msra.mxu0 0.0
    %1157 = vmatprep.subr.mxu0 0.0
    %1158 = vmatpush1.msra.mxu0 0.0
    %1159 = vmatprep.subr.mxu0 0.0
    %1160 = vmatpush1.msra.mxu0 0.0
    %1161 = vmatprep.subr.mxu0 0.0
    %1162 = vmatpush1.msra.mxu0 0.0
    %1163 = vmatprep.subr.mxu0 0.0
    %1164 = vmatpush1.msra.mxu0 0.0
    %1165 = vmatprep.subr.mxu0 0.0
    %1166 = vmatpush1.msra.mxu0 0.0
    %1167 = vmatprep.subr.mxu0 0.0
    %1168 = vmatpush1.msra.mxu0 0.0
    %1169 = vmatprep.subr.mxu0 0.0
    %1170 = vmatpush1.msra.mxu0 0.0
    %1171 = vmatprep.subr.mxu0 0.0
    %1172 = vmatpush1.msra.mxu0 0.0
    %1173 = vmatprep.subr.mxu0 0.0
    %1174 = vmatpush1.msra.mxu0 0.0
    %1175 = vmatprep.subr.mxu0 0.0
    %1176 = vmatpush1.msra.mxu0 0.0
    %1177 = vmatprep.subr.mxu0 0.0
    %1178 = vmatpush1.msra.mxu0 0.0
    %1179 = vmatprep.subr.mxu0 0.0
    %1180 = vmatpush1.msra.mxu0 0.0
    %1181 = vmatprep.subr.mxu0 0.0
    %1182 = vmatpush1.msra.mxu0 0.0
    %1183 = vmatprep.subr.mxu0 0.0
    %1184 = vmatpush1.msra.mxu0 0.0
    %1185 = vmatprep.subr.mxu0 0.0
    %1186 = vmatpush1.msra.mxu0 0.0
    %1187 = vmatprep.subr.mxu0 0.0
    %1188 = vmatpush1.msra.mxu0 0.0
    %1189 = vmatprep.subr.mxu0 0.0
    %1190 = vmatpush1.msra.mxu0 0.0
    %1191 = vmatprep.mubr.f32.mxu0 0.0
    %1192 = vmatmul.mubr.f32.gmra.mrb[0].mxu0 %v1030
    %v1193 = vpop.f32.mrb[0].mxu0
    %v1194 = vadd.f32 0.0, %v1193
    %v1195 = vpop.f32.mrb[0].mxu0
    %1196 = vdwg.mxu0
    %v1198 = vrot.slane %v1194, 2
    %v1200 = vadd.f32 %v260, %v1198
    %v1201 = vxor.u32 %v1200, 2147483648
    %v1202 = vmul.f32 %v1201, 1.442695
    %v1203 = vpow.pop %v1202
    %v1204 = vadd.f32 %v1203, 1.0
    %v1205 = vrcp.pop %v1204
    %v1206 = vmul.f32 1.0, %v1205
    %v1207 = vtanh.pop %v1200
    %v1209 = vrot.slane %v944, 6
    %v1211 = vmul.f32 %v1206, %v1209
    %1213 = vrot.lane.b32.xlu0 %v1207, 32
    %v1214 = vpop.permute.xlu0 %1213
    %v1216 = vmul.f32 %v1206, %v1214
    %1218 = vrot.lane.b32.xlu0 %v1216, 32
    %v1219 = vpop.permute.xlu0 %1218
    %v1221 = vadd.f32 %v1211, %v1219
    %v1222 = vtanh.pop %v1221
    %1224 = vrot.lane.b32.xlu0 %v1222, 32
    %v1225 = vpop.permute.xlu0 %1224
    %v1227 = vmul.f32 %v1206, %v1225
    %1229 = vrot.lane.b32.xlu0 %v1126, 64
    %v1230 = vpop.permute.xlu0 %1229
    %v1231 = vsel %vm287, %v1230, 0
    %1233 = vmatprep.subr.mxu0 0.0
    %1234 = vmatpush1.msra.mxu0 %v276
    %1235 = vmatprep.subr.mxu0 0.0
    %1236 = vmatpush1.msra.mxu0 %v277
    %1237 = vmatprep.subr.mxu0 0.0
    %1238 = vmatpush1.msra.mxu0 %v278
    %1239 = vmatprep.subr.mxu0 0.0
    %1240 = vmatpush1.msra.mxu0 %v279
    %1241 = vmatprep.subr.mxu0 0.0
    %1242 = vmatpush1.msra.mxu0 0.0
    %1243 = vmatprep.subr.mxu0 0.0
    %1244 = vmatpush1.msra.mxu0 0.0
    %1245 = vmatprep.subr.mxu0 0.0
    %1246 = vmatpush1.msra.mxu0 0.0
    %1247 = vmatprep.subr.mxu0 0.0
    %1248 = vmatpush1.msra.mxu0 0.0
    %1249 = vmatprep.subr.mxu0 0.0
    %1250 = vmatpush1.msra.mxu0 0.0
    %1251 = vmatprep.subr.mxu0 0.0
    %1252 = vmatpush1.msra.mxu0 0.0
    %1253 = vmatprep.subr.mxu0 0.0
    %1254 = vmatpush1.msra.mxu0 0.0
    %1255 = vmatprep.subr.mxu0 0.0
    %1256 = vmatpush1.msra.mxu0 0.0
    %1257 = vmatprep.subr.mxu0 0.0
    %1258 = vmatpush1.msra.mxu0 0.0
    %1259 = vmatprep.subr.mxu0 0.0
    %1260 = vmatpush1.msra.mxu0 0.0
    %1261 = vmatprep.subr.mxu0 0.0
    %1262 = vmatpush1.msra.mxu0 0.0
    %1263 = vmatprep.subr.mxu0 0.0
    %1264 = vmatpush1.msra.mxu0 0.0
    %1265 = vmatprep.subr.mxu0 0.0
    %1266 = vmatpush1.msra.mxu0 0.0
    %1267 = vmatprep.subr.mxu0 0.0
    %1268 = vmatpush1.msra.mxu0 0.0
    %1269 = vmatprep.subr.mxu0 0.0
    %1270 = vmatpush1.msra.mxu0 0.0
    %1271 = vmatprep.subr.mxu0 0.0
    %1272 = vmatpush1.msra.mxu0 0.0
    %1273 = vmatprep.subr.mxu0 0.0
    %1274 = vmatpush1.msra.mxu0 0.0
    %1275 = vmatprep.subr.mxu0 0.0
    %1276 = vmatpush1.msra.mxu0 0.0
    %1277 = vmatprep.subr.mxu0 0.0
    %1278 = vmatpush1.msra.mxu0 0.0
    %1279 = vmatprep.subr.mxu0 0.0
    %1280 = vmatpush1.msra.mxu0 0.0
    %1281 = vmatprep.subr.mxu0 0.0
    %1282 = vmatpush1.msra.mxu0 0.0
    %1283 = vmatprep.subr.mxu0 0.0
    %1284 = vmatpush1.msra.mxu0 0.0
    %1285 = vmatprep.subr.mxu0 0.0
    %1286 = vmatpush1.msra.mxu0 0.0
    %1287 = vmatprep.subr.mxu0 0.0
    %1288 = vmatpush1.msra.mxu0 0.0
    %1289 = vmatprep.subr.mxu0 0.0
    %1290 = vmatpush1.msra.mxu0 0.0
    %1291 = vmatprep.subr.mxu0 0.0
    %1292 = vmatpush1.msra.mxu0 0.0
    %1293 = vmatprep.subr.mxu0 0.0
    %1294 = vmatpush1.msra.mxu0 0.0
    %1295 = vmatprep.subr.mxu0 0.0
    %1296 = vmatpush1.msra.mxu0 0.0
    %1297 = vmatprep.mubr.f32.mxu0 0.0
    %1298 = vmatmul.mubr.f32.gmra.mrb[0].mxu0 %v1231
    %v1299 = vpop.f32.mrb[0].mxu0
    %v1300 = vadd.f32 0.0, %v1299
    %v1301 = vpop.f32.mrb[0].mxu0
    %1302 = vdwg.mxu0
    %v1304 = vrot.slane %v1227, 6
    %1305 = vrot.lane.b32.xlu0 %v1304, 64
    %v1306 = vpop.permute.xlu0 %1305
    %v1307 = vsel %vm287, %v1306, 0
    %1309 = vmatprep.subr.mxu0 0.0
    %1310 = vmatpush1.msra.mxu0 %v272
    %1311 = vmatprep.subr.mxu0 0.0
    %1312 = vmatpush1.msra.mxu0 %v273
    %1313 = vmatprep.subr.mxu0 0.0
    %1314 = vmatpush1.msra.mxu0 %v274
    %1315 = vmatprep.subr.mxu0 0.0
    %1316 = vmatpush1.msra.mxu0 %v275
    %1317 = vmatprep.subr.mxu0 0.0
    %1318 = vmatpush1.msra.mxu0 0.0
    %1319 = vmatprep.subr.mxu0 0.0
    %1320 = vmatpush1.msra.mxu0 0.0
    %1321 = vmatprep.subr.mxu0 0.0
    %1322 = vmatpush1.msra.mxu0 0.0
    %1323 = vmatprep.subr.mxu0 0.0
    %1324 = vmatpush1.msra.mxu0 0.0
    %1325 = vmatprep.subr.mxu0 0.0
    %1326 = vmatpush1.msra.mxu0 0.0
    %1327 = vmatprep.subr.mxu0 0.0
    %1328 = vmatpush1.msra.mxu0 0.0
    %1329 = vmatprep.subr.mxu0 0.0
    %1330 = vmatpush1.msra.mxu0 0.0
    %1331 = vmatprep.subr.mxu0 0.0
    %1332 = vmatpush1.msra.mxu0 0.0
    %1333 = vmatprep.subr.mxu0 0.0
    %1334 = vmatpush1.msra.mxu0 0.0
    %1335 = vmatprep.subr.mxu0 0.0
    %1336 = vmatpush1.msra.mxu0 0.0
    %1337 = vmatprep.subr.mxu0 0.0
    %1338 = vmatpush1.msra.mxu0 0.0
    %1339 = vmatprep.subr.mxu0 0.0
    %1340 = vmatpush1.msra.mxu0 0.0
    %1341 = vmatprep.subr.mxu0 0.0
    %1342 = vmatpush1.msra.mxu0 0.0
    %1343 = vmatprep.subr.mxu0 0.0
    %1344 = vmatpush1.msra.mxu0 0.0
    %1345 = vmatprep.subr.mxu0 0.0
    %1346 = vmatpush1.msra.mxu0 0.0
    %1347 = vmatprep.subr.mxu0 0.0
    %1348 = vmatpush1.msra.mxu0 0.0
    %1349 = vmatprep.subr.mxu0 0.0
    %1350 = vmatpush1.msra.mxu0 0.0
    %1351 = vmatprep.subr.mxu0 0.0
    %1352 = vmatpush1.msra.mxu0 0.0
    %1353 = vmatprep.subr.mxu0 0.0
    %1354 = vmatpush1.msra.mxu0 0.0
    %1355 = vmatprep.subr.mxu0 0.0
    %1356 = vmatpush1.msra.mxu0 0.0
    %1357 = vmatprep.subr.mxu0 0.0
    %1358 = vmatpush1.msra.mxu0 0.0
    %1359 = vmatprep.subr.mxu0 0.0
    %1360 = vmatpush1.msra.mxu0 0.0
    %1361 = vmatprep.subr.mxu0 0.0
    %1362 = vmatpush1.msra.mxu0 0.0
    %1363 = vmatprep.subr.mxu0 0.0
    %1364 = vmatpush1.msra.mxu0 0.0
    %1365 = vmatprep.subr.mxu0 0.0
    %1366 = vmatpush1.msra.mxu0 0.0
    %1367 = vmatprep.subr.mxu0 0.0
    %1368 = vmatpush1.msra.mxu0 0.0
    %1369 = vmatprep.subr.mxu0 0.0
    %1370 = vmatpush1.msra.mxu0 0.0
    %1371 = vmatprep.subr.mxu0 0.0
    %1372 = vmatpush1.msra.mxu0 0.0
    %1373 = vmatprep.mubr.f32.mxu0 0.0
    %1374 = vmatmul.mubr.f32.gmra.mrb[0].mxu0 %v1307
    %v1375 = vpop.f32.mrb[0].mxu0
    %v1376 = vadd.f32 %v1300, %v1375
    %v1377 = vpop.f32.mrb[0].mxu0
    %1378 = vdwg.mxu0
    %v1379 = vadd.f32 %v1376, %v542
    %v1380 = vxor.u32 %v1379, 2147483648
    %v1381 = vmul.f32 %v1380, 1.442695
    %v1382 = vpow.pop %v1381
    %v1383 = vadd.f32 %v1382, 1.0
    %v1384 = vrcp.pop %v1383
    %v1385 = vmul.f32 1.0, %v1384
    %v1386 = vtanh.pop %v1379
    %v1387 = vmul.f32 %v1385, %v1120
    %1389 = vrot.lane.b32.xlu0 %v1386, 32
    %v1390 = vpop.permute.xlu0 %1389
    %v1392 = vmul.f32 %v1385, %v1390
    %1394 = vrot.lane.b32.xlu0 %v1392, 32
    %v1395 = vpop.permute.xlu0 %1394
    %v1397 = vadd.f32 %v1387, %v1395
    %v1398 = vtanh.pop %v1397
    %1400 = vrot.lane.b32.xlu0 %v1398, 32
    %v1401 = vpop.permute.xlu0 %1400
    %v1403 = vmul.f32 %v1385, %v1401
    %1404 = vmatprep.subr.mxu0 0.0
    %1405 = vmatpush1.msra.mxu0 %v268
    %1406 = vmatprep.subr.mxu0 0.0
    %1407 = vmatpush1.msra.mxu0 %v269
    %1408 = vmatprep.subr.mxu0 0.0
    %1409 = vmatpush1.msra.mxu0 %v270
    %1410 = vmatprep.subr.mxu0 0.0
    %1411 = vmatpush1.msra.mxu0 %v271
    %1412 = vmatprep.subr.mxu0 0.0
    %1413 = vmatpush1.msra.mxu0 0.0
    %1414 = vmatprep.subr.mxu0 0.0
    %1415 = vmatpush1.msra.mxu0 0.0
    %1416 = vmatprep.subr.mxu0 0.0
    %1417 = vmatpush1.msra.mxu0 0.0
    %1418 = vmatprep.subr.mxu0 0.0
    %1419 = vmatpush1.msra.mxu0 0.0
    %1420 = vmatprep.subr.mxu0 0.0
    %1421 = vmatpush1.msra.mxu0 0.0
    %1422 = vmatprep.subr.mxu0 0.0
    %1423 = vmatpush1.msra.mxu0 0.0
    %1424 = vmatprep.subr.mxu0 0.0
    %1425 = vmatpush1.msra.mxu0 0.0
    %1426 = vmatprep.subr.mxu0 0.0
    %1427 = vmatpush1.msra.mxu0 0.0
    %1428 = vmatprep.subr.mxu0 0.0
    %1429 = vmatpush1.msra.mxu0 0.0
    %1430 = vmatprep.subr.mxu0 0.0
    %1431 = vmatpush1.msra.mxu0 0.0
    %1432 = vmatprep.subr.mxu0 0.0
    %1433 = vmatpush1.msra.mxu0 0.0
    %1434 = vmatprep.subr.mxu0 0.0
    %1435 = vmatpush1.msra.mxu0 0.0
    %1436 = vmatprep.subr.mxu0 0.0
    %1437 = vmatpush1.msra.mxu0 0.0
    %1438 = vmatprep.subr.mxu0 0.0
    %1439 = vmatpush1.msra.mxu0 0.0
    %1440 = vmatprep.subr.mxu0 0.0
    %1441 = vmatpush1.msra.mxu0 0.0
    %1442 = vmatprep.subr.mxu0 0.0
    %1443 = vmatpush1.msra.mxu0 0.0
    %1444 = vmatprep.subr.mxu0 0.0
    %1445 = vmatpush1.msra.mxu0 0.0
    %1446 = vmatprep.subr.mxu0 0.0
    %1447 = vmatpush1.msra.mxu0 0.0
    %1448 = vmatprep.subr.mxu0 0.0
    %1449 = vmatpush1.msra.mxu0 0.0
    %1450 = vmatprep.subr.mxu0 0.0
    %1451 = vmatpush1.msra.mxu0 0.0
    %1452 = vmatprep.subr.mxu0 0.0
    %1453 = vmatpush1.msra.mxu0 0.0
    %1454 = vmatprep.subr.mxu0 0.0
    %1455 = vmatpush1.msra.mxu0 0.0
    %1456 = vmatprep.subr.mxu0 0.0
    %1457 = vmatpush1.msra.mxu0 0.0
    %1458 = vmatprep.subr.mxu0 0.0
    %1459 = vmatpush1.msra.mxu0 0.0
    %1460 = vmatprep.subr.mxu0 0.0
    %1461 = vmatpush1.msra.mxu0 0.0
    %1462 = vmatprep.subr.mxu0 0.0
    %1463 = vmatpush1.msra.mxu0 0.0
    %1464 = vmatprep.subr.mxu0 0.0
    %1465 = vmatpush1.msra.mxu0 0.0
    %1466 = vmatprep.subr.mxu0 0.0
    %1467 = vmatpush1.msra.mxu0 0.0
    %1468 = vmatprep.mubr.f32.mxu0 0.0
    %1469 = vmatmul.mubr.f32.gmra.mrb[0].mxu0 %v1307
    %v1470 = vpop.f32.mrb[0].mxu0
    %v1471 = vadd.f32 0.0, %v1470
    %v1472 = vpop.f32.mrb[0].mxu0
    %1473 = vdwg.mxu0
    %v1474 = vadd.f32 %v265, %v1471
    %v1475 = vxor.u32 %v1474, 2147483648
    %v1476 = vmul.f32 %v1475, 1.442695
    %v1477 = vpow.pop %v1476
    %v1478 = vadd.f32 %v1477, 1.0
    %v1479 = vrcp.pop %v1478
    %v1480 = vmul.f32 1.0, %v1479
    %v1481 = vtanh.pop %v1474
    %v1483 = vrot.slane %v1221, 6
    %v1485 = vmul.f32 %v1480, %v1483
    %1487 = vrot.lane.b32.xlu0 %v1481, 32
    %v1488 = vpop.permute.xlu0 %1487
    %v1490 = vmul.f32 %v1480, %v1488
    %1492 = vrot.lane.b32.xlu0 %v1490, 32
    %v1493 = vpop.permute.xlu0 %1492
    %v1495 = vadd.f32 %v1485, %v1493
    %v1496 = vtanh.pop %v1495
    %1498 = vrot.lane.b32.xlu0 %v1496, 32
    %v1499 = vpop.permute.xlu0 %1498
    %v1501 = vmul.f32 %v1480, %v1499
    %1503 = vrot.lane.b32.xlu0 %v1403, 64
    %v1504 = vpop.permute.xlu0 %1503
    %v1505 = vsel %vm287, %v1504, 0
    %1507 = vmatprep.subr.mxu0 0.0
    %1508 = vmatpush1.msra.mxu0 %v276
    %1509 = vmatprep.subr.mxu0 0.0
    %1510 = vmatpush1.msra.mxu0 %v277
    %1511 = vmatprep.subr.mxu0 0.0
    %1512 = vmatpush1.msra.mxu0 %v278
    %1513 = vmatprep.subr.mxu0 0.0
    %1514 = vmatpush1.msra.mxu0 %v279
    %1515 = vmatprep.subr.mxu0 0.0
    %1516 = vmatpush1.msra.mxu0 0.0
    %1517 = vmatprep.subr.mxu0 0.0
    %1518 = vmatpush1.msra.mxu0 0.0
    %1519 = vmatprep.subr.mxu0 0.0
    %1520 = vmatpush1.msra.mxu0 0.0
    %1521 = vmatprep.subr.mxu0 0.0
    %1522 = vmatpush1.msra.mxu0 0.0
    %1523 = vmatprep.subr.mxu0 0.0
    %1524 = vmatpush1.msra.mxu0 0.0
    %1525 = vmatprep.subr.mxu0 0.0
    %1526 = vmatpush1.msra.mxu0 0.0
    %1527 = vmatprep.subr.mxu0 0.0
    %1528 = vmatpush1.msra.mxu0 0.0
    %1529 = vmatprep.subr.mxu0 0.0
    %1530 = vmatpush1.msra.mxu0 0.0
    %1531 = vmatprep.subr.mxu0 0.0
    %1532 = vmatpush1.msra.mxu0 0.0
    %1533 = vmatprep.subr.mxu0 0.0
    %1534 = vmatpush1.msra.mxu0 0.0
    %1535 = vmatprep.subr.mxu0 0.0
    %1536 = vmatpush1.msra.mxu0 0.0
    %1537 = vmatprep.subr.mxu0 0.0
    %1538 = vmatpush1.msra.mxu0 0.0
    %1539 = vmatprep.subr.mxu0 0.0
    %1540 = vmatpush1.msra.mxu0 0.0
    %1541 = vmatprep.subr.mxu0 0.0
    %1542 = vmatpush1.msra.mxu0 0.0
    %1543 = vmatprep.subr.mxu0 0.0
    %1544 = vmatpush1.msra.mxu0 0.0
    %1545 = vmatprep.subr.mxu0 0.0
    %1546 = vmatpush1.msra.mxu0 0.0
    %1547 = vmatprep.subr.mxu0 0.0
    %1548 = vmatpush1.msra.mxu0 0.0
    %1549 = vmatprep.subr.mxu0 0.0
    %1550 = vmatpush1.msra.mxu0 0.0
    %1551 = vmatprep.subr.mxu0 0.0
    %1552 = vmatpush1.msra.mxu0 0.0
    %1553 = vmatprep.subr.mxu0 0.0
    %1554 = vmatpush1.msra.mxu0 0.0
    %1555 = vmatprep.subr.mxu0 0.0
    %1556 = vmatpush1.msra.mxu0 0.0
    %1557 = vmatprep.subr.mxu0 0.0
    %1558 = vmatpush1.msra.mxu0 0.0
    %1559 = vmatprep.subr.mxu0 0.0
    %1560 = vmatpush1.msra.mxu0 0.0
    %1561 = vmatprep.subr.mxu0 0.0
    %1562 = vmatpush1.msra.mxu0 0.0
    %1563 = vmatprep.subr.mxu0 0.0
    %1564 = vmatpush1.msra.mxu0 0.0
    %1565 = vmatprep.subr.mxu0 0.0
    %1566 = vmatpush1.msra.mxu0 0.0
    %1567 = vmatprep.subr.mxu0 0.0
    %1568 = vmatpush1.msra.mxu0 0.0
    %1569 = vmatprep.subr.mxu0 0.0
    %1570 = vmatpush1.msra.mxu0 0.0
    %1571 = vmatprep.mubr.f32.mxu0 0.0
    %1572 = vmatmul.mubr.f32.gmra.mrb[0].mxu0 %v1505
    %v1573 = vpop.f32.mrb[0].mxu0
    %v1574 = vadd.f32 0.0, %v1573
    %v1575 = vpop.f32.mrb[0].mxu0
    %1576 = vdwg.mxu0
    %1578 = vrot.lane.b32.xlu0 %v1501, 64
    %v1579 = vpop.permute.xlu0 %1578
    %v1580 = vsel %vm287, %v1579, 0
    %1582 = vmatprep.subr.mxu0 0.0
    %1583 = vmatpush1.msra.mxu0 %v272
    %1584 = vmatprep.subr.mxu0 0.0
    %1585 = vmatpush1.msra.mxu0 %v273
    %1586 = vmatprep.subr.mxu0 0.0
    %1587 = vmatpush1.msra.mxu0 %v274
    %1588 = vmatprep.subr.mxu0 0.0
    %1589 = vmatpush1.msra.mxu0 %v275
    %1590 = vmatprep.subr.mxu0 0.0
    %1591 = vmatpush1.msra.mxu0 0.0
    %1592 = vmatprep.subr.mxu0 0.0
    %1593 = vmatpush1.msra.mxu0 0.0
    %1594 = vmatprep.subr.mxu0 0.0
    %1595 = vmatpush1.msra.mxu0 0.0
    %1596 = vmatprep.subr.mxu0 0.0
    %1597 = vmatpush1.msra.mxu0 0.0
    %1598 = vmatprep.subr.mxu0 0.0
    %1599 = vmatpush1.msra.mxu0 0.0
    %1600 = vmatprep.subr.mxu0 0.0
    %1601 = vmatpush1.msra.mxu0 0.0
    %1602 = vmatprep.subr.mxu0 0.0
    %1603 = vmatpush1.msra.mxu0 0.0
    %1604 = vmatprep.subr.mxu0 0.0
    %1605 = vmatpush1.msra.mxu0 0.0
    %1606 = vmatprep.subr.mxu0 0.0
    %1607 = vmatpush1.msra.mxu0 0.0
    %1608 = vmatprep.subr.mxu0 0.0
    %1609 = vmatpush1.msra.mxu0 0.0
    %1610 = vmatprep.subr.mxu0 0.0
    %1611 = vmatpush1.msra.mxu0 0.0
    %1612 = vmatprep.subr.mxu0 0.0
    %1613 = vmatpush1.msra.mxu0 0.0
    %1614 = vmatprep.subr.mxu0 0.0
    %1615 = vmatpush1.msra.mxu0 0.0
    %1616 = vmatprep.subr.mxu0 0.0
    %1617 = vmatpush1.msra.mxu0 0.0
    %1618 = vmatprep.subr.mxu0 0.0
    %1619 = vmatpush1.msra.mxu0 0.0
    %1620 = vmatprep.subr.mxu0 0.0
    %1621 = vmatpush1.msra.mxu0 0.0
    %1622 = vmatprep.subr.mxu0 0.0
    %1623 = vmatpush1.msra.mxu0 0.0
    %1624 = vmatprep.subr.mxu0 0.0
    %1625 = vmatpush1.msra.mxu0 0.0
    %1626 = vmatprep.subr.mxu0 0.0
    %1627 = vmatpush1.msra.mxu0 0.0
    %1628 = vmatprep.subr.mxu0 0.0
    %1629 = vmatpush1.msra.mxu0 0.0
    %1630 = vmatprep.subr.mxu0 0.0
    %1631 = vmatpush1.msra.mxu0 0.0
    %1632 = vmatprep.subr.mxu0 0.0
    %1633 = vmatpush1.msra.mxu0 0.0
    %1634 = vmatprep.subr.mxu0 0.0
    %1635 = vmatpush1.msra.mxu0 0.0
    %1636 = vmatprep.subr.mxu0 0.0
    %1637 = vmatpush1.msra.mxu0 0.0
    %1638 = vmatprep.subr.mxu0 0.0
    %1639 = vmatpush1.msra.mxu0 0.0
    %1640 = vmatprep.subr.mxu0 0.0
    %1641 = vmatpush1.msra.mxu0 0.0
    %1642 = vmatprep.subr.mxu0 0.0
    %1643 = vmatpush1.msra.mxu0 0.0
    %1644 = vmatprep.subr.mxu0 0.0
    %1645 = vmatpush1.msra.mxu0 0.0
    %1646 = vmatprep.mubr.f32.mxu0 0.0
    %1647 = vmatmul.mubr.f32.gmra.mrb[0].mxu0 %v1580
    %v1648 = vpop.f32.mrb[0].mxu0
    %v1649 = vadd.f32 %v1574, %v1648
    %v1650 = vpop.f32.mrb[0].mxu0
    %1651 = vdwg.mxu0
    %v1652 = vadd.f32 %v1649, %v542
    %v1653 = vxor.u32 %v1652, 2147483648
    %v1654 = vmul.f32 %v1653, 1.442695
    %v1655 = vpow.pop %v1654
    %v1656 = vadd.f32 %v1655, 1.0
    %v1657 = vrcp.pop %v1656
    %v1658 = vmul.f32 1.0, %v1657
    %v1659 = vtanh.pop %v1652
    %v1660 = vmul.f32 %v1658, %v1397
    %1662 = vrot.lane.b32.xlu0 %v1659, 32
    %v1663 = vpop.permute.xlu0 %1662
    %v1665 = vmul.f32 %v1658, %v1663
    %1667 = vrot.lane.b32.xlu0 %v1665, 32
    %v1668 = vpop.permute.xlu0 %1667
    %v1670 = vadd.f32 %v1660, %v1668
    %v1671 = vtanh.pop %v1670
    %1673 = vrot.lane.b32.xlu0 %v1671, 32
    %v1674 = vpop.permute.xlu0 %1673
    %v1676 = vmul.f32 %v1658, %v1674
    %1677 = vmatprep.subr.mxu0 0.0
    %1678 = vmatpush1.msra.mxu0 %v268
    %1679 = vmatprep.subr.mxu0 0.0
    %1680 = vmatpush1.msra.mxu0 %v269
    %1681 = vmatprep.subr.mxu0 0.0
    %1682 = vmatpush1.msra.mxu0 %v270
    %1683 = vmatprep.subr.mxu0 0.0
    %1684 = vmatpush1.msra.mxu0 %v271
    %1685 = vmatprep.subr.mxu0 0.0
    %1686 = vmatpush1.msra.mxu0 0.0
    %1687 = vmatprep.subr.mxu0 0.0
    %1688 = vmatpush1.msra.mxu0 0.0
    %1689 = vmatprep.subr.mxu0 0.0
    %1690 = vmatpush1.msra.mxu0 0.0
    %1691 = vmatprep.subr.mxu0 0.0
    %1692 = vmatpush1.msra.mxu0 0.0
    %1693 = vmatprep.subr.mxu0 0.0
    %1694 = vmatpush1.msra.mxu0 0.0
    %1695 = vmatprep.subr.mxu0 0.0
    %1696 = vmatpush1.msra.mxu0 0.0
    %1697 = vmatprep.subr.mxu0 0.0
    %1698 = vmatpush1.msra.mxu0 0.0
    %1699 = vmatprep.subr.mxu0 0.0
    %1700 = vmatpush1.msra.mxu0 0.0
    %1701 = vmatprep.subr.mxu0 0.0
    %1702 = vmatpush1.msra.mxu0 0.0
    %1703 = vmatprep.subr.mxu0 0.0
    %1704 = vmatpush1.msra.mxu0 0.0
    %1705 = vmatprep.subr.mxu0 0.0
    %1706 = vmatpush1.msra.mxu0 0.0
    %1707 = vmatprep.subr.mxu0 0.0
    %1708 = vmatpush1.msra.mxu0 0.0
    %1709 = vmatprep.subr.mxu0 0.0
    %1710 = vmatpush1.msra.mxu0 0.0
    %1711 = vmatprep.subr.mxu0 0.0
    %1712 = vmatpush1.msra.mxu0 0.0
    %1713 = vmatprep.subr.mxu0 0.0
    %1714 = vmatpush1.msra.mxu0 0.0
    %1715 = vmatprep.subr.mxu0 0.0
    %1716 = vmatpush1.msra.mxu0 0.0
    %1717 = vmatprep.subr.mxu0 0.0
    %1718 = vmatpush1.msra.mxu0 0.0
    %1719 = vmatprep.subr.mxu0 0.0
    %1720 = vmatpush1.msra.mxu0 0.0
    %1721 = vmatprep.subr.mxu0 0.0
    %1722 = vmatpush1.msra.mxu0 0.0
    %1723 = vmatprep.subr.mxu0 0.0
    %1724 = vmatpush1.msra.mxu0 0.0
    %1725 = vmatprep.subr.mxu0 0.0
    %1726 = vmatpush1.msra.mxu0 0.0
    %1727 = vmatprep.subr.mxu0 0.0
    %1728 = vmatpush1.msra.mxu0 0.0
    %1729 = vmatprep.subr.mxu0 0.0
    %1730 = vmatpush1.msra.mxu0 0.0
    %1731 = vmatprep.subr.mxu0 0.0
    %1732 = vmatpush1.msra.mxu0 0.0
    %1733 = vmatprep.subr.mxu0 0.0
    %1734 = vmatpush1.msra.mxu0 0.0
    %1735 = vmatprep.subr.mxu0 0.0
    %1736 = vmatpush1.msra.mxu0 0.0
    %1737 = vmatprep.subr.mxu0 0.0
    %1738 = vmatpush1.msra.mxu0 0.0
    %1739 = vmatprep.subr.mxu0 0.0
    %1740 = vmatpush1.msra.mxu0 0.0
    %1741 = vmatprep.mubr.f32.mxu0 0.0
    %1742 = vmatmul.mubr.f32.gmra.mrb[0].mxu0 %v1580
    %v1743 = vpop.f32.mrb[0].mxu0
    %v1744 = vadd.f32 0.0, %v1743
    %v1745 = vpop.f32.mrb[0].mxu0
    %1746 = vdwg.mxu0
    %v1748 = vrot.slane %v1744, 6
    %v1750 = vadd.f32 %v265, %v1748
    %v1751 = vxor.u32 %v1750, 2147483648
    %v1752 = vmul.f32 %v1751, 1.442695
    %v1753 = vpow.pop %v1752
    %v1754 = vadd.f32 %v1753, 1.0
    %v1755 = vrcp.pop %v1754
    %v1756 = vmul.f32 1.0, %v1755
    %v1757 = vtanh.pop %v1750
    %v1759 = vrot.slane %v1495, 6
    %v1761 = vmul.f32 %v1756, %v1759
    %1763 = vrot.lane.b32.xlu0 %v1757, 32
    %v1764 = vpop.permute.xlu0 %1763
    %v1766 = vmul.f32 %v1756, %v1764
    %1768 = vrot.lane.b32.xlu0 %v1766, 32
    %v1769 = vpop.permute.xlu0 %1768
    %v1771 = vadd.f32 %v1761, %v1769
    %v1772 = vtanh.pop %v1771
    %1774 = vrot.lane.b32.xlu0 %v1772, 32
    %v1775 = vpop.permute.xlu0 %1774
    %v1777 = vmul.f32 %v1756, %v1775
    %1779 = vrot.lane.b32.xlu0 %v1676, 64
    %v1780 = vpop.permute.xlu0 %1779
    %v1781 = vsel %vm287, %v1780, 0
    %1783 = vmatprep.subr.mxu0 0.0
    %1784 = vmatpush1.msra.mxu0 %v276
    %1785 = vmatprep.subr.mxu0 0.0
    %1786 = vmatpush1.msra.mxu0 %v277
    %1787 = vmatprep.subr.mxu0 0.0
    %1788 = vmatpush1.msra.mxu0 %v278
    %1789 = vmatprep.subr.mxu0 0.0
    %1790 = vmatpush1.msra.mxu0 %v279
    %1791 = vmatprep.subr.mxu0 0.0
    %1792 = vmatpush1.msra.mxu0 0.0
    %1793 = vmatprep.subr.mxu0 0.0
    %1794 = vmatpush1.msra.mxu0 0.0
    %1795 = vmatprep.subr.mxu0 0.0
    %1796 = vmatpush1.msra.mxu0 0.0
    %1797 = vmatprep.subr.mxu0 0.0
    %1798 = vmatpush1.msra.mxu0 0.0
    %1799 = vmatprep.subr.mxu0 0.0
    %1800 = vmatpush1.msra.mxu0 0.0
    %1801 = vmatprep.subr.mxu0 0.0
    %1802 = vmatpush1.msra.mxu0 0.0
    %1803 = vmatprep.subr.mxu0 0.0
    %1804 = vmatpush1.msra.mxu0 0.0
    %1805 = vmatprep.subr.mxu0 0.0
    %1806 = vmatpush1.msra.mxu0 0.0
    %1807 = vmatprep.subr.mxu0 0.0
    %1808 = vmatpush1.msra.mxu0 0.0
    %1809 = vmatprep.subr.mxu0 0.0
    %1810 = vmatpush1.msra.mxu0 0.0
    %1811 = vmatprep.subr.mxu0 0.0
    %1812 = vmatpush1.msra.mxu0 0.0
    %1813 = vmatprep.subr.mxu0 0.0
    %1814 = vmatpush1.msra.mxu0 0.0
    %1815 = vmatprep.subr.mxu0 0.0
    %1816 = vmatpush1.msra.mxu0 0.0
    %1817 = vmatprep.subr.mxu0 0.0
    %1818 = vmatpush1.msra.mxu0 0.0
    %1819 = vmatprep.subr.mxu0 0.0
    %1820 = vmatpush1.msra.mxu0 0.0
    %1821 = vmatprep.subr.mxu0 0.0
    %1822 = vmatpush1.msra.mxu0 0.0
    %1823 = vmatprep.subr.mxu0 0.0
    %1824 = vmatpush1.msra.mxu0 0.0
    %1825 = vmatprep.subr.mxu0 0.0
    %1826 = vmatpush1.msra.mxu0 0.0
    %1827 = vmatprep.subr.mxu0 0.0
    %1828 = vmatpush1.msra.mxu0 0.0
    %1829 = vmatprep.subr.mxu0 0.0
    %1830 = vmatpush1.msra.mxu0 0.0
    %1831 = vmatprep.subr.mxu0 0.0
    %1832 = vmatpush1.msra.mxu0 0.0
    %1833 = vmatprep.subr.mxu0 0.0
    %1834 = vmatpush1.msra.mxu0 0.0
    %1835 = vmatprep.subr.mxu0 0.0
    %1836 = vmatpush1.msra.mxu0 0.0
    %1837 = vmatprep.subr.mxu0 0.0
    %1838 = vmatpush1.msra.mxu0 0.0
    %1839 = vmatprep.subr.mxu0 0.0
    %1840 = vmatpush1.msra.mxu0 0.0
    %1841 = vmatprep.subr.mxu0 0.0
    %1842 = vmatpush1.msra.mxu0 0.0
    %1843 = vmatprep.subr.mxu0 0.0
    %1844 = vmatpush1.msra.mxu0 0.0
    %1845 = vmatprep.subr.mxu0 0.0
    %1846 = vmatpush1.msra.mxu0 0.0
    %1847 = vmatprep.mubr.f32.mxu0 0.0
    %1848 = vmatmul.mubr.f32.gmra.mrb[0].mxu0 %v1781
    %v1849 = vpop.f32.mrb[0].mxu0
    %v1850 = vadd.f32 0.0, %v1849
    %v1851 = vpop.f32.mrb[0].mxu0
    %1852 = vdwg.mxu0
    %v1854 = vrot.slane %v1777, 2
    %1855 = vrot.lane.b32.xlu0 %v1854, 64
    %v1856 = vpop.permute.xlu0 %1855
    %v1857 = vsel %vm287, %v1856, 0
    %1859 = vmatprep.subr.mxu0 0.0
    %1860 = vmatpush1.msra.mxu0 %v272
    %1861 = vmatprep.subr.mxu0 0.0
    %1862 = vmatpush1.msra.mxu0 %v273
    %1863 = vmatprep.subr.mxu0 0.0
    %1864 = vmatpush1.msra.mxu0 %v274
    %1865 = vmatprep.subr.mxu0 0.0
    %1866 = vmatpush1.msra.mxu0 %v275
    %1867 = vmatprep.subr.mxu0 0.0
    %1868 = vmatpush1.msra.mxu0 0.0
    %1869 = vmatprep.subr.mxu0 0.0
    %1870 = vmatpush1.msra.mxu0 0.0
    %1871 = vmatprep.subr.mxu0 0.0
    %1872 = vmatpush1.msra.mxu0 0.0
    %1873 = vmatprep.subr.mxu0 0.0
    %1874 = vmatpush1.msra.mxu0 0.0
    %1875 = vmatprep.subr.mxu0 0.0
    %1876 = vmatpush1.msra.mxu0 0.0
    %1877 = vmatprep.subr.mxu0 0.0
    %1878 = vmatpush1.msra.mxu0 0.0
    %1879 = vmatprep.subr.mxu0 0.0
    %1880 = vmatpush1.msra.mxu0 0.0
    %1881 = vmatprep.subr.mxu0 0.0
    %1882 = vmatpush1.msra.mxu0 0.0
    %1883 = vmatprep.subr.mxu0 0.0
    %1884 = vmatpush1.msra.mxu0 0.0
    %1885 = vmatprep.subr.mxu0 0.0
    %1886 = vmatpush1.msra.mxu0 0.0
    %1887 = vmatprep.subr.mxu0 0.0
    %1888 = vmatpush1.msra.mxu0 0.0
    %1889 = vmatprep.subr.mxu0 0.0
    %1890 = vmatpush1.msra.mxu0 0.0
    %1891 = vmatprep.subr.mxu0 0.0
    %1892 = vmatpush1.msra.mxu0 0.0
    %1893 = vmatprep.subr.mxu0 0.0
    %1894 = vmatpush1.msra.mxu0 0.0
    %1895 = vmatprep.subr.mxu0 0.0
    %1896 = vmatpush1.msra.mxu0 0.0
    %1897 = vmatprep.subr.mxu0 0.0
    %1898 = vmatpush1.msra.mxu0 0.0
    %1899 = vmatprep.subr.mxu0 0.0
    %1900 = vmatpush1.msra.mxu0 0.0
    %1901 = vmatprep.subr.mxu0 0.0
    %1902 = vmatpush1.msra.mxu0 0.0
    %1903 = vmatprep.subr.mxu0 0.0
    %1904 = vmatpush1.msra.mxu0 0.0
    %1905 = vmatprep.subr.mxu0 0.0
    %1906 = vmatpush1.msra.mxu0 0.0
    %1907 = vmatprep.subr.mxu0 0.0
    %1908 = vmatpush1.msra.mxu0 0.0
    %1909 = vmatprep.subr.mxu0 0.0
    %1910 = vmatpush1.msra.mxu0 0.0
    %1911 = vmatprep.subr.mxu0 0.0
    %1912 = vmatpush1.msra.mxu0 0.0
    %1913 = vmatprep.subr.mxu0 0.0
    %1914 = vmatpush1.msra.mxu0 0.0
    %1915 = vmatprep.subr.mxu0 0.0
    %1916 = vmatpush1.msra.mxu0 0.0
    %1917 = vmatprep.subr.mxu0 0.0
    %1918 = vmatpush1.msra.mxu0 0.0
    %1919 = vmatprep.subr.mxu0 0.0
    %1920 = vmatpush1.msra.mxu0 0.0
    %1921 = vmatprep.subr.mxu0 0.0
    %1922 = vmatpush1.msra.mxu0 0.0
    %1923 = vmatprep.mubr.f32.mxu0 0.0
    %1924 = vmatmul.mubr.f32.gmra.mrb[0].mxu0 %v1857
    %v1925 = vpop.f32.mrb[0].mxu0
    %v1926 = vadd.f32 %v1850, %v1925
    %v1927 = vpop.f32.mrb[0].mxu0
    %1928 = vdwg.mxu0
    %v1929 = vadd.f32 %v1926, %v542
    %v1930 = vxor.u32 %v1929, 2147483648
    %v1931 = vmul.f32 %v1930, 1.442695
    %v1932 = vpow.pop %v1931
    %v1933 = vadd.f32 %v1932, 1.0
    %v1934 = vrcp.pop %v1933
    %v1935 = vmul.f32 1.0, %v1934
    %v1936 = vtanh.pop %v1929
    %v1937 = vmul.f32 %v1935, %v1670
    %1939 = vrot.lane.b32.xlu0 %v1936, 32
    %v1940 = vpop.permute.xlu0 %1939
    %v1942 = vmul.f32 %v1935, %v1940
    %1944 = vrot.lane.b32.xlu0 %v1942, 32
    %v1945 = vpop.permute.xlu0 %1944
    %v1947 = vadd.f32 %v1937, %v1945
    %v1948 = vtanh.pop %v1947
    %1950 = vrot.lane.b32.xlu0 %v1948, 32
    %v1951 = vpop.permute.xlu0 %1950
    %v1953 = vmul.f32 %v1935, %v1951
    %1954 = vmatprep.subr.mxu0 0.0
    %1955 = vmatpush1.msra.mxu0 %v268
    %1956 = vmatprep.subr.mxu0 0.0
    %1957 = vmatpush1.msra.mxu0 %v269
    %1958 = vmatprep.subr.mxu0 0.0
    %1959 = vmatpush1.msra.mxu0 %v270
    %1960 = vmatprep.subr.mxu0 0.0
    %1961 = vmatpush1.msra.mxu0 %v271
    %1962 = vmatprep.subr.mxu0 0.0
    %1963 = vmatpush1.msra.mxu0 0.0
    %1964 = vmatprep.subr.mxu0 0.0
    %1965 = vmatpush1.msra.mxu0 0.0
    %1966 = vmatprep.subr.mxu0 0.0
    %1967 = vmatpush1.msra.mxu0 0.0
    %1968 = vmatprep.subr.mxu0 0.0
    %1969 = vmatpush1.msra.mxu0 0.0
    %1970 = vmatprep.subr.mxu0 0.0
    %1971 = vmatpush1.msra.mxu0 0.0
    %1972 = vmatprep.subr.mxu0 0.0
    %1973 = vmatpush1.msra.mxu0 0.0
    %1974 = vmatprep.subr.mxu0 0.0
    %1975 = vmatpush1.msra.mxu0 0.0
    %1976 = vmatprep.subr.mxu0 0.0
    %1977 = vmatpush1.msra.mxu0 0.0
    %1978 = vmatprep.subr.mxu0 0.0
    %1979 = vmatpush1.msra.mxu0 0.0
    %1980 = vmatprep.subr.mxu0 0.0
    %1981 = vmatpush1.msra.mxu0 0.0
    %1982 = vmatprep.subr.mxu0 0.0
    %1983 = vmatpush1.msra.mxu0 0.0
    %1984 = vmatprep.subr.mxu0 0.0
    %1985 = vmatpush1.msra.mxu0 0.0
    %1986 = vmatprep.subr.mxu0 0.0
    %1987 = vmatpush1.msra.mxu0 0.0
    %1988 = vmatprep.subr.mxu0 0.0
    %1989 = vmatpush1.msra.mxu0 0.0
    %1990 = vmatprep.subr.mxu0 0.0
    %1991 = vmatpush1.msra.mxu0 0.0
    %1992 = vmatprep.subr.mxu0 0.0
    %1993 = vmatpush1.msra.mxu0 0.0
    %1994 = vmatprep.subr.mxu0 0.0
    %1995 = vmatpush1.msra.mxu0 0.0
    %1996 = vmatprep.subr.mxu0 0.0
    %1997 = vmatpush1.msra.mxu0 0.0
    %1998 = vmatprep.subr.mxu0 0.0
    %1999 = vmatpush1.msra.mxu0 0.0
    %2000 = vmatprep.subr.mxu0 0.0
    %2001 = vmatpush1.msra.mxu0 0.0
    %2002 = vmatprep.subr.mxu0 0.0
    %2003 = vmatpush1.msra.mxu0 0.0
    %2004 = vmatprep.subr.mxu0 0.0
    %2005 = vmatpush1.msra.mxu0 0.0
    %2006 = vmatprep.subr.mxu0 0.0
    %2007 = vmatpush1.msra.mxu0 0.0
    %2008 = vmatprep.subr.mxu0 0.0
    %2009 = vmatpush1.msra.mxu0 0.0
    %2010 = vmatprep.subr.mxu0 0.0
    %2011 = vmatpush1.msra.mxu0 0.0
    %2012 = vmatprep.subr.mxu0 0.0
    %2013 = vmatpush1.msra.mxu0 0.0
    %2014 = vmatprep.subr.mxu0 0.0
    %2015 = vmatpush1.msra.mxu0 0.0
    %2016 = vmatprep.subr.mxu0 0.0
    %2017 = vmatpush1.msra.mxu0 0.0
    %2018 = vmatprep.mubr.f32.mxu0 0.0
    %2019 = vmatmul.mubr.f32.gmra.mrb[0].mxu0 %v1857
    %v2020 = vpop.f32.mrb[0].mxu0
    %v2021 = vadd.f32 0.0, %v2020
    %v2022 = vpop.f32.mrb[0].mxu0
    %2023 = vdwg.mxu0
    %v2025 = vrot.slane %v2021, 4
    %v2027 = vadd.f32 %v265, %v2025
    %v2028 = vxor.u32 %v2027, 2147483648
    %v2029 = vmul.f32 %v2028, 1.442695
    %v2030 = vpow.pop %v2029
    %v2031 = vadd.f32 %v2030, 1.0
    %v2032 = vrcp.pop %v2031
    %v2033 = vmul.f32 1.0, %v2032
    %v2034 = vtanh.pop %v2027
    %v2036 = vrot.slane %v1771, 6
    %v2038 = vmul.f32 %v2033, %v2036
    %2040 = vrot.lane.b32.xlu0 %v2034, 32
    %v2041 = vpop.permute.xlu0 %2040
    %v2043 = vmul.f32 %v2033, %v2041
    %2045 = vrot.lane.b32.xlu0 %v2043, 32
    %v2046 = vpop.permute.xlu0 %2045
    %v2048 = vadd.f32 %v2038, %v2046
    %v2049 = vtanh.pop %v2048
    %2051 = vrot.lane.b32.xlu0 %v2049, 32
    %v2052 = vpop.permute.xlu0 %2051
    %v2054 = vmul.f32 %v2033, %v2052
    %2056 = vrot.lane.b32.xlu0 %v1953, 64
    %v2057 = vpop.permute.xlu0 %2056
    %v2058 = vsel %vm287, %v2057, 0
    %2060 = vmatprep.subr.mxu0 0.0
    %2061 = vmatpush1.msra.mxu0 %v276
    %2062 = vmatprep.subr.mxu0 0.0
    %2063 = vmatpush1.msra.mxu0 %v277
    %2064 = vmatprep.subr.mxu0 0.0
    %2065 = vmatpush1.msra.mxu0 %v278
    %2066 = vmatprep.subr.mxu0 0.0
    %2067 = vmatpush1.msra.mxu0 %v279
    %2068 = vmatprep.subr.mxu0 0.0
    %2069 = vmatpush1.msra.mxu0 0.0
    %2070 = vmatprep.subr.mxu0 0.0
    %2071 = vmatpush1.msra.mxu0 0.0
    %2072 = vmatprep.subr.mxu0 0.0
    %2073 = vmatpush1.msra.mxu0 0.0
    %2074 = vmatprep.subr.mxu0 0.0
    %2075 = vmatpush1.msra.mxu0 0.0
    %2076 = vmatprep.subr.mxu0 0.0
    %2077 = vmatpush1.msra.mxu0 0.0
    %2078 = vmatprep.subr.mxu0 0.0
    %2079 = vmatpush1.msra.mxu0 0.0
    %2080 = vmatprep.subr.mxu0 0.0
    %2081 = vmatpush1.msra.mxu0 0.0
    %2082 = vmatprep.subr.mxu0 0.0
    %2083 = vmatpush1.msra.mxu0 0.0
    %2084 = vmatprep.subr.mxu0 0.0
    %2085 = vmatpush1.msra.mxu0 0.0
    %2086 = vmatprep.subr.mxu0 0.0
    %2087 = vmatpush1.msra.mxu0 0.0
    %2088 = vmatprep.subr.mxu0 0.0
    %2089 = vmatpush1.msra.mxu0 0.0
    %2090 = vmatprep.subr.mxu0 0.0
    %2091 = vmatpush1.msra.mxu0 0.0
    %2092 = vmatprep.subr.mxu0 0.0
    %2093 = vmatpush1.msra.mxu0 0.0
    %2094 = vmatprep.subr.mxu0 0.0
    %2095 = vmatpush1.msra.mxu0 0.0
    %2096 = vmatprep.subr.mxu0 0.0
    %2097 = vmatpush1.msra.mxu0 0.0
    %2098 = vmatprep.subr.mxu0 0.0
    %2099 = vmatpush1.msra.mxu0 0.0
    %2100 = vmatprep.subr.mxu0 0.0
    %2101 = vmatpush1.msra.mxu0 0.0
    %2102 = vmatprep.subr.mxu0 0.0
    %2103 = vmatpush1.msra.mxu0 0.0
    %2104 = vmatprep.subr.mxu0 0.0
    %2105 = vmatpush1.msra.mxu0 0.0
    %2106 = vmatprep.subr.mxu0 0.0
    %2107 = vmatpush1.msra.mxu0 0.0
    %2108 = vmatprep.subr.mxu0 0.0
    %2109 = vmatpush1.msra.mxu0 0.0
    %2110 = vmatprep.subr.mxu0 0.0
    %2111 = vmatpush1.msra.mxu0 0.0
    %2112 = vmatprep.subr.mxu0 0.0
    %2113 = vmatpush1.msra.mxu0 0.0
    %2114 = vmatprep.subr.mxu0 0.0
    %2115 = vmatpush1.msra.mxu0 0.0
    %2116 = vmatprep.subr.mxu0 0.0
    %2117 = vmatpush1.msra.mxu0 0.0
    %2118 = vmatprep.subr.mxu0 0.0
    %2119 = vmatpush1.msra.mxu0 0.0
    %2120 = vmatprep.subr.mxu0 0.0
    %2121 = vmatpush1.msra.mxu0 0.0
    %2122 = vmatprep.subr.mxu0 0.0
    %2123 = vmatpush1.msra.mxu0 0.0
    %2124 = vmatprep.mubr.f32.mxu0 0.0
    %2125 = vmatmul.mubr.f32.gmra.mrb[0].mxu0 %v2058
    %v2126 = vpop.f32.mrb[0].mxu0
    %v2127 = vadd.f32 0.0, %v2126
    %v2128 = vpop.f32.mrb[0].mxu0
    %2129 = vdwg.mxu0
    %v2131 = vrot.slane %v2054, 4
    %2132 = vrot.lane.b32.xlu0 %v2131, 64
    %v2133 = vpop.permute.xlu0 %2132
    %v2134 = vsel %vm287, %v2133, 0
    %2136 = vmatprep.subr.mxu0 0.0
    %2137 = vmatpush1.msra.mxu0 %v272
    %2138 = vmatprep.subr.mxu0 0.0
    %2139 = vmatpush1.msra.mxu0 %v273
    %2140 = vmatprep.subr.mxu0 0.0
    %2141 = vmatpush1.msra.mxu0 %v274
    %2142 = vmatprep.subr.mxu0 0.0
    %2143 = vmatpush1.msra.mxu0 %v275
    %2144 = vmatprep.subr.mxu0 0.0
    %2145 = vmatpush1.msra.mxu0 0.0
    %2146 = vmatprep.subr.mxu0 0.0
    %2147 = vmatpush1.msra.mxu0 0.0
    %2148 = vmatprep.subr.mxu0 0.0
    %2149 = vmatpush1.msra.mxu0 0.0
    %2150 = vmatprep.subr.mxu0 0.0
    %2151 = vmatpush1.msra.mxu0 0.0
    %2152 = vmatprep.subr.mxu0 0.0
    %2153 = vmatpush1.msra.mxu0 0.0
    %2154 = vmatprep.subr.mxu0 0.0
    %2155 = vmatpush1.msra.mxu0 0.0
    %2156 = vmatprep.subr.mxu0 0.0
    %2157 = vmatpush1.msra.mxu0 0.0
    %2158 = vmatprep.subr.mxu0 0.0
    %2159 = vmatpush1.msra.mxu0 0.0
    %2160 = vmatprep.subr.mxu0 0.0
    %2161 = vmatpush1.msra.mxu0 0.0
    %2162 = vmatprep.subr.mxu0 0.0
    %2163 = vmatpush1.msra.mxu0 0.0
    %2164 = vmatprep.subr.mxu0 0.0
    %2165 = vmatpush1.msra.mxu0 0.0
    %2166 = vmatprep.subr.mxu0 0.0
    %2167 = vmatpush1.msra.mxu0 0.0
    %2168 = vmatprep.subr.mxu0 0.0
    %2169 = vmatpush1.msra.mxu0 0.0
    %2170 = vmatprep.subr.mxu0 0.0
    %2171 = vmatpush1.msra.mxu0 0.0
    %2172 = vmatprep.subr.mxu0 0.0
    %2173 = vmatpush1.msra.mxu0 0.0
    %2174 = vmatprep.subr.mxu0 0.0
    %2175 = vmatpush1.msra.mxu0 0.0
    %2176 = vmatprep.subr.mxu0 0.0
    %2177 = vmatpush1.msra.mxu0 0.0
    %2178 = vmatprep.subr.mxu0 0.0
    %2179 = vmatpush1.msra.mxu0 0.0
    %2180 = vmatprep.subr.mxu0 0.0
    %2181 = vmatpush1.msra.mxu0 0.0
    %2182 = vmatprep.subr.mxu0 0.0
    %2183 = vmatpush1.msra.mxu0 0.0
    %2184 = vmatprep.subr.mxu0 0.0
    %2185 = vmatpush1.msra.mxu0 0.0
    %2186 = vmatprep.subr.mxu0 0.0
    %2187 = vmatpush1.msra.mxu0 0.0
    %2188 = vmatprep.subr.mxu0 0.0
    %2189 = vmatpush1.msra.mxu0 0.0
    %2190 = vmatprep.subr.mxu0 0.0
    %2191 = vmatpush1.msra.mxu0 0.0
    %2192 = vmatprep.subr.mxu0 0.0
    %2193 = vmatpush1.msra.mxu0 0.0
    %2194 = vmatprep.subr.mxu0 0.0
    %2195 = vmatpush1.msra.mxu0 0.0
    %2196 = vmatprep.subr.mxu0 0.0
    %2197 = vmatpush1.msra.mxu0 0.0
    %2198 = vmatprep.subr.mxu0 0.0
    %2199 = vmatpush1.msra.mxu0 0.0
    %2200 = vmatprep.mubr.f32.mxu0 0.0
    %2201 = vmatmul.mubr.f32.gmra.mrb[0].mxu0 %v2134
    %v2202 = vpop.f32.mrb[0].mxu0
    %v2203 = vadd.f32 %v2127, %v2202
    %v2204 = vpop.f32.mrb[0].mxu0
    %2205 = vdwg.mxu0
    %v2206 = vadd.f32 %v2203, %v542
    %v2207 = vxor.u32 %v2206, 2147483648
    %v2208 = vmul.f32 %v2207, 1.442695
    %v2209 = vpow.pop %v2208
    %v2210 = vadd.f32 %v2209, 1.0
    %v2211 = vrcp.pop %v2210
    %v2212 = vmul.f32 1.0, %v2211
    %v2213 = vtanh.pop %v2206
    %v2214 = vmul.f32 %v2212, %v1947
    %2216 = vrot.lane.b32.xlu0 %v2213, 32
    %v2217 = vpop.permute.xlu0 %2216
    %v2219 = vmul.f32 %v2212, %v2217
    %2221 = vrot.lane.b32.xlu0 %v2219, 32
    %v2222 = vpop.permute.xlu0 %2221
    %v2224 = vadd.f32 %v2214, %v2222
    %v2225 = vtanh.pop %v2224
    %2227 = vrot.lane.b32.xlu0 %v2225, 32
    %v2228 = vpop.permute.xlu0 %2227
    %v2230 = vmul.f32 %v2212, %v2228
    %2231 = vmatprep.subr.mxu0 0.0
    %2232 = vmatpush1.msra.mxu0 %v268
    %2233 = vmatprep.subr.mxu0 0.0
    %2234 = vmatpush1.msra.mxu0 %v269
    %2235 = vmatprep.subr.mxu0 0.0
    %2236 = vmatpush1.msra.mxu0 %v270
    %2237 = vmatprep.subr.mxu0 0.0
    %2238 = vmatpush1.msra.mxu0 %v271
    %2239 = vmatprep.subr.mxu0 0.0
    %2240 = vmatpush1.msra.mxu0 0.0
    %2241 = vmatprep.subr.mxu0 0.0
    %2242 = vmatpush1.msra.mxu0 0.0
    %2243 = vmatprep.subr.mxu0 0.0
    %2244 = vmatpush1.msra.mxu0 0.0
    %2245 = vmatprep.subr.mxu0 0.0
    %2246 = vmatpush1.msra.mxu0 0.0
    %2247 = vmatprep.subr.mxu0 0.0
    %2248 = vmatpush1.msra.mxu0 0.0
    %2249 = vmatprep.subr.mxu0 0.0
    %2250 = vmatpush1.msra.mxu0 0.0
    %2251 = vmatprep.subr.mxu0 0.0
    %2252 = vmatpush1.msra.mxu0 0.0
    %2253 = vmatprep.subr.mxu0 0.0
    %2254 = vmatpush1.msra.mxu0 0.0
    %2255 = vmatprep.subr.mxu0 0.0
    %2256 = vmatpush1.msra.mxu0 0.0
    %2257 = vmatprep.subr.mxu0 0.0
    %2258 = vmatpush1.msra.mxu0 0.0
    %2259 = vmatprep.subr.mxu0 0.0
    %2260 = vmatpush1.msra.mxu0 0.0
    %2261 = vmatprep.subr.mxu0 0.0
    %2262 = vmatpush1.msra.mxu0 0.0
    %2263 = vmatprep.subr.mxu0 0.0
    %2264 = vmatpush1.msra.mxu0 0.0
    %2265 = vmatprep.subr.mxu0 0.0
    %2266 = vmatpush1.msra.mxu0 0.0
    %2267 = vmatprep.subr.mxu0 0.0
    %2268 = vmatpush1.msra.mxu0 0.0
    %2269 = vmatprep.subr.mxu0 0.0
    %2270 = vmatpush1.msra.mxu0 0.0
    %2271 = vmatprep.subr.mxu0 0.0
    %2272 = vmatpush1.msra.mxu0 0.0
    %2273 = vmatprep.subr.mxu0 0.0
    %2274 = vmatpush1.msra.mxu0 0.0
    %2275 = vmatprep.subr.mxu0 0.0
    %2276 = vmatpush1.msra.mxu0 0.0
    %2277 = vmatprep.subr.mxu0 0.0
    %2278 = vmatpush1.msra.mxu0 0.0
    %2279 = vmatprep.subr.mxu0 0.0
    %2280 = vmatpush1.msra.mxu0 0.0
    %2281 = vmatprep.subr.mxu0 0.0
    %2282 = vmatpush1.msra.mxu0 0.0
    %2283 = vmatprep.subr.mxu0 0.0
    %2284 = vmatpush1.msra.mxu0 0.0
    %2285 = vmatprep.subr.mxu0 0.0
    %2286 = vmatpush1.msra.mxu0 0.0
    %2287 = vmatprep.subr.mxu0 0.0
    %2288 = vmatpush1.msra.mxu0 0.0
    %2289 = vmatprep.subr.mxu0 0.0
    %2290 = vmatpush1.msra.mxu0 0.0
    %2291 = vmatprep.subr.mxu0 0.0
    %2292 = vmatpush1.msra.mxu0 0.0
    %2293 = vmatprep.subr.mxu0 0.0
    %2294 = vmatpush1.msra.mxu0 0.0
    %2295 = vmatprep.mubr.f32.mxu0 0.0
    %2296 = vmatmul.mubr.f32.gmra.mrb[0].mxu0 %v2134
    %v2297 = vpop.f32.mrb[0].mxu0
    %v2298 = vadd.f32 0.0, %v2297
    %v2299 = vpop.f32.mrb[0].mxu0
    %2300 = vdwg.mxu0
    %v2302 = vrot.slane %v2298, 2
    %v2304 = vadd.f32 %v265, %v2302
    %v2305 = vxor.u32 %v2304, 2147483648
    %v2306 = vmul.f32 %v2305, 1.442695
    %v2307 = vpow.pop %v2306
    %v2308 = vadd.f32 %v2307, 1.0
    %v2309 = vrcp.pop %v2308
    %v2310 = vmul.f32 1.0, %v2309
    %v2311 = vtanh.pop %v2304
    %v2313 = vrot.slane %v2048, 6
    %v2315 = vmul.f32 %v2310, %v2313
    %2317 = vrot.lane.b32.xlu0 %v2311, 32
    %v2318 = vpop.permute.xlu0 %2317
    %v2320 = vmul.f32 %v2310, %v2318
    %2322 = vrot.lane.b32.xlu0 %v2320, 32
    %v2323 = vpop.permute.xlu0 %2322
    %v2325 = vadd.f32 %v2315, %v2323
    %v2326 = vtanh.pop %v2325
    %2328 = vrot.lane.b32.xlu0 %v2326, 32
    %v2329 = vpop.permute.xlu0 %2328
    %v2331 = vmul.f32 %v2310, %v2329
    %2333 = vrot.lane.b32.xlu0 %v2230, 64
    %v2334 = vpop.permute.xlu0 %2333
    %v2335 = vsel %vm287, %v2334, 0
    %2337 = vmatprep.subr.mxu0 0.0
    %2338 = vmatpush1.msra.mxu0 %v276
    %2339 = vmatprep.subr.mxu0 0.0
    %2340 = vmatpush1.msra.mxu0 %v277
    %2341 = vmatprep.subr.mxu0 0.0
    %2342 = vmatpush1.msra.mxu0 %v278
    %2343 = vmatprep.subr.mxu0 0.0
    %2344 = vmatpush1.msra.mxu0 %v279
    %2345 = vmatprep.subr.mxu0 0.0
    %2346 = vmatpush1.msra.mxu0 0.0
    %2347 = vmatprep.subr.mxu0 0.0
    %2348 = vmatpush1.msra.mxu0 0.0
    %2349 = vmatprep.subr.mxu0 0.0
    %2350 = vmatpush1.msra.mxu0 0.0
    %2351 = vmatprep.subr.mxu0 0.0
    %2352 = vmatpush1.msra.mxu0 0.0
    %2353 = vmatprep.subr.mxu0 0.0
    %2354 = vmatpush1.msra.mxu0 0.0
    %2355 = vmatprep.subr.mxu0 0.0
    %2356 = vmatpush1.msra.mxu0 0.0
    %2357 = vmatprep.subr.mxu0 0.0
    %2358 = vmatpush1.msra.mxu0 0.0
    %2359 = vmatprep.subr.mxu0 0.0
    %2360 = vmatpush1.msra.mxu0 0.0
    %2361 = vmatprep.subr.mxu0 0.0
    %2362 = vmatpush1.msra.mxu0 0.0
    %2363 = vmatprep.subr.mxu0 0.0
    %2364 = vmatpush1.msra.mxu0 0.0
    %2365 = vmatprep.subr.mxu0 0.0
    %2366 = vmatpush1.msra.mxu0 0.0
    %2367 = vmatprep.subr.mxu0 0.0
    %2368 = vmatpush1.msra.mxu0 0.0
    %2369 = vmatprep.subr.mxu0 0.0
    %2370 = vmatpush1.msra.mxu0 0.0
    %2371 = vmatprep.subr.mxu0 0.0
    %2372 = vmatpush1.msra.mxu0 0.0
    %2373 = vmatprep.subr.mxu0 0.0
    %2374 = vmatpush1.msra.mxu0 0.0
    %2375 = vmatprep.subr.mxu0 0.0
    %2376 = vmatpush1.msra.mxu0 0.0
    %2377 = vmatprep.subr.mxu0 0.0
    %2378 = vmatpush1.msra.mxu0 0.0
    %2379 = vmatprep.subr.mxu0 0.0
    %2380 = vmatpush1.msra.mxu0 0.0
    %2381 = vmatprep.subr.mxu0 0.0
    %2382 = vmatpush1.msra.mxu0 0.0
    %2383 = vmatprep.subr.mxu0 0.0
    %2384 = vmatpush1.msra.mxu0 0.0
    %2385 = vmatprep.subr.mxu0 0.0
    %2386 = vmatpush1.msra.mxu0 0.0
    %2387 = vmatprep.subr.mxu0 0.0
    %2388 = vmatpush1.msra.mxu0 0.0
    %2389 = vmatprep.subr.mxu0 0.0
    %2390 = vmatpush1.msra.mxu0 0.0
    %2391 = vmatprep.subr.mxu0 0.0
    %2392 = vmatpush1.msra.mxu0 0.0
    %2393 = vmatprep.subr.mxu0 0.0
    %2394 = vmatpush1.msra.mxu0 0.0
    %2395 = vmatprep.subr.mxu0 0.0
    %2396 = vmatpush1.msra.mxu0 0.0
    %2397 = vmatprep.subr.mxu0 0.0
    %2398 = vmatpush1.msra.mxu0 0.0
    %2399 = vmatprep.subr.mxu0 0.0
    %2400 = vmatpush1.msra.mxu0 0.0
    %2401 = vmatprep.mubr.f32.mxu0 0.0
    %2402 = vmatmul.mubr.f32.gmra.mrb[0].mxu0 %v2335
    %v2403 = vpop.f32.mrb[0].mxu0
    %v2404 = vadd.f32 0.0, %v2403
    %v2405 = vpop.f32.mrb[0].mxu0
    %2406 = vdwg.mxu0
    %v2408 = vrot.slane %v2331, 6
    %2409 = vrot.lane.b32.xlu0 %v2408, 64
    %v2410 = vpop.permute.xlu0 %2409
    %v2411 = vsel %vm287, %v2410, 0
    %2413 = vmatprep.subr.mxu0 0.0
    %2414 = vmatpush1.msra.mxu0 %v272
    %2415 = vmatprep.subr.mxu0 0.0
    %2416 = vmatpush1.msra.mxu0 %v273
    %2417 = vmatprep.subr.mxu0 0.0
    %2418 = vmatpush1.msra.mxu0 %v274
    %2419 = vmatprep.subr.mxu0 0.0
    %2420 = vmatpush1.msra.mxu0 %v275
    %2421 = vmatprep.subr.mxu0 0.0
    %2422 = vmatpush1.msra.mxu0 0.0
    %2423 = vmatprep.subr.mxu0 0.0
    %2424 = vmatpush1.msra.mxu0 0.0
    %2425 = vmatprep.subr.mxu0 0.0
    %2426 = vmatpush1.msra.mxu0 0.0
    %2427 = vmatprep.subr.mxu0 0.0
    %2428 = vmatpush1.msra.mxu0 0.0
    %2429 = vmatprep.subr.mxu0 0.0
    %2430 = vmatpush1.msra.mxu0 0.0
    %2431 = vmatprep.subr.mxu0 0.0
    %2432 = vmatpush1.msra.mxu0 0.0
    %2433 = vmatprep.subr.mxu0 0.0
    %2434 = vmatpush1.msra.mxu0 0.0
    %2435 = vmatprep.subr.mxu0 0.0
    %2436 = vmatpush1.msra.mxu0 0.0
    %2437 = vmatprep.subr.mxu0 0.0
    %2438 = vmatpush1.msra.mxu0 0.0
    %2439 = vmatprep.subr.mxu0 0.0
    %2440 = vmatpush1.msra.mxu0 0.0
    %2441 = vmatprep.subr.mxu0 0.0
    %2442 = vmatpush1.msra.mxu0 0.0
    %2443 = vmatprep.subr.mxu0 0.0
    %2444 = vmatpush1.msra.mxu0 0.0
    %2445 = vmatprep.subr.mxu0 0.0
    %2446 = vmatpush1.msra.mxu0 0.0
    %2447 = vmatprep.subr.mxu0 0.0
    %2448 = vmatpush1.msra.mxu0 0.0
    %2449 = vmatprep.subr.mxu0 0.0
    %2450 = vmatpush1.msra.mxu0 0.0
    %2451 = vmatprep.subr.mxu0 0.0
    %2452 = vmatpush1.msra.mxu0 0.0
    %2453 = vmatprep.subr.mxu0 0.0
    %2454 = vmatpush1.msra.mxu0 0.0
    %2455 = vmatprep.subr.mxu0 0.0
    %2456 = vmatpush1.msra.mxu0 0.0
    %2457 = vmatprep.subr.mxu0 0.0
    %2458 = vmatpush1.msra.mxu0 0.0
    %2459 = vmatprep.subr.mxu0 0.0
    %2460 = vmatpush1.msra.mxu0 0.0
    %2461 = vmatprep.subr.mxu0 0.0
    %2462 = vmatpush1.msra.mxu0 0.0
    %2463 = vmatprep.subr.mxu0 0.0
    %2464 = vmatpush1.msra.mxu0 0.0
    %2465 = vmatprep.subr.mxu0 0.0
    %2466 = vmatpush1.msra.mxu0 0.0
    %2467 = vmatprep.subr.mxu0 0.0
    %2468 = vmatpush1.msra.mxu0 0.0
    %2469 = vmatprep.subr.mxu0 0.0
    %2470 = vmatpush1.msra.mxu0 0.0
    %2471 = vmatprep.subr.mxu0 0.0
    %2472 = vmatpush1.msra.mxu0 0.0
    %2473 = vmatprep.subr.mxu0 0.0
    %2474 = vmatpush1.msra.mxu0 0.0
    %2475 = vmatprep.subr.mxu0 0.0
    %2476 = vmatpush1.msra.mxu0 0.0
    %2477 = vmatprep.mubr.f32.mxu0 0.0
    %2478 = vmatmul.mubr.f32.gmra.mrb[0].mxu0 %v2411
    %v2479 = vpop.f32.mrb[0].mxu0
    %v2480 = vadd.f32 %v2404, %v2479
    %v2481 = vpop.f32.mrb[0].mxu0
    %2482 = vdwg.mxu0
    %v2483 = vadd.f32 %v2480, %v542
    %v2484 = vxor.u32 %v2483, 2147483648
    %v2485 = vmul.f32 %v2484, 1.442695
    %v2486 = vpow.pop %v2485
    %v2487 = vadd.f32 %v2486, 1.0
    %v2488 = vrcp.pop %v2487
    %v2489 = vmul.f32 1.0, %v2488
    %v2490 = vtanh.pop %v2483
    %v2491 = vmul.f32 %v2489, %v2224
    %2493 = vrot.lane.b32.xlu0 %v2490, 32
    %v2494 = vpop.permute.xlu0 %2493
    %v2496 = vmul.f32 %v2489, %v2494
    %2498 = vrot.lane.b32.xlu0 %v2496, 32
    %v2499 = vpop.permute.xlu0 %2498
    %v2501 = vadd.f32 %v2491, %v2499
    %v2502 = vtanh.pop %v2501
    %2504 = vrot.lane.b32.xlu0 %v2502, 32
    %v2505 = vpop.permute.xlu0 %2504
    %v2507 = vmul.f32 %v2489, %v2505
    %v2508 = vld [vmem:[%s9] sm:$0xff]
    %v2509 = vld [vmem:[%s9 + $0x8] sm:$0xff]
    %v2510 = vld [vmem:[%s9 + $0x10] sm:$0xff]
    %v2511 = vld [vmem:[%s9 + $0x18] sm:$0xff]
    %v2512 = vld [vmem:[%s10] sm:$0x1]
    %v2514 = vlaneseq
    %v2515 = vshrl.u32 %v2514, 7
    %v2516 = vsub.s32 0, %v2515
    %v2517 = vrot.slane %v2512, %v2516
    %2520 = vrot.lane.b32.xlu0 %v2507, 64
    %v2521 = vpop.permute.xlu0 %2520
    %v2522 = vsel %vm287, %v2521, 0
    %2524 = vmatprep.subr.mxu0 0.0
    %2525 = vmatpush1.msra.mxu0 %v2508
    %2526 = vmatprep.subr.mxu0 0.0
    %2527 = vmatpush1.msra.mxu0 %v2509
    %2528 = vmatprep.subr.mxu0 0.0
    %2529 = vmatpush1.msra.mxu0 %v2510
    %2530 = vmatprep.subr.mxu0 0.0
    %2531 = vmatpush1.msra.mxu0 %v2511
    %2532 = vmatprep.subr.mxu0 0.0
    %2533 = vmatpush1.msra.mxu0 0.0
    %2534 = vmatprep.subr.mxu0 0.0
    %2535 = vmatpush1.msra.mxu0 0.0
    %2536 = vmatprep.subr.mxu0 0.0
    %2537 = vmatpush1.msra.mxu0 0.0
    %2538 = vmatprep.subr.mxu0 0.0
    %2539 = vmatpush1.msra.mxu0 0.0
    %2540 = vmatprep.subr.mxu0 0.0
    %2541 = vmatpush1.msra.mxu0 0.0
    %2542 = vmatprep.subr.mxu0 0.0
    %2543 = vmatpush1.msra.mxu0 0.0
    %2544 = vmatprep.subr.mxu0 0.0
    %2545 = vmatpush1.msra.mxu0 0.0
    %2546 = vmatprep.subr.mxu0 0.0
    %2547 = vmatpush1.msra.mxu0 0.0
    %2548 = vmatprep.subr.mxu0 0.0
    %2549 = vmatpush1.msra.mxu0 0.0
    %2550 = vmatprep.subr.mxu0 0.0
    %2551 = vmatpush1.msra.mxu0 0.0
    %2552 = vmatprep.subr.mxu0 0.0
    %2553 = vmatpush1.msra.mxu0 0.0
    %2554 = vmatprep.subr.mxu0 0.0
    %2555 = vmatpush1.msra.mxu0 0.0
    %2556 = vmatprep.subr.mxu0 0.0
    %2557 = vmatpush1.msra.mxu0 0.0
    %2558 = vmatprep.subr.mxu0 0.0
    %2559 = vmatpush1.msra.mxu0 0.0
    %2560 = vmatprep.subr.mxu0 0.0
    %2561 = vmatpush1.msra.mxu0 0.0
    %2562 = vmatprep.subr.mxu0 0.0
    %2563 = vmatpush1.msra.mxu0 0.0
    %2564 = vmatprep.subr.mxu0 0.0
    %2565 = vmatpush1.msra.mxu0 0.0
    %2566 = vmatprep.subr.mxu0 0.0
    %2567 = vmatpush1.msra.mxu0 0.0
    %2568 = vmatprep.subr.mxu0 0.0
    %2569 = vmatpush1.msra.mxu0 0.0
    %2570 = vmatprep.subr.mxu0 0.0
    %2571 = vmatpush1.msra.mxu0 0.0
    %2572 = vmatprep.subr.mxu0 0.0
    %2573 = vmatpush1.msra.mxu0 0.0
    %2574 = vmatprep.subr.mxu0 0.0
    %2575 = vmatpush1.msra.mxu0 0.0
    %2576 = vmatprep.subr.mxu0 0.0
    %2577 = vmatpush1.msra.mxu0 0.0
    %2578 = vmatprep.subr.mxu0 0.0
    %2579 = vmatpush1.msra.mxu0 0.0
    %2580 = vmatprep.subr.mxu0 0.0
    %2581 = vmatpush1.msra.mxu0 0.0
    %2582 = vmatprep.subr.mxu0 0.0
    %2583 = vmatpush1.msra.mxu0 0.0
    %2584 = vmatprep.subr.mxu0 0.0
    %2585 = vmatpush1.msra.mxu0 0.0
    %2586 = vmatprep.subr.mxu0 0.0
    %2587 = vmatpush1.msra.mxu0 0.0
    %2588 = vmatprep.mubr.f32.mxu0 0.0
    %2589 = vmatmul.mubr.f32.gmra.mrb[0].mxu0 %v2522
    %v2590 = vpop.f32.mrb[0].mxu0
    %v2591 = vadd.f32 %v2517, %v2590
    %v2592 = vpop.f32.mrb[0].mxu0
    %2593 = vdwg.mxu0
    %vm2594 = vcmask 74752
    %v2595 = vsel %vm2594, %v2591, -inf
    %2596 = vmax.xlane.f32.xlu0 %v2595
    %v2597 = vpop.xlane.xlu0 %2596
    %v2598 = vsub.f32 %v2591, %v2597
    %v2599 = vmul.f32 %v2598, 1.442695
    %v2600 = vpow.pop %v2599
    %v2601 = vsel %vm2594, %v2600, 0.0
    %2602 = vadd.xlane.f32.xlu0 %v2601
    %v2603 = vpop.xlane.xlu0 %2602
    %v2604 = vrcp.pop %v2603
    %v2605 = vmul.f32 %v2600, %v2604
    %2606 = vst.msk [vmem:[#allocation2] sm:$0x3] %vm2594, %v2605
    // Predicated region
    $region46: #{cnn_lstm_forward.3} parent=1 // pred_check
      _
    $region47: #{cnn_lstm_forward.3} parent=1 // pred_check_branch
      %2608 = sbr.rel (0) target = $region49
    $region48: #{cnn_lstm_forward.3} parent=1 // pred_region
      %s2610 = ssub.s32 32, 32
      %2611 = vsyncadd [#allocation3], %s2610
      %s2613 = sshll.u32 [#allocation2], 4
      %s2614 = int_to_ptr.vmem [resolvable:$true] %s2613
      %2616 = dma.vmem_to_hbm [thread:$0]  %s2614, 32, %s11, [#allocation3]
    $region49: #{cnn_lstm_forward.3} parent=1 // pred_fallthru
      _
    // Predicated region
    $region50: #{cnn_lstm_forward.3} parent=1 // pred_check
      _
    $region51: #{cnn_lstm_forward.3} parent=1 // pred_check_branch
      %2618 = sbr.rel (0) target = $region53
    $region52: #{cnn_lstm_forward.3} parent=1 // pred_region
      %2619 = dma.done [#allocation3], 32
    $region53: #{cnn_lstm_forward.3} parent=1 // pred_fallthru
      _
    %2620 = vsyncpa [#allocation3], 1

</llo_original>
